<compile_context>
chip_gen: v7x
topology: tpu7x:2x2x1
jax: 0.10.0
libtpu: 0.0.40
codegen_flags: <defaults>
</compile_context>

<pallas_src>
import functools

import numpy as np
import jax
import jax.numpy as jnp
from jax import lax
from jax.experimental import pallas as pl
from jax.experimental.pallas import tpu as pltpu


# --------------------------------- kernel ---------------------------------- #

def advanced_c3_kernel(dilations, H, W,
                       x_ref, wc1_ref, t0_ref, t1_ref, t2_ref,
                       w0_ref, w1_ref, w2_ref, bn_ref, out_ref):
  """One grid step = Bt images packed along sublanes.

  x_ref   : (Bt*Cin,  HW)       input, image-major channel rows
  wc1_ref : (Bt*n,    Bt*Cin)   kron(I_Bt, wc1)   (c1 1x1 reduce conv)
  t*_ref  : (Bt*n,    2k+12)    per-branch packed table
            [wh(k) | b1 | a1 | ww(k) | b2 | wd(9)]  (BN scales pre-folded)
  w*_ref  : (Bt*nOut, Bt*n)     kron(I_Bt, wp placed at its channel offset)
  bn_ref  : (Bt*nOut, 3)        [bn_scale | bn_shift | prelu_alpha]
  out_ref : (Bt*nOut, HW)
  """
  HW = H * W
  x = x_ref[...]                                        # (Bt*Cin, HW) f32

  # Lane-position iotas + memoized boundary masks, shared across all ~77 taps.
  iota_hw = lax.broadcasted_iota(jnp.int32, (1, HW), 1)
  iota_w = iota_hw % W
  row_cache, col_cache, mask_cache = {}, {}, {}

  def get_mask(dh, dw):
    key = (dh, dw)
    if key not in mask_cache:
      if dh not in row_cache:
        row_cache[dh] = (None if dh == 0 else
                         (iota_hw < (HW - dh * W)) if dh > 0
                         else (iota_hw >= (-dh) * W))
      if dw not in col_cache:
        col_cache[dw] = (None if dw == 0 else
                         (iota_w < (W - dw)) if dw > 0
                         else (iota_w >= -dw))
      rm, cm = row_cache[dh], col_cache[dw]
      if rm is None:
        m = cm
      elif cm is None:
        m = rm
      else:
        m = jnp.logical_and(rm, cm)
      mask_cache[key] = m
    return mask_cache[key]

  def shifted(z, dh, dw):
    """out[:, h*W+w] = z[:, (h+dh)*W+(w+dw)], zero outside the HxW image."""
    delta = dh * W + dw
    r = z if delta == 0 else pltpu.roll(z, shift=(-delta) % HW, axis=1)
    m = get_mask(dh, dw)
    return r if m is None else jnp.where(m, r, 0.0)

  # c1: 1x1 "reduce" conv for all packed images in one MXU matmul.
  y = jnp.dot(wc1_ref[...], x, preferred_element_type=jnp.float32)  # (Bt*n, HW)

  # Residual (nIn == nOut); branch pointwise convs accumulate straight into it.
  comb = x

  for d, tbl_ref, wp_ref in zip(dilations,
                                (t0_ref, t1_ref, t2_ref),
                                (w0_ref, w1_ref, w2_ref)):
    k = 2 * d - 1
    pad = d - 1
    tbl = tbl_ref[...]                                  # (Bt*n, 2k+12)
    wh = tbl[:, 0:k]
    b1 = tbl[:, k:k + 1]
    a1 = tbl[:, k + 1:k + 2]
    ww = tbl[:, k + 2:2 * k + 2]
    b2 = tbl[:, 2 * k + 2:2 * k + 3]
    wd = tbl[:, 2 * k + 3:2 * k + 12]

    # (combine_kernel, 1) depthwise conv along H  (+ folded BN1 + PReLU).
    acc = None
    for t in range(k):
      term = shifted(y, t - pad, 0) * wh[:, t:t + 1]
      acc = term if acc is None else acc + term
    z = acc + b1
    z = jnp.where(z > 0, z, z * a1)

    # (1, combine_kernel) depthwise conv along W  (+ folded BN2).
    acc = None
    for t in range(k):
      term = shifted(z, 0, t - pad) * ww[:, t:t + 1]
      acc = term if acc is None else acc + term
    z = acc + b2

    # dilated 3x3 depthwise conv.
    acc = None
    for i in range(3):
      for j in range(3):
        term = shifted(z, (i - 1) * d, (j - 1) * d) * wd[:, 3 * i + j:3 * i + j + 1]
        acc = term if acc is None else acc + term

    # Per-branch 1x1 conv, accumulated into comb at its channel offset
    # (weight already carries the offset + the per-image block structure).
    comb = comb + jnp.dot(wp_ref[...], acc, preferred_element_type=jnp.float32)

  bn = bn_ref[...]                                      # (Bt*nOut, 3)
  comb = comb * bn[:, 0:1] + bn[:, 1:2]                 # final BN (folded)
  comb = jnp.where(comb > 0, comb, comb * bn[:, 2:3])   # final PReLU
  out_ref[...] = comb.astype(out_ref.dtype)


# ------------------------------ host-side packing --------------------------- #

def _pick_batch_tile(N, Cin, n, nOut):
  """Batch tile: divides N, keeps all row counts sublane (8) aligned and
  prefers the smallest tile that fills 8 sublanes for the depthwise rows
  (keeps the most "parallel" grid steps for v7x's two TensorCores)."""
  cands = [bt for bt in (1, 2, 4, 8, 16)
           if N % bt == 0 and (bt * Cin) % 8 == 0
           and (bt * n) % 8 == 0 and (bt * nOut) % 8 == 0]
  if not cands:
    return None
  full = [bt for bt in cands if bt * n >= 8]
  return min(full) if full else max(cands)


def pack_params(raw, Bt):
  """Build the kernel-side tables / image-block-diagonal weights."""
  n, nOut = raw["n"], raw["nOut"]
  eye = np.eye(Bt, dtype=np.float32)
  wc1_bd = np.kron(eye, raw["wc1"])                       # (Bt*n, Bt*nIn)
  tables, wps = [], []
  for off, bp in zip(raw["offsets"], raw["branches"]):
    nob, k = bp["nob"], 2 * bp["d"] - 1
    base = np.zeros((n, 2 * k + 12), np.float32)
    base[:, 0:k] = (bp["wh"] * bp["s1"][None, :]).T       # BN1 scale folded
    base[:, k] = bp["b1"]
    base[:, k + 1] = bp["a1"]
    base[:, k + 2:2 * k + 2] = (bp["ww"] * bp["s2"][None, :]).T  # BN2 folded
    base[:, 2 * k + 2] = bp["b2"]
    base[:, 2 * k + 3:2 * k + 12] = bp["wd"].reshape(9, n).T
    tables.append(jnp.asarray(np.tile(base, (Bt, 1))))
    wp_full = np.zeros((nOut, n), np.float32)
    wp_full[off:off + nob, :] = bp["wp"]                  # place at channel off
    wps.append(jnp.asarray(np.kron(eye, wp_full)))        # (Bt*nOut, Bt*n)
  bn_base = np.stack([raw["bn_s"], raw["bn_b"], raw["alpha"]], axis=1)
  return dict(wc1=jnp.asarray(wc1_bd), tables=tables, wps=wps,
              bn=jnp.asarray(np.tile(bn_base, (Bt, 1))))


# -------------------------------- wrapper ----------------------------------- #

def advanced_c3_nchw(x_nchw, raw, dilations):
  N, Cin, H, W = x_nchw.shape
  nOut, n = raw["nOut"], raw["n"]
  assert Cin == nOut, "residual add requires nIn == nOut"
  assert all(d > 1 for d in dilations), "d == 1 C3block variant not implemented"
  assert len(dilations) == 3
  HW = H * W

  Bt = _pick_batch_tile(N, Cin, n, nOut)
  assert Bt is not None, "no sublane-aligned batch tile (pad batch/channels)"
  packed = pack_params(raw, Bt)

  # NCHW flattened over (H, W) with image-major channel rows IS the kernel
  # layout -> free reshape, no transposes.
  x = x_nchw.reshape(N * Cin, HW)
  rows_in, rows_out = Bt * Cin, Bt * nOut

  flat = [x, packed["wc1"], *packed["tables"], *packed["wps"], packed["bn"]]
  in_specs = [pl.BlockSpec((rows_in, HW), lambda i: (i, 0))]
  for a in flat[1:]:
    in_specs.append(pl.BlockSpec(a.shape, lambda i: (0, 0)))
  out_spec = pl.BlockSpec((rows_out, HW), lambda i: (i, 0))

  kernel = functools.partial(advanced_c3_kernel, tuple(dilations), H, W)
  out = pl.pallas_call(
      kernel,
      out_shape=jax.ShapeDtypeStruct((N * nOut, HW), x.dtype),
      grid=(N // Bt,),
      in_specs=in_specs,
      out_specs=out_spec,
      compiler_params=pltpu.CompilerParams(
          dimension_semantics=("parallel",)),
  )(*flat)
  return out.reshape(N, nOut, H, W)


# ------------------------- deterministic parameters ------------------------- #

def init_raw_params(key, nIn, nOut, ratio):
  n = nOut // 3
  n1 = nOut - 3 * n
  keys = iter(jax.random.split(key, 64))

  def rnd(shape, scale=0.1):
    return np.asarray(scale * jax.random.normal(next(keys), shape), np.float32)

  def bn_fold(c, eps):
    gamma = 1.0 + rnd((c,), 0.05)
    beta = rnd((c,), 0.05)
    run_mean = np.zeros((c,), np.float32)
    run_var = np.ones((c,), np.float32)
    scale = (gamma / np.sqrt(run_var + eps)).astype(np.float32)
    shift = (beta - run_mean * scale).astype(np.float32)
    return scale, shift

  branch_outs = [n + n1, n, n]
  offsets = np.cumsum([0] + branch_outs).tolist()
  branches = []
  for d, nob in zip(ratio, branch_outs):
    k = 2 * d - 1
    s1, b1 = bn_fold(n, 1e-5)
    s2, b2 = bn_fold(n, 1e-5)
    branches.append(dict(
        d=d, nob=nob,
        wh=rnd((k, n)), s1=s1, b1=b1,
        a1=np.full((n,), 0.25, np.float32),       # PReLU default init
        ww=rnd((k, n)), s2=s2, b2=b2,
        wd=rnd((3, 3, n)), wp=rnd((nob, n))))
  bn_s, bn_b = bn_fold(nOut, 1e-3)
  return dict(nIn=nIn, nOut=nOut, n=n, offsets=offsets,
              wc1=rnd((n, nIn)), branches=branches,
              bn_s=bn_s, bn_b=bn_b,
              alpha=np.full((nOut,), 0.25, np.float32))


# --------------------------- pure-JAX reference ----------------------------- #

def reference_nchw(x, raw, ratio):
  n = raw["n"]
  dn = ("NCHW", "OIHW", "NCHW")
  y = jnp.einsum("oc,nchw->nohw", raw["wc1"], x)
  outs = []
  for bp in raw["branches"]:
    d = bp["d"]
    k = 2 * d - 1
    z = lax.conv_general_dilated(
        y, jnp.asarray(bp["wh"].T.reshape(n, 1, k, 1)), (1, 1),
        [(d - 1, d - 1), (0, 0)], dimension_numbers=dn, feature_group_count=n)
    z = z * bp["s1"][None, :, None, None] + bp["b1"][None, :, None, None]
    z = jnp.where(z > 0, z, z * bp["a1"][None, :, None, None])
    z = lax.conv_general_dilated(
        z, jnp.asarray(bp["ww"].T.reshape(n, 1, 1, k)), (1, 1),
        [(0, 0), (d - 1, d - 1)], dimension_numbers=dn, feature_group_count=n)
    z = z * bp["s2"][None, :, None, None] + bp["b2"][None, :, None, None]
    z = lax.conv_general_dilated(
        z, jnp.asarray(np.transpose(bp["wd"], (2, 0, 1)).reshape(n, 1, 3, 3)),
        (1, 1), [(d, d), (d, d)], rhs_dilation=(d, d),
        dimension_numbers=dn, feature_group_count=n)
    outs.append(jnp.einsum("oc,nchw->nohw", bp["wp"], z))
  comb = jnp.concatenate(outs, axis=1) + x
  comb = (comb * raw["bn_s"][None, :, None, None]
          + raw["bn_b"][None, :, None, None])
  comb = jnp.where(comb > 0, comb, comb * raw["alpha"][None, :, None, None])
  return comb


# ----------------------------------- main ------------------------------------ #

if __name__ == "__main__":
  N, C, H, W = 2, 12, 16, 16          # nIn == nOut so the residual add is valid
  nIn = nOut = C
  ratio = [2, 4, 8]

  key = jax.random.PRNGKey(0)
  kx, kp = jax.random.split(key)
  x_nchw = jax.random.normal(kx, (N, C, H, W), jnp.float32)
  raw = init_raw_params(kp, nIn, nOut, ratio)

  out = advanced_c3_nchw(x_nchw, raw, ratio)
  out = jax.block_until_ready(out)

  # sanity check against a pure-JAX (lax.conv) reference
  ref = reference_nchw(x_nchw, raw, ratio)
  np.testing.assert_allclose(np.asarray(out), np.asarray(ref),
                             rtol=1e-2, atol=1e-2)

  print("KERNEL_OK")
</pallas_src>

<mosaic_0001>
module attributes {stable_mosaic.version = 11 : i64} {
  func.func @advanced_c3_kernel(%arg0: i32, %arg1: memref<24x256xf32, #tpu.memory_space<vmem>>, %arg2: memref<8x24xf32, #tpu.memory_space<vmem>>, %arg3: memref<8x18xf32, #tpu.memory_space<vmem>>, %arg4: memref<8x26xf32, #tpu.memory_space<vmem>>, %arg5: memref<8x42xf32, #tpu.memory_space<vmem>>, %arg6: memref<24x8xf32, #tpu.memory_space<vmem>>, %arg7: memref<24x8xf32, #tpu.memory_space<vmem>>, %arg8: memref<24x8xf32, #tpu.memory_space<vmem>>, %arg9: memref<24x3xf32, #tpu.memory_space<vmem>>, %arg10: memref<24x256xf32, #tpu.memory_space<vmem>>) attributes {dimension_semantics = [#tpu.dimension_semantics<parallel>], iteration_bounds = array<i64: 1>, scalar_prefetch = 0 : i64, scratch_operands = 0 : i64, tpu.core_type = #tpu.core_type<tc>, window_params = [{transform_indices = @transform_0, window_bounds = array<i64: 24, 256>}, {pipeline_mode = #tpu.pipeline_mode<synchronous>, transform_indices = @transform_1, window_bounds = array<i64: 8, 24>}, {pipeline_mode = #tpu.pipeline_mode<synchronous>, transform_indices = @transform_2, window_bounds = array<i64: 8, 18>}, {pipeline_mode = #tpu.pipeline_mode<synchronous>, transform_indices = @transform_3, window_bounds = array<i64: 8, 26>}, {pipeline_mode = #tpu.pipeline_mode<synchronous>, transform_indices = @transform_4, window_bounds = array<i64: 8, 42>}, {pipeline_mode = #tpu.pipeline_mode<synchronous>, transform_indices = @transform_5, window_bounds = array<i64: 24, 8>}, {pipeline_mode = #tpu.pipeline_mode<synchronous>, transform_indices = @transform_6, window_bounds = array<i64: 24, 8>}, {pipeline_mode = #tpu.pipeline_mode<synchronous>, transform_indices = @transform_7, window_bounds = array<i64: 24, 8>}, {pipeline_mode = #tpu.pipeline_mode<synchronous>, transform_indices = @transform_8, window_bounds = array<i64: 24, 3>}, {transform_indices = @transform_9, window_bounds = array<i64: 24, 256>}]} {
    %c0 = arith.constant 0 : index
    %c0_0 = arith.constant 0 : index
    %0 = vector.load %arg1[%c0, %c0_0] : memref<24x256xf32, #tpu.memory_space<vmem>>, vector<24x256xf32>
    %1 = tpu.iota {dimensions = array<i32: 1>} : vector<1x256xi32>
    %c16_i32 = arith.constant 16 : i32
    %c0_i32 = arith.constant 0 : i32
    %2 = arith.cmpi eq, %c16_i32, %c0_i32 : i32
    %c1_i32 = arith.constant 1 : i32
    %3 = arith.select %2, %c1_i32, %c16_i32 : i32
    %4 = vector.broadcast %3 : i32 to vector<1x256xi32>
    %5 = arith.remsi %1, %4 : vector<1x256xi32>
    %c0_i32_1 = arith.constant 0 : i32
    %6 = vector.broadcast %c0_i32_1 : i32 to vector<1x256xi32>
    %7 = arith.cmpi ne, %5, %6 : vector<1x256xi32>
    %c0_i32_2 = arith.constant 0 : i32
    %8 = vector.broadcast %c0_i32_2 : i32 to vector<1x256xi32>
    %9 = arith.cmpi slt, %5, %8 : vector<1x256xi32>
    %c0_i32_3 = arith.constant 0 : i32
    %10 = arith.cmpi slt, %3, %c0_i32_3 : i32
    %11 = vector.broadcast %10 : i1 to vector<1x256xi1>
    %12 = vector.broadcast %11 : vector<1x256xi1> to vector<1x256xi1>
    %13 = arith.xori %9, %12 : vector<1x256xi1>
    %14 = arith.andi %13, %7 : vector<1x256xi1>
    %15 = vector.broadcast %3 : i32 to vector<1x256xi32>
    %16 = arith.addi %5, %15 : vector<1x256xi32>
    %17 = arith.select %14, %16, %5 : vector<1x256xi1>, vector<1x256xi32>
    %c0_4 = arith.constant 0 : index
    %c0_5 = arith.constant 0 : index
    %18 = vector.load %arg2[%c0_4, %c0_5] : memref<8x24xf32, #tpu.memory_space<vmem>>, vector<8x24xf32>
    %cst = arith.constant dense<0.000000e+00> : vector<8x256xf32>
    %19 = tpu.matmul %18, %0, %cst {dimension_numbers = #tpu.dot_dimension_numbers<[1], [0], [0], [1], [0, 0, 1, 1], [], []>} : vector<8x24xf32>, vector<24x256xf32>, vector<8x256xf32> -> vector<8x256xf32>
    %c0_6 = arith.constant 0 : index
    %c0_7 = arith.constant 0 : index
    %20 = vector.load %arg3[%c0_6, %c0_7] : memref<8x18xf32, #tpu.memory_space<vmem>>, vector<8x18xf32>
    %21 = vector.extract_strided_slice %20 {offsets = [0, 0], sizes = [8, 3], strides = [1, 1]} : vector<8x18xf32> to vector<8x3xf32>
    %22 = vector.extract_strided_slice %20 {offsets = [0, 3], sizes = [8, 1], strides = [1, 1]} : vector<8x18xf32> to vector<8x1xf32>
    %23 = vector.extract_strided_slice %20 {offsets = [0, 4], sizes = [8, 1], strides = [1, 1]} : vector<8x18xf32> to vector<8x1xf32>
    %24 = vector.extract_strided_slice %20 {offsets = [0, 5], sizes = [8, 3], strides = [1, 1]} : vector<8x18xf32> to vector<8x3xf32>
    %25 = vector.extract_strided_slice %20 {offsets = [0, 8], sizes = [8, 1], strides = [1, 1]} : vector<8x18xf32> to vector<8x1xf32>
    %26 = vector.extract_strided_slice %20 {offsets = [0, 9], sizes = [8, 9], strides = [1, 1]} : vector<8x18xf32> to vector<8x9xf32>
    %c16_i32_8 = arith.constant 16 : i32
    %27 = tpu.dynamic_rotate %19 by %c16_i32_8 dim 1 : vector<8x256xf32>, i32 -> vector<8x256xf32>
    %c16_i32_9 = arith.constant 16 : i32
    %28 = vector.broadcast %c16_i32_9 : i32 to vector<1x256xi32>
    %29 = arith.cmpi sge, %1, %28 : vector<1x256xi32>
    %cst_10 = arith.constant 0.000000e+00 : f32
    %30 = vector.shape_cast %29 : vector<1x256xi1> to vector<1x256xi1>
    %31 = vector.broadcast %30 : vector<1x256xi1> to vector<8x256xi1>
    %32 = vector.broadcast %cst_10 : f32 to vector<8x256xf32>
    %33 = arith.select %31, %27, %32 : vector<8x256xi1>, vector<8x256xf32>
    %34 = vector.extract_strided_slice %21 {offsets = [0, 0], sizes = [8, 1], strides = [1, 1]} : vector<8x3xf32> to vector<8x1xf32>
    %35 = vector.broadcast %34 : vector<8x1xf32> to vector<8x256xf32>
    %36 = arith.mulf %33, %35 : vector<8x256xf32>
    %37 = vector.extract_strided_slice %21 {offsets = [0, 1], sizes = [8, 1], strides = [1, 1]} : vector<8x3xf32> to vector<8x1xf32>
    %38 = vector.broadcast %37 : vector<8x1xf32> to vector<8x256xf32>
    %39 = arith.mulf %19, %38 : vector<8x256xf32>
    %40 = arith.addf %36, %39 : vector<8x256xf32>
    %c240_i32 = arith.constant 240 : i32
    %41 = tpu.dynamic_rotate %19 by %c240_i32 dim 1 : vector<8x256xf32>, i32 -> vector<8x256xf32>
    %c240_i32_11 = arith.constant 240 : i32
    %42 = vector.broadcast %c240_i32_11 : i32 to vector<1x256xi32>
    %43 = arith.cmpi slt, %1, %42 : vector<1x256xi32>
    %cst_12 = arith.constant 0.000000e+00 : f32
    %44 = vector.shape_cast %43 : vector<1x256xi1> to vector<1x256xi1>
    %45 = vector.broadcast %44 : vector<1x256xi1> to vector<8x256xi1>
    %46 = vector.broadcast %cst_12 : f32 to vector<8x256xf32>
    %47 = arith.select %45, %41, %46 : vector<8x256xi1>, vector<8x256xf32>
    %48 = vector.extract_strided_slice %21 {offsets = [0, 2], sizes = [8, 1], strides = [1, 1]} : vector<8x3xf32> to vector<8x1xf32>
    %49 = vector.broadcast %48 : vector<8x1xf32> to vector<8x256xf32>
    %50 = arith.mulf %47, %49 : vector<8x256xf32>
    %51 = arith.addf %40, %50 : vector<8x256xf32>
    %52 = vector.broadcast %22 : vector<8x1xf32> to vector<8x256xf32>
    %53 = arith.addf %51, %52 : vector<8x256xf32>
    %cst_13 = arith.constant 0.000000e+00 : f32
    %54 = vector.broadcast %cst_13 : f32 to vector<8x256xf32>
    %55 = arith.cmpf ogt, %53, %54 : vector<8x256xf32>
    %56 = vector.broadcast %23 : vector<8x1xf32> to vector<8x256xf32>
    %57 = arith.mulf %53, %56 : vector<8x256xf32>
    %58 = arith.select %55, %53, %57 : vector<8x256xi1>, vector<8x256xf32>
    %c1_i32_14 = arith.constant 1 : i32
    %59 = tpu.dynamic_rotate %58 by %c1_i32_14 dim 1 : vector<8x256xf32>, i32 -> vector<8x256xf32>
    %c1_i32_15 = arith.constant 1 : i32
    %60 = vector.broadcast %c1_i32_15 : i32 to vector<1x256xi32>
    %61 = arith.cmpi sge, %17, %60 : vector<1x256xi32>
    %cst_16 = arith.constant 0.000000e+00 : f32
    %62 = vector.shape_cast %61 : vector<1x256xi1> to vector<1x256xi1>
    %63 = vector.broadcast %62 : vector<1x256xi1> to vector<8x256xi1>
    %64 = vector.broadcast %cst_16 : f32 to vector<8x256xf32>
    %65 = arith.select %63, %59, %64 : vector<8x256xi1>, vector<8x256xf32>
    %66 = vector.extract_strided_slice %24 {offsets = [0, 0], sizes = [8, 1], strides = [1, 1]} : vector<8x3xf32> to vector<8x1xf32>
    %67 = vector.broadcast %66 : vector<8x1xf32> to vector<8x256xf32>
    %68 = arith.mulf %65, %67 : vector<8x256xf32>
    %69 = vector.extract_strided_slice %24 {offsets = [0, 1], sizes = [8, 1], strides = [1, 1]} : vector<8x3xf32> to vector<8x1xf32>
    %70 = vector.broadcast %69 : vector<8x1xf32> to vector<8x256xf32>
    %71 = arith.mulf %58, %70 : vector<8x256xf32>
    %72 = arith.addf %68, %71 : vector<8x256xf32>
    %c255_i32 = arith.constant 255 : i32
    %73 = tpu.dynamic_rotate %58 by %c255_i32 dim 1 : vector<8x256xf32>, i32 -> vector<8x256xf32>
    %c15_i32 = arith.constant 15 : i32
    %74 = vector.broadcast %c15_i32 : i32 to vector<1x256xi32>
    %75 = arith.cmpi slt, %17, %74 : vector<1x256xi32>
    %cst_17 = arith.constant 0.000000e+00 : f32
    %76 = vector.shape_cast %75 : vector<1x256xi1> to vector<1x256xi1>
    %77 = vector.broadcast %76 : vector<1x256xi1> to vector<8x256xi1>
    %78 = vector.broadcast %cst_17 : f32 to vector<8x256xf32>
    %79 = arith.select %77, %73, %78 : vector<8x256xi1>, vector<8x256xf32>
    %80 = vector.extract_strided_slice %24 {offsets = [0, 2], sizes = [8, 1], strides = [1, 1]} : vector<8x3xf32> to vector<8x1xf32>
    %81 = vector.broadcast %80 : vector<8x1xf32> to vector<8x256xf32>
    %82 = arith.mulf %79, %81 : vector<8x256xf32>
    %83 = arith.addf %72, %82 : vector<8x256xf32>
    %84 = vector.broadcast %25 : vector<8x1xf32> to vector<8x256xf32>
    %85 = arith.addf %83, %84 : vector<8x256xf32>
    %c34_i32 = arith.constant 34 : i32
    %86 = tpu.dynamic_rotate %85 by %c34_i32 dim 1 : vector<8x256xf32>, i32 -> vector<8x256xf32>
    %c32_i32 = arith.constant 32 : i32
    %87 = vector.broadcast %c32_i32 : i32 to vector<1x256xi32>
    %88 = arith.cmpi sge, %1, %87 : vector<1x256xi32>
    %c2_i32 = arith.constant 2 : i32
    %89 = vector.broadcast %c2_i32 : i32 to vector<1x256xi32>
    %90 = arith.cmpi sge, %17, %89 : vector<1x256xi32>
    %91 = arith.andi %88, %90 : vector<1x256xi1>
    %cst_18 = arith.constant 0.000000e+00 : f32
    %92 = vector.shape_cast %91 : vector<1x256xi1> to vector<1x256xi1>
    %93 = vector.broadcast %92 : vector<1x256xi1> to vector<8x256xi1>
    %94 = vector.broadcast %cst_18 : f32 to vector<8x256xf32>
    %95 = arith.select %93, %86, %94 : vector<8x256xi1>, vector<8x256xf32>
    %96 = vector.extract_strided_slice %26 {offsets = [0, 0], sizes = [8, 1], strides = [1, 1]} : vector<8x9xf32> to vector<8x1xf32>
    %97 = vector.broadcast %96 : vector<8x1xf32> to vector<8x256xf32>
    %98 = arith.mulf %95, %97 : vector<8x256xf32>
    %c32_i32_19 = arith.constant 32 : i32
    %99 = tpu.dynamic_rotate %85 by %c32_i32_19 dim 1 : vector<8x256xf32>, i32 -> vector<8x256xf32>
    %cst_20 = arith.constant 0.000000e+00 : f32
    %100 = vector.shape_cast %88 : vector<1x256xi1> to vector<1x256xi1>
    %101 = vector.broadcast %100 : vector<1x256xi1> to vector<8x256xi1>
    %102 = vector.broadcast %cst_20 : f32 to vector<8x256xf32>
    %103 = arith.select %101, %99, %102 : vector<8x256xi1>, vector<8x256xf32>
    %104 = vector.extract_strided_slice %26 {offsets = [0, 1], sizes = [8, 1], strides = [1, 1]} : vector<8x9xf32> to vector<8x1xf32>
    %105 = vector.broadcast %104 : vector<8x1xf32> to vector<8x256xf32>
    %106 = arith.mulf %103, %105 : vector<8x256xf32>
    %107 = arith.addf %98, %106 : vector<8x256xf32>
    %c30_i32 = arith.constant 30 : i32
    %108 = tpu.dynamic_rotate %85 by %c30_i32 dim 1 : vector<8x256xf32>, i32 -> vector<8x256xf32>
    %c14_i32 = arith.constant 14 : i32
    %109 = vector.broadcast %c14_i32 : i32 to vector<1x256xi32>
    %110 = arith.cmpi slt, %17, %109 : vector<1x256xi32>
    %111 = arith.andi %88, %110 : vector<1x256xi1>
    %cst_21 = arith.constant 0.000000e+00 : f32
    %112 = vector.shape_cast %111 : vector<1x256xi1> to vector<1x256xi1>
    %113 = vector.broadcast %112 : vector<1x256xi1> to vector<8x256xi1>
    %114 = vector.broadcast %cst_21 : f32 to vector<8x256xf32>
    %115 = arith.select %113, %108, %114 : vector<8x256xi1>, vector<8x256xf32>
    %116 = vector.extract_strided_slice %26 {offsets = [0, 2], sizes = [8, 1], strides = [1, 1]} : vector<8x9xf32> to vector<8x1xf32>
    %117 = vector.broadcast %116 : vector<8x1xf32> to vector<8x256xf32>
    %118 = arith.mulf %115, %117 : vector<8x256xf32>
    %119 = arith.addf %107, %118 : vector<8x256xf32>
    %c2_i32_22 = arith.constant 2 : i32
    %120 = tpu.dynamic_rotate %85 by %c2_i32_22 dim 1 : vector<8x256xf32>, i32 -> vector<8x256xf32>
    %cst_23 = arith.constant 0.000000e+00 : f32
    %121 = vector.shape_cast %90 : vector<1x256xi1> to vector<1x256xi1>
    %122 = vector.broadcast %121 : vector<1x256xi1> to vector<8x256xi1>
    %123 = vector.broadcast %cst_23 : f32 to vector<8x256xf32>
    %124 = arith.select %122, %120, %123 : vector<8x256xi1>, vector<8x256xf32>
    %125 = vector.extract_strided_slice %26 {offsets = [0, 3], sizes = [8, 1], strides = [1, 1]} : vector<8x9xf32> to vector<8x1xf32>
    %126 = vector.broadcast %125 : vector<8x1xf32> to vector<8x256xf32>
    %127 = arith.mulf %124, %126 : vector<8x256xf32>
    %128 = arith.addf %119, %127 : vector<8x256xf32>
    %129 = vector.extract_strided_slice %26 {offsets = [0, 4], sizes = [8, 1], strides = [1, 1]} : vector<8x9xf32> to vector<8x1xf32>
    %130 = vector.broadcast %129 : vector<8x1xf32> to vector<8x256xf32>
    %131 = arith.mulf %85, %130 : vector<8x256xf32>
    %132 = arith.addf %128, %131 : vector<8x256xf32>
    %c254_i32 = arith.constant 254 : i32
    %133 = tpu.dynamic_rotate %85 by %c254_i32 dim 1 : vector<8x256xf32>, i32 -> vector<8x256xf32>
    %cst_24 = arith.constant 0.000000e+00 : f32
    %134 = vector.shape_cast %110 : vector<1x256xi1> to vector<1x256xi1>
    %135 = vector.broadcast %134 : vector<1x256xi1> to vector<8x256xi1>
    %136 = vector.broadcast %cst_24 : f32 to vector<8x256xf32>
    %137 = arith.select %135, %133, %136 : vector<8x256xi1>, vector<8x256xf32>
    %138 = vector.extract_strided_slice %26 {offsets = [0, 5], sizes = [8, 1], strides = [1, 1]} : vector<8x9xf32> to vector<8x1xf32>
    %139 = vector.broadcast %138 : vector<8x1xf32> to vector<8x256xf32>
    %140 = arith.mulf %137, %139 : vector<8x256xf32>
    %141 = arith.addf %132, %140 : vector<8x256xf32>
    %c226_i32 = arith.constant 226 : i32
    %142 = tpu.dynamic_rotate %85 by %c226_i32 dim 1 : vector<8x256xf32>, i32 -> vector<8x256xf32>
    %c224_i32 = arith.constant 224 : i32
    %143 = vector.broadcast %c224_i32 : i32 to vector<1x256xi32>
    %144 = arith.cmpi slt, %1, %143 : vector<1x256xi32>
    %145 = arith.andi %144, %90 : vector<1x256xi1>
    %cst_25 = arith.constant 0.000000e+00 : f32
    %146 = vector.shape_cast %145 : vector<1x256xi1> to vector<1x256xi1>
    %147 = vector.broadcast %146 : vector<1x256xi1> to vector<8x256xi1>
    %148 = vector.broadcast %cst_25 : f32 to vector<8x256xf32>
    %149 = arith.select %147, %142, %148 : vector<8x256xi1>, vector<8x256xf32>
    %150 = vector.extract_strided_slice %26 {offsets = [0, 6], sizes = [8, 1], strides = [1, 1]} : vector<8x9xf32> to vector<8x1xf32>
    %151 = vector.broadcast %150 : vector<8x1xf32> to vector<8x256xf32>
    %152 = arith.mulf %149, %151 : vector<8x256xf32>
    %153 = arith.addf %141, %152 : vector<8x256xf32>
    %c224_i32_26 = arith.constant 224 : i32
    %154 = tpu.dynamic_rotate %85 by %c224_i32_26 dim 1 : vector<8x256xf32>, i32 -> vector<8x256xf32>
    %cst_27 = arith.constant 0.000000e+00 : f32
    %155 = vector.shape_cast %144 : vector<1x256xi1> to vector<1x256xi1>
    %156 = vector.broadcast %155 : vector<1x256xi1> to vector<8x256xi1>
    %157 = vector.broadcast %cst_27 : f32 to vector<8x256xf32>
    %158 = arith.select %156, %154, %157 : vector<8x256xi1>, vector<8x256xf32>
    %159 = vector.extract_strided_slice %26 {offsets = [0, 7], sizes = [8, 1], strides = [1, 1]} : vector<8x9xf32> to vector<8x1xf32>
    %160 = vector.broadcast %159 : vector<8x1xf32> to vector<8x256xf32>
    %161 = arith.mulf %158, %160 : vector<8x256xf32>
    %162 = arith.addf %153, %161 : vector<8x256xf32>
    %c222_i32 = arith.constant 222 : i32
    %163 = tpu.dynamic_rotate %85 by %c222_i32 dim 1 : vector<8x256xf32>, i32 -> vector<8x256xf32>
    %164 = arith.andi %144, %110 : vector<1x256xi1>
    %cst_28 = arith.constant 0.000000e+00 : f32
    %165 = vector.shape_cast %164 : vector<1x256xi1> to vector<1x256xi1>
    %166 = vector.broadcast %165 : vector<1x256xi1> to vector<8x256xi1>
    %167 = vector.broadcast %cst_28 : f32 to vector<8x256xf32>
    %168 = arith.select %166, %163, %167 : vector<8x256xi1>, vector<8x256xf32>
    %169 = vector.extract_strided_slice %26 {offsets = [0, 8], sizes = [8, 1], strides = [1, 1]} : vector<8x9xf32> to vector<8x1xf32>
    %170 = vector.broadcast %169 : vector<8x1xf32> to vector<8x256xf32>
    %171 = arith.mulf %168, %170 : vector<8x256xf32>
    %172 = arith.addf %162, %171 : vector<8x256xf32>
    %c0_29 = arith.constant 0 : index
    %c0_30 = arith.constant 0 : index
    %173 = vector.load %arg6[%c0_29, %c0_30] : memref<24x8xf32, #tpu.memory_space<vmem>>, vector<24x8xf32>
    %cst_31 = arith.constant dense<0.000000e+00> : vector<24x256xf32>
    %174 = tpu.matmul %173, %172, %cst_31 {dimension_numbers = #tpu.dot_dimension_numbers<[1], [0], [0], [1], [0, 0, 1, 1], [], []>} : vector<24x8xf32>, vector<8x256xf32>, vector<24x256xf32> -> vector<24x256xf32>
    %175 = arith.addf %0, %174 : vector<24x256xf32>
    %c0_32 = arith.constant 0 : index
    %c0_33 = arith.constant 0 : index
    %176 = vector.load %arg4[%c0_32, %c0_33] : memref<8x26xf32, #tpu.memory_space<vmem>>, vector<8x26xf32>
    %177 = vector.extract_strided_slice %176 {offsets = [0, 0], sizes = [8, 7], strides = [1, 1]} : vector<8x26xf32> to vector<8x7xf32>
    %178 = vector.extract_strided_slice %176 {offsets = [0, 7], sizes = [8, 1], strides = [1, 1]} : vector<8x26xf32> to vector<8x1xf32>
    %179 = vector.extract_strided_slice %176 {offsets = [0, 8], sizes = [8, 1], strides = [1, 1]} : vector<8x26xf32> to vector<8x1xf32>
    %180 = vector.extract_strided_slice %176 {offsets = [0, 9], sizes = [8, 7], strides = [1, 1]} : vector<8x26xf32> to vector<8x7xf32>
    %181 = vector.extract_strided_slice %176 {offsets = [0, 16], sizes = [8, 1], strides = [1, 1]} : vector<8x26xf32> to vector<8x1xf32>
    %182 = vector.extract_strided_slice %176 {offsets = [0, 17], sizes = [8, 9], strides = [1, 1]} : vector<8x26xf32> to vector<8x9xf32>
    %c48_i32 = arith.constant 48 : i32
    %183 = tpu.dynamic_rotate %19 by %c48_i32 dim 1 : vector<8x256xf32>, i32 -> vector<8x256xf32>
    %c48_i32_34 = arith.constant 48 : i32
    %184 = vector.broadcast %c48_i32_34 : i32 to vector<1x256xi32>
    %185 = arith.cmpi sge, %1, %184 : vector<1x256xi32>
    %cst_35 = arith.constant 0.000000e+00 : f32
    %186 = vector.shape_cast %185 : vector<1x256xi1> to vector<1x256xi1>
    %187 = vector.broadcast %186 : vector<1x256xi1> to vector<8x256xi1>
    %188 = vector.broadcast %cst_35 : f32 to vector<8x256xf32>
    %189 = arith.select %187, %183, %188 : vector<8x256xi1>, vector<8x256xf32>
    %190 = vector.extract_strided_slice %177 {offsets = [0, 0], sizes = [8, 1], strides = [1, 1]} : vector<8x7xf32> to vector<8x1xf32>
    %191 = vector.broadcast %190 : vector<8x1xf32> to vector<8x256xf32>
    %192 = arith.mulf %189, %191 : vector<8x256xf32>
    %c32_i32_36 = arith.constant 32 : i32
    %193 = tpu.dynamic_rotate %19 by %c32_i32_36 dim 1 : vector<8x256xf32>, i32 -> vector<8x256xf32>
    %cst_37 = arith.constant 0.000000e+00 : f32
    %194 = vector.shape_cast %88 : vector<1x256xi1> to vector<1x256xi1>
    %195 = vector.broadcast %194 : vector<1x256xi1> to vector<8x256xi1>
    %196 = vector.broadcast %cst_37 : f32 to vector<8x256xf32>
    %197 = arith.select %195, %193, %196 : vector<8x256xi1>, vector<8x256xf32>
    %198 = vector.extract_strided_slice %177 {offsets = [0, 1], sizes = [8, 1], strides = [1, 1]} : vector<8x7xf32> to vector<8x1xf32>
    %199 = vector.broadcast %198 : vector<8x1xf32> to vector<8x256xf32>
    %200 = arith.mulf %197, %199 : vector<8x256xf32>
    %201 = arith.addf %192, %200 : vector<8x256xf32>
    %c16_i32_38 = arith.constant 16 : i32
    %202 = tpu.dynamic_rotate %19 by %c16_i32_38 dim 1 : vector<8x256xf32>, i32 -> vector<8x256xf32>
    %cst_39 = arith.constant 0.000000e+00 : f32
    %203 = vector.shape_cast %29 : vector<1x256xi1> to vector<1x256xi1>
    %204 = vector.broadcast %203 : vector<1x256xi1> to vector<8x256xi1>
    %205 = vector.broadcast %cst_39 : f32 to vector<8x256xf32>
    %206 = arith.select %204, %202, %205 : vector<8x256xi1>, vector<8x256xf32>
    %207 = vector.extract_strided_slice %177 {offsets = [0, 2], sizes = [8, 1], strides = [1, 1]} : vector<8x7xf32> to vector<8x1xf32>
    %208 = vector.broadcast %207 : vector<8x1xf32> to vector<8x256xf32>
    %209 = arith.mulf %206, %208 : vector<8x256xf32>
    %210 = arith.addf %201, %209 : vector<8x256xf32>
    %211 = vector.extract_strided_slice %177 {offsets = [0, 3], sizes = [8, 1], strides = [1, 1]} : vector<8x7xf32> to vector<8x1xf32>
    %212 = vector.broadcast %211 : vector<8x1xf32> to vector<8x256xf32>
    %213 = arith.mulf %19, %212 : vector<8x256xf32>
    %214 = arith.addf %210, %213 : vector<8x256xf32>
    %c240_i32_40 = arith.constant 240 : i32
    %215 = tpu.dynamic_rotate %19 by %c240_i32_40 dim 1 : vector<8x256xf32>, i32 -> vector<8x256xf32>
    %cst_41 = arith.constant 0.000000e+00 : f32
    %216 = vector.shape_cast %43 : vector<1x256xi1> to vector<1x256xi1>
    %217 = vector.broadcast %216 : vector<1x256xi1> to vector<8x256xi1>
    %218 = vector.broadcast %cst_41 : f32 to vector<8x256xf32>
    %219 = arith.select %217, %215, %218 : vector<8x256xi1>, vector<8x256xf32>
    %220 = vector.extract_strided_slice %177 {offsets = [0, 4], sizes = [8, 1], strides = [1, 1]} : vector<8x7xf32> to vector<8x1xf32>
    %221 = vector.broadcast %220 : vector<8x1xf32> to vector<8x256xf32>
    %222 = arith.mulf %219, %221 : vector<8x256xf32>
    %223 = arith.addf %214, %222 : vector<8x256xf32>
    %c224_i32_42 = arith.constant 224 : i32
    %224 = tpu.dynamic_rotate %19 by %c224_i32_42 dim 1 : vector<8x256xf32>, i32 -> vector<8x256xf32>
    %cst_43 = arith.constant 0.000000e+00 : f32
    %225 = vector.shape_cast %144 : vector<1x256xi1> to vector<1x256xi1>
    %226 = vector.broadcast %225 : vector<1x256xi1> to vector<8x256xi1>
    %227 = vector.broadcast %cst_43 : f32 to vector<8x256xf32>
    %228 = arith.select %226, %224, %227 : vector<8x256xi1>, vector<8x256xf32>
    %229 = vector.extract_strided_slice %177 {offsets = [0, 5], sizes = [8, 1], strides = [1, 1]} : vector<8x7xf32> to vector<8x1xf32>
    %230 = vector.broadcast %229 : vector<8x1xf32> to vector<8x256xf32>
    %231 = arith.mulf %228, %230 : vector<8x256xf32>
    %232 = arith.addf %223, %231 : vector<8x256xf32>
    %c208_i32 = arith.constant 208 : i32
    %233 = tpu.dynamic_rotate %19 by %c208_i32 dim 1 : vector<8x256xf32>, i32 -> vector<8x256xf32>
    %c208_i32_44 = arith.constant 208 : i32
    %234 = vector.broadcast %c208_i32_44 : i32 to vector<1x256xi32>
    %235 = arith.cmpi slt, %1, %234 : vector<1x256xi32>
    %cst_45 = arith.constant 0.000000e+00 : f32
    %236 = vector.shape_cast %235 : vector<1x256xi1> to vector<1x256xi1>
    %237 = vector.broadcast %236 : vector<1x256xi1> to vector<8x256xi1>
    %238 = vector.broadcast %cst_45 : f32 to vector<8x256xf32>
    %239 = arith.select %237, %233, %238 : vector<8x256xi1>, vector<8x256xf32>
    %240 = vector.extract_strided_slice %177 {offsets = [0, 6], sizes = [8, 1], strides = [1, 1]} : vector<8x7xf32> to vector<8x1xf32>
    %241 = vector.broadcast %240 : vector<8x1xf32> to vector<8x256xf32>
    %242 = arith.mulf %239, %241 : vector<8x256xf32>
    %243 = arith.addf %232, %242 : vector<8x256xf32>
    %244 = vector.broadcast %178 : vector<8x1xf32> to vector<8x256xf32>
    %245 = arith.addf %243, %244 : vector<8x256xf32>
    %cst_46 = arith.constant 0.000000e+00 : f32
    %246 = vector.broadcast %cst_46 : f32 to vector<8x256xf32>
    %247 = arith.cmpf ogt, %245, %246 : vector<8x256xf32>
    %248 = vector.broadcast %179 : vector<8x1xf32> to vector<8x256xf32>
    %249 = arith.mulf %245, %248 : vector<8x256xf32>
    %250 = arith.select %247, %245, %249 : vector<8x256xi1>, vector<8x256xf32>
    %c3_i32 = arith.constant 3 : i32
    %251 = tpu.dynamic_rotate %250 by %c3_i32 dim 1 : vector<8x256xf32>, i32 -> vector<8x256xf32>
    %c3_i32_47 = arith.constant 3 : i32
    %252 = vector.broadcast %c3_i32_47 : i32 to vector<1x256xi32>
    %253 = arith.cmpi sge, %17, %252 : vector<1x256xi32>
    %cst_48 = arith.constant 0.000000e+00 : f32
    %254 = vector.shape_cast %253 : vector<1x256xi1> to vector<1x256xi1>
    %255 = vector.broadcast %254 : vector<1x256xi1> to vector<8x256xi1>
    %256 = vector.broadcast %cst_48 : f32 to vector<8x256xf32>
    %257 = arith.select %255, %251, %256 : vector<8x256xi1>, vector<8x256xf32>
    %258 = vector.extract_strided_slice %180 {offsets = [0, 0], sizes = [8, 1], strides = [1, 1]} : vector<8x7xf32> to vector<8x1xf32>
    %259 = vector.broadcast %258 : vector<8x1xf32> to vector<8x256xf32>
    %260 = arith.mulf %257, %259 : vector<8x256xf32>
    %c2_i32_49 = arith.constant 2 : i32
    %261 = tpu.dynamic_rotate %250 by %c2_i32_49 dim 1 : vector<8x256xf32>, i32 -> vector<8x256xf32>
    %cst_50 = arith.constant 0.000000e+00 : f32
    %262 = vector.shape_cast %90 : vector<1x256xi1> to vector<1x256xi1>
    %263 = vector.broadcast %262 : vector<1x256xi1> to vector<8x256xi1>
    %264 = vector.broadcast %cst_50 : f32 to vector<8x256xf32>
    %265 = arith.select %263, %261, %264 : vector<8x256xi1>, vector<8x256xf32>
    %266 = vector.extract_strided_slice %180 {offsets = [0, 1], sizes = [8, 1], strides = [1, 1]} : vector<8x7xf32> to vector<8x1xf32>
    %267 = vector.broadcast %266 : vector<8x1xf32> to vector<8x256xf32>
    %268 = arith.mulf %265, %267 : vector<8x256xf32>
    %269 = arith.addf %260, %268 : vector<8x256xf32>
    %c1_i32_51 = arith.constant 1 : i32
    %270 = tpu.dynamic_rotate %250 by %c1_i32_51 dim 1 : vector<8x256xf32>, i32 -> vector<8x256xf32>
    %cst_52 = arith.constant 0.000000e+00 : f32
    %271 = vector.shape_cast %61 : vector<1x256xi1> to vector<1x256xi1>
    %272 = vector.broadcast %271 : vector<1x256xi1> to vector<8x256xi1>
    %273 = vector.broadcast %cst_52 : f32 to vector<8x256xf32>
    %274 = arith.select %272, %270, %273 : vector<8x256xi1>, vector<8x256xf32>
    %275 = vector.extract_strided_slice %180 {offsets = [0, 2], sizes = [8, 1], strides = [1, 1]} : vector<8x7xf32> to vector<8x1xf32>
    %276 = vector.broadcast %275 : vector<8x1xf32> to vector<8x256xf32>
    %277 = arith.mulf %274, %276 : vector<8x256xf32>
    %278 = arith.addf %269, %277 : vector<8x256xf32>
    %279 = vector.extract_strided_slice %180 {offsets = [0, 3], sizes = [8, 1], strides = [1, 1]} : vector<8x7xf32> to vector<8x1xf32>
    %280 = vector.broadcast %279 : vector<8x1xf32> to vector<8x256xf32>
    %281 = arith.mulf %250, %280 : vector<8x256xf32>
    %282 = arith.addf %278, %281 : vector<8x256xf32>
    %c255_i32_53 = arith.constant 255 : i32
    %283 = tpu.dynamic_rotate %250 by %c255_i32_53 dim 1 : vector<8x256xf32>, i32 -> vector<8x256xf32>
    %cst_54 = arith.constant 0.000000e+00 : f32
    %284 = vector.shape_cast %75 : vector<1x256xi1> to vector<1x256xi1>
    %285 = vector.broadcast %284 : vector<1x256xi1> to vector<8x256xi1>
    %286 = vector.broadcast %cst_54 : f32 to vector<8x256xf32>
    %287 = arith.select %285, %283, %286 : vector<8x256xi1>, vector<8x256xf32>
    %288 = vector.extract_strided_slice %180 {offsets = [0, 4], sizes = [8, 1], strides = [1, 1]} : vector<8x7xf32> to vector<8x1xf32>
    %289 = vector.broadcast %288 : vector<8x1xf32> to vector<8x256xf32>
    %290 = arith.mulf %287, %289 : vector<8x256xf32>
    %291 = arith.addf %282, %290 : vector<8x256xf32>
    %c254_i32_55 = arith.constant 254 : i32
    %292 = tpu.dynamic_rotate %250 by %c254_i32_55 dim 1 : vector<8x256xf32>, i32 -> vector<8x256xf32>
    %cst_56 = arith.constant 0.000000e+00 : f32
    %293 = vector.shape_cast %110 : vector<1x256xi1> to vector<1x256xi1>
    %294 = vector.broadcast %293 : vector<1x256xi1> to vector<8x256xi1>
    %295 = vector.broadcast %cst_56 : f32 to vector<8x256xf32>
    %296 = arith.select %294, %292, %295 : vector<8x256xi1>, vector<8x256xf32>
    %297 = vector.extract_strided_slice %180 {offsets = [0, 5], sizes = [8, 1], strides = [1, 1]} : vector<8x7xf32> to vector<8x1xf32>
    %298 = vector.broadcast %297 : vector<8x1xf32> to vector<8x256xf32>
    %299 = arith.mulf %296, %298 : vector<8x256xf32>
    %300 = arith.addf %291, %299 : vector<8x256xf32>
    %c253_i32 = arith.constant 253 : i32
    %301 = tpu.dynamic_rotate %250 by %c253_i32 dim 1 : vector<8x256xf32>, i32 -> vector<8x256xf32>
    %c13_i32 = arith.constant 13 : i32
    %302 = vector.broadcast %c13_i32 : i32 to vector<1x256xi32>
    %303 = arith.cmpi slt, %17, %302 : vector<1x256xi32>
    %cst_57 = arith.constant 0.000000e+00 : f32
    %304 = vector.shape_cast %303 : vector<1x256xi1> to vector<1x256xi1>
    %305 = vector.broadcast %304 : vector<1x256xi1> to vector<8x256xi1>
    %306 = vector.broadcast %cst_57 : f32 to vector<8x256xf32>
    %307 = arith.select %305, %301, %306 : vector<8x256xi1>, vector<8x256xf32>
    %308 = vector.extract_strided_slice %180 {offsets = [0, 6], sizes = [8, 1], strides = [1, 1]} : vector<8x7xf32> to vector<8x1xf32>
    %309 = vector.broadcast %308 : vector<8x1xf32> to vector<8x256xf32>
    %310 = arith.mulf %307, %309 : vector<8x256xf32>
    %311 = arith.addf %300, %310 : vector<8x256xf32>
    %312 = vector.broadcast %181 : vector<8x1xf32> to vector<8x256xf32>
    %313 = arith.addf %311, %312 : vector<8x256xf32>
    %c68_i32 = arith.constant 68 : i32
    %314 = tpu.dynamic_rotate %313 by %c68_i32 dim 1 : vector<8x256xf32>, i32 -> vector<8x256xf32>
    %c64_i32 = arith.constant 64 : i32
    %315 = vector.broadcast %c64_i32 : i32 to vector<1x256xi32>
    %316 = arith.cmpi sge, %1, %315 : vector<1x256xi32>
    %c4_i32 = arith.constant 4 : i32
    %317 = vector.broadcast %c4_i32 : i32 to vector<1x256xi32>
    %318 = arith.cmpi sge, %17, %317 : vector<1x256xi32>
    %319 = arith.andi %316, %318 : vector<1x256xi1>
    %cst_58 = arith.constant 0.000000e+00 : f32
    %320 = vector.shape_cast %319 : vector<1x256xi1> to vector<1x256xi1>
    %321 = vector.broadcast %320 : vector<1x256xi1> to vector<8x256xi1>
    %322 = vector.broadcast %cst_58 : f32 to vector<8x256xf32>
    %323 = arith.select %321, %314, %322 : vector<8x256xi1>, vector<8x256xf32>
    %324 = vector.extract_strided_slice %182 {offsets = [0, 0], sizes = [8, 1], strides = [1, 1]} : vector<8x9xf32> to vector<8x1xf32>
    %325 = vector.broadcast %324 : vector<8x1xf32> to vector<8x256xf32>
    %326 = arith.mulf %323, %325 : vector<8x256xf32>
    %c64_i32_59 = arith.constant 64 : i32
    %327 = tpu.dynamic_rotate %313 by %c64_i32_59 dim 1 : vector<8x256xf32>, i32 -> vector<8x256xf32>
    %cst_60 = arith.constant 0.000000e+00 : f32
    %328 = vector.shape_cast %316 : vector<1x256xi1> to vector<1x256xi1>
    %329 = vector.broadcast %328 : vector<1x256xi1> to vector<8x256xi1>
    %330 = vector.broadcast %cst_60 : f32 to vector<8x256xf32>
    %331 = arith.select %329, %327, %330 : vector<8x256xi1>, vector<8x256xf32>
    %332 = vector.extract_strided_slice %182 {offsets = [0, 1], sizes = [8, 1], strides = [1, 1]} : vector<8x9xf32> to vector<8x1xf32>
    %333 = vector.broadcast %332 : vector<8x1xf32> to vector<8x256xf32>
    %334 = arith.mulf %331, %333 : vector<8x256xf32>
    %335 = arith.addf %326, %334 : vector<8x256xf32>
    %c60_i32 = arith.constant 60 : i32
    %336 = tpu.dynamic_rotate %313 by %c60_i32 dim 1 : vector<8x256xf32>, i32 -> vector<8x256xf32>
    %c12_i32 = arith.constant 12 : i32
    %337 = vector.broadcast %c12_i32 : i32 to vector<1x256xi32>
    %338 = arith.cmpi slt, %17, %337 : vector<1x256xi32>
    %339 = arith.andi %316, %338 : vector<1x256xi1>
    %cst_61 = arith.constant 0.000000e+00 : f32
    %340 = vector.shape_cast %339 : vector<1x256xi1> to vector<1x256xi1>
    %341 = vector.broadcast %340 : vector<1x256xi1> to vector<8x256xi1>
    %342 = vector.broadcast %cst_61 : f32 to vector<8x256xf32>
    %343 = arith.select %341, %336, %342 : vector<8x256xi1>, vector<8x256xf32>
    %344 = vector.extract_strided_slice %182 {offsets = [0, 2], sizes = [8, 1], strides = [1, 1]} : vector<8x9xf32> to vector<8x1xf32>
    %345 = vector.broadcast %344 : vector<8x1xf32> to vector<8x256xf32>
    %346 = arith.mulf %343, %345 : vector<8x256xf32>
    %347 = arith.addf %335, %346 : vector<8x256xf32>
    %c4_i32_62 = arith.constant 4 : i32
    %348 = tpu.dynamic_rotate %313 by %c4_i32_62 dim 1 : vector<8x256xf32>, i32 -> vector<8x256xf32>
    %cst_63 = arith.constant 0.000000e+00 : f32
    %349 = vector.shape_cast %318 : vector<1x256xi1> to vector<1x256xi1>
    %350 = vector.broadcast %349 : vector<1x256xi1> to vector<8x256xi1>
    %351 = vector.broadcast %cst_63 : f32 to vector<8x256xf32>
    %352 = arith.select %350, %348, %351 : vector<8x256xi1>, vector<8x256xf32>
    %353 = vector.extract_strided_slice %182 {offsets = [0, 3], sizes = [8, 1], strides = [1, 1]} : vector<8x9xf32> to vector<8x1xf32>
    %354 = vector.broadcast %353 : vector<8x1xf32> to vector<8x256xf32>
    %355 = arith.mulf %352, %354 : vector<8x256xf32>
    %356 = arith.addf %347, %355 : vector<8x256xf32>
    %357 = vector.extract_strided_slice %182 {offsets = [0, 4], sizes = [8, 1], strides = [1, 1]} : vector<8x9xf32> to vector<8x1xf32>
    %358 = vector.broadcast %357 : vector<8x1xf32> to vector<8x256xf32>
    %359 = arith.mulf %313, %358 : vector<8x256xf32>
    %360 = arith.addf %356, %359 : vector<8x256xf32>
    %c252_i32 = arith.constant 252 : i32
    %361 = tpu.dynamic_rotate %313 by %c252_i32 dim 1 : vector<8x256xf32>, i32 -> vector<8x256xf32>
    %cst_64 = arith.constant 0.000000e+00 : f32
    %362 = vector.shape_cast %338 : vector<1x256xi1> to vector<1x256xi1>
    %363 = vector.broadcast %362 : vector<1x256xi1> to vector<8x256xi1>
    %364 = vector.broadcast %cst_64 : f32 to vector<8x256xf32>
    %365 = arith.select %363, %361, %364 : vector<8x256xi1>, vector<8x256xf32>
    %366 = vector.extract_strided_slice %182 {offsets = [0, 5], sizes = [8, 1], strides = [1, 1]} : vector<8x9xf32> to vector<8x1xf32>
    %367 = vector.broadcast %366 : vector<8x1xf32> to vector<8x256xf32>
    %368 = arith.mulf %365, %367 : vector<8x256xf32>
    %369 = arith.addf %360, %368 : vector<8x256xf32>
    %c196_i32 = arith.constant 196 : i32
    %370 = tpu.dynamic_rotate %313 by %c196_i32 dim 1 : vector<8x256xf32>, i32 -> vector<8x256xf32>
    %c192_i32 = arith.constant 192 : i32
    %371 = vector.broadcast %c192_i32 : i32 to vector<1x256xi32>
    %372 = arith.cmpi slt, %1, %371 : vector<1x256xi32>
    %373 = arith.andi %372, %318 : vector<1x256xi1>
    %cst_65 = arith.constant 0.000000e+00 : f32
    %374 = vector.shape_cast %373 : vector<1x256xi1> to vector<1x256xi1>
    %375 = vector.broadcast %374 : vector<1x256xi1> to vector<8x256xi1>
    %376 = vector.broadcast %cst_65 : f32 to vector<8x256xf32>
    %377 = arith.select %375, %370, %376 : vector<8x256xi1>, vector<8x256xf32>
    %378 = vector.extract_strided_slice %182 {offsets = [0, 6], sizes = [8, 1], strides = [1, 1]} : vector<8x9xf32> to vector<8x1xf32>
    %379 = vector.broadcast %378 : vector<8x1xf32> to vector<8x256xf32>
    %380 = arith.mulf %377, %379 : vector<8x256xf32>
    %381 = arith.addf %369, %380 : vector<8x256xf32>
    %c192_i32_66 = arith.constant 192 : i32
    %382 = tpu.dynamic_rotate %313 by %c192_i32_66 dim 1 : vector<8x256xf32>, i32 -> vector<8x256xf32>
    %cst_67 = arith.constant 0.000000e+00 : f32
    %383 = vector.shape_cast %372 : vector<1x256xi1> to vector<1x256xi1>
    %384 = vector.broadcast %383 : vector<1x256xi1> to vector<8x256xi1>
    %385 = vector.broadcast %cst_67 : f32 to vector<8x256xf32>
    %386 = arith.select %384, %382, %385 : vector<8x256xi1>, vector<8x256xf32>
    %387 = vector.extract_strided_slice %182 {offsets = [0, 7], sizes = [8, 1], strides = [1, 1]} : vector<8x9xf32> to vector<8x1xf32>
    %388 = vector.broadcast %387 : vector<8x1xf32> to vector<8x256xf32>
    %389 = arith.mulf %386, %388 : vector<8x256xf32>
    %390 = arith.addf %381, %389 : vector<8x256xf32>
    %c188_i32 = arith.constant 188 : i32
    %391 = tpu.dynamic_rotate %313 by %c188_i32 dim 1 : vector<8x256xf32>, i32 -> vector<8x256xf32>
    %392 = arith.andi %372, %338 : vector<1x256xi1>
    %cst_68 = arith.constant 0.000000e+00 : f32
    %393 = vector.shape_cast %392 : vector<1x256xi1> to vector<1x256xi1>
    %394 = vector.broadcast %393 : vector<1x256xi1> to vector<8x256xi1>
    %395 = vector.broadcast %cst_68 : f32 to vector<8x256xf32>
    %396 = arith.select %394, %391, %395 : vector<8x256xi1>, vector<8x256xf32>
    %397 = vector.extract_strided_slice %182 {offsets = [0, 8], sizes = [8, 1], strides = [1, 1]} : vector<8x9xf32> to vector<8x1xf32>
    %398 = vector.broadcast %397 : vector<8x1xf32> to vector<8x256xf32>
    %399 = arith.mulf %396, %398 : vector<8x256xf32>
    %400 = arith.addf %390, %399 : vector<8x256xf32>
    %c0_69 = arith.constant 0 : index
    %c0_70 = arith.constant 0 : index
    %401 = vector.load %arg7[%c0_69, %c0_70] : memref<24x8xf32, #tpu.memory_space<vmem>>, vector<24x8xf32>
    %cst_71 = arith.constant dense<0.000000e+00> : vector<24x256xf32>
    %402 = tpu.matmul %401, %400, %cst_71 {dimension_numbers = #tpu.dot_dimension_numbers<[1], [0], [0], [1], [0, 0, 1, 1], [], []>} : vector<24x8xf32>, vector<8x256xf32>, vector<24x256xf32> -> vector<24x256xf32>
    %403 = arith.addf %175, %402 : vector<24x256xf32>
    %c0_72 = arith.constant 0 : index
    %c0_73 = arith.constant 0 : index
    %404 = vector.load %arg5[%c0_72, %c0_73] : memref<8x42xf32, #tpu.memory_space<vmem>>, vector<8x42xf32>
    %405 = vector.extract_strided_slice %404 {offsets = [0, 0], sizes = [8, 15], strides = [1, 1]} : vector<8x42xf32> to vector<8x15xf32>
    %406 = vector.extract_strided_slice %404 {offsets = [0, 15], sizes = [8, 1], strides = [1, 1]} : vector<8x42xf32> to vector<8x1xf32>
    %407 = vector.extract_strided_slice %404 {offsets = [0, 16], sizes = [8, 1], strides = [1, 1]} : vector<8x42xf32> to vector<8x1xf32>
    %408 = vector.extract_strided_slice %404 {offsets = [0, 17], sizes = [8, 15], strides = [1, 1]} : vector<8x42xf32> to vector<8x15xf32>
    %409 = vector.extract_strided_slice %404 {offsets = [0, 32], sizes = [8, 1], strides = [1, 1]} : vector<8x42xf32> to vector<8x1xf32>
    %410 = vector.extract_strided_slice %404 {offsets = [0, 33], sizes = [8, 9], strides = [1, 1]} : vector<8x42xf32> to vector<8x9xf32>
    %c112_i32 = arith.constant 112 : i32
    %411 = tpu.dynamic_rotate %19 by %c112_i32 dim 1 : vector<8x256xf32>, i32 -> vector<8x256xf32>
    %c112_i32_74 = arith.constant 112 : i32
    %412 = vector.broadcast %c112_i32_74 : i32 to vector<1x256xi32>
    %413 = arith.cmpi sge, %1, %412 : vector<1x256xi32>
    %cst_75 = arith.constant 0.000000e+00 : f32
    %414 = vector.shape_cast %413 : vector<1x256xi1> to vector<1x256xi1>
    %415 = vector.broadcast %414 : vector<1x256xi1> to vector<8x256xi1>
    %416 = vector.broadcast %cst_75 : f32 to vector<8x256xf32>
    %417 = arith.select %415, %411, %416 : vector<8x256xi1>, vector<8x256xf32>
    %418 = vector.extract_strided_slice %405 {offsets = [0, 0], sizes = [8, 1], strides = [1, 1]} : vector<8x15xf32> to vector<8x1xf32>
    %419 = vector.broadcast %418 : vector<8x1xf32> to vector<8x256xf32>
    %420 = arith.mulf %417, %419 : vector<8x256xf32>
    %c96_i32 = arith.constant 96 : i32
    %421 = tpu.dynamic_rotate %19 by %c96_i32 dim 1 : vector<8x256xf32>, i32 -> vector<8x256xf32>
    %c96_i32_76 = arith.constant 96 : i32
    %422 = vector.broadcast %c96_i32_76 : i32 to vector<1x256xi32>
    %423 = arith.cmpi sge, %1, %422 : vector<1x256xi32>
    %cst_77 = arith.constant 0.000000e+00 : f32
    %424 = vector.shape_cast %423 : vector<1x256xi1> to vector<1x256xi1>
    %425 = vector.broadcast %424 : vector<1x256xi1> to vector<8x256xi1>
    %426 = vector.broadcast %cst_77 : f32 to vector<8x256xf32>
    %427 = arith.select %425, %421, %426 : vector<8x256xi1>, vector<8x256xf32>
    %428 = vector.extract_strided_slice %405 {offsets = [0, 1], sizes = [8, 1], strides = [1, 1]} : vector<8x15xf32> to vector<8x1xf32>
    %429 = vector.broadcast %428 : vector<8x1xf32> to vector<8x256xf32>
    %430 = arith.mulf %427, %429 : vector<8x256xf32>
    %431 = arith.addf %420, %430 : vector<8x256xf32>
    %c80_i32 = arith.constant 80 : i32
    %432 = tpu.dynamic_rotate %19 by %c80_i32 dim 1 : vector<8x256xf32>, i32 -> vector<8x256xf32>
    %c80_i32_78 = arith.constant 80 : i32
    %433 = vector.broadcast %c80_i32_78 : i32 to vector<1x256xi32>
    %434 = arith.cmpi sge, %1, %433 : vector<1x256xi32>
    %cst_79 = arith.constant 0.000000e+00 : f32
    %435 = vector.shape_cast %434 : vector<1x256xi1> to vector<1x256xi1>
    %436 = vector.broadcast %435 : vector<1x256xi1> to vector<8x256xi1>
    %437 = vector.broadcast %cst_79 : f32 to vector<8x256xf32>
    %438 = arith.select %436, %432, %437 : vector<8x256xi1>, vector<8x256xf32>
    %439 = vector.extract_strided_slice %405 {offsets = [0, 2], sizes = [8, 1], strides = [1, 1]} : vector<8x15xf32> to vector<8x1xf32>
    %440 = vector.broadcast %439 : vector<8x1xf32> to vector<8x256xf32>
    %441 = arith.mulf %438, %440 : vector<8x256xf32>
    %442 = arith.addf %431, %441 : vector<8x256xf32>
    %c64_i32_80 = arith.constant 64 : i32
    %443 = tpu.dynamic_rotate %19 by %c64_i32_80 dim 1 : vector<8x256xf32>, i32 -> vector<8x256xf32>
    %cst_81 = arith.constant 0.000000e+00 : f32
    %444 = vector.shape_cast %316 : vector<1x256xi1> to vector<1x256xi1>
    %445 = vector.broadcast %444 : vector<1x256xi1> to vector<8x256xi1>
    %446 = vector.broadcast %cst_81 : f32 to vector<8x256xf32>
    %447 = arith.select %445, %443, %446 : vector<8x256xi1>, vector<8x256xf32>
    %448 = vector.extract_strided_slice %405 {offsets = [0, 3], sizes = [8, 1], strides = [1, 1]} : vector<8x15xf32> to vector<8x1xf32>
    %449 = vector.broadcast %448 : vector<8x1xf32> to vector<8x256xf32>
    %450 = arith.mulf %447, %449 : vector<8x256xf32>
    %451 = arith.addf %442, %450 : vector<8x256xf32>
    %c48_i32_82 = arith.constant 48 : i32
    %452 = tpu.dynamic_rotate %19 by %c48_i32_82 dim 1 : vector<8x256xf32>, i32 -> vector<8x256xf32>
    %cst_83 = arith.constant 0.000000e+00 : f32
    %453 = vector.shape_cast %185 : vector<1x256xi1> to vector<1x256xi1>
    %454 = vector.broadcast %453 : vector<1x256xi1> to vector<8x256xi1>
    %455 = vector.broadcast %cst_83 : f32 to vector<8x256xf32>
    %456 = arith.select %454, %452, %455 : vector<8x256xi1>, vector<8x256xf32>
    %457 = vector.extract_strided_slice %405 {offsets = [0, 4], sizes = [8, 1], strides = [1, 1]} : vector<8x15xf32> to vector<8x1xf32>
    %458 = vector.broadcast %457 : vector<8x1xf32> to vector<8x256xf32>
    %459 = arith.mulf %456, %458 : vector<8x256xf32>
    %460 = arith.addf %451, %459 : vector<8x256xf32>
    %c32_i32_84 = arith.constant 32 : i32
    %461 = tpu.dynamic_rotate %19 by %c32_i32_84 dim 1 : vector<8x256xf32>, i32 -> vector<8x256xf32>
    %cst_85 = arith.constant 0.000000e+00 : f32
    %462 = vector.shape_cast %88 : vector<1x256xi1> to vector<1x256xi1>
    %463 = vector.broadcast %462 : vector<1x256xi1> to vector<8x256xi1>
    %464 = vector.broadcast %cst_85 : f32 to vector<8x256xf32>
    %465 = arith.select %463, %461, %464 : vector<8x256xi1>, vector<8x256xf32>
    %466 = vector.extract_strided_slice %405 {offsets = [0, 5], sizes = [8, 1], strides = [1, 1]} : vector<8x15xf32> to vector<8x1xf32>
    %467 = vector.broadcast %466 : vector<8x1xf32> to vector<8x256xf32>
    %468 = arith.mulf %465, %467 : vector<8x256xf32>
    %469 = arith.addf %460, %468 : vector<8x256xf32>
    %c16_i32_86 = arith.constant 16 : i32
    %470 = tpu.dynamic_rotate %19 by %c16_i32_86 dim 1 : vector<8x256xf32>, i32 -> vector<8x256xf32>
    %cst_87 = arith.constant 0.000000e+00 : f32
    %471 = vector.shape_cast %29 : vector<1x256xi1> to vector<1x256xi1>
    %472 = vector.broadcast %471 : vector<1x256xi1> to vector<8x256xi1>
    %473 = vector.broadcast %cst_87 : f32 to vector<8x256xf32>
    %474 = arith.select %472, %470, %473 : vector<8x256xi1>, vector<8x256xf32>
    %475 = vector.extract_strided_slice %405 {offsets = [0, 6], sizes = [8, 1], strides = [1, 1]} : vector<8x15xf32> to vector<8x1xf32>
    %476 = vector.broadcast %475 : vector<8x1xf32> to vector<8x256xf32>
    %477 = arith.mulf %474, %476 : vector<8x256xf32>
    %478 = arith.addf %469, %477 : vector<8x256xf32>
    %479 = vector.extract_strided_slice %405 {offsets = [0, 7], sizes = [8, 1], strides = [1, 1]} : vector<8x15xf32> to vector<8x1xf32>
    %480 = vector.broadcast %479 : vector<8x1xf32> to vector<8x256xf32>
    %481 = arith.mulf %19, %480 : vector<8x256xf32>
    %482 = arith.addf %478, %481 : vector<8x256xf32>
    %c240_i32_88 = arith.constant 240 : i32
    %483 = tpu.dynamic_rotate %19 by %c240_i32_88 dim 1 : vector<8x256xf32>, i32 -> vector<8x256xf32>
    %cst_89 = arith.constant 0.000000e+00 : f32
    %484 = vector.shape_cast %43 : vector<1x256xi1> to vector<1x256xi1>
    %485 = vector.broadcast %484 : vector<1x256xi1> to vector<8x256xi1>
    %486 = vector.broadcast %cst_89 : f32 to vector<8x256xf32>
    %487 = arith.select %485, %483, %486 : vector<8x256xi1>, vector<8x256xf32>
    %488 = vector.extract_strided_slice %405 {offsets = [0, 8], sizes = [8, 1], strides = [1, 1]} : vector<8x15xf32> to vector<8x1xf32>
    %489 = vector.broadcast %488 : vector<8x1xf32> to vector<8x256xf32>
    %490 = arith.mulf %487, %489 : vector<8x256xf32>
    %491 = arith.addf %482, %490 : vector<8x256xf32>
    %c224_i32_90 = arith.constant 224 : i32
    %492 = tpu.dynamic_rotate %19 by %c224_i32_90 dim 1 : vector<8x256xf32>, i32 -> vector<8x256xf32>
    %cst_91 = arith.constant 0.000000e+00 : f32
    %493 = vector.shape_cast %144 : vector<1x256xi1> to vector<1x256xi1>
    %494 = vector.broadcast %493 : vector<1x256xi1> to vector<8x256xi1>
    %495 = vector.broadcast %cst_91 : f32 to vector<8x256xf32>
    %496 = arith.select %494, %492, %495 : vector<8x256xi1>, vector<8x256xf32>
    %497 = vector.extract_strided_slice %405 {offsets = [0, 9], sizes = [8, 1], strides = [1, 1]} : vector<8x15xf32> to vector<8x1xf32>
    %498 = vector.broadcast %497 : vector<8x1xf32> to vector<8x256xf32>
    %499 = arith.mulf %496, %498 : vector<8x256xf32>
    %500 = arith.addf %491, %499 : vector<8x256xf32>
    %c208_i32_92 = arith.constant 208 : i32
    %501 = tpu.dynamic_rotate %19 by %c208_i32_92 dim 1 : vector<8x256xf32>, i32 -> vector<8x256xf32>
    %cst_93 = arith.constant 0.000000e+00 : f32
    %502 = vector.shape_cast %235 : vector<1x256xi1> to vector<1x256xi1>
    %503 = vector.broadcast %502 : vector<1x256xi1> to vector<8x256xi1>
    %504 = vector.broadcast %cst_93 : f32 to vector<8x256xf32>
    %505 = arith.select %503, %501, %504 : vector<8x256xi1>, vector<8x256xf32>
    %506 = vector.extract_strided_slice %405 {offsets = [0, 10], sizes = [8, 1], strides = [1, 1]} : vector<8x15xf32> to vector<8x1xf32>
    %507 = vector.broadcast %506 : vector<8x1xf32> to vector<8x256xf32>
    %508 = arith.mulf %505, %507 : vector<8x256xf32>
    %509 = arith.addf %500, %508 : vector<8x256xf32>
    %c192_i32_94 = arith.constant 192 : i32
    %510 = tpu.dynamic_rotate %19 by %c192_i32_94 dim 1 : vector<8x256xf32>, i32 -> vector<8x256xf32>
    %cst_95 = arith.constant 0.000000e+00 : f32
    %511 = vector.shape_cast %372 : vector<1x256xi1> to vector<1x256xi1>
    %512 = vector.broadcast %511 : vector<1x256xi1> to vector<8x256xi1>
    %513 = vector.broadcast %cst_95 : f32 to vector<8x256xf32>
    %514 = arith.select %512, %510, %513 : vector<8x256xi1>, vector<8x256xf32>
    %515 = vector.extract_strided_slice %405 {offsets = [0, 11], sizes = [8, 1], strides = [1, 1]} : vector<8x15xf32> to vector<8x1xf32>
    %516 = vector.broadcast %515 : vector<8x1xf32> to vector<8x256xf32>
    %517 = arith.mulf %514, %516 : vector<8x256xf32>
    %518 = arith.addf %509, %517 : vector<8x256xf32>
    %c176_i32 = arith.constant 176 : i32
    %519 = tpu.dynamic_rotate %19 by %c176_i32 dim 1 : vector<8x256xf32>, i32 -> vector<8x256xf32>
    %c176_i32_96 = arith.constant 176 : i32
    %520 = vector.broadcast %c176_i32_96 : i32 to vector<1x256xi32>
    %521 = arith.cmpi slt, %1, %520 : vector<1x256xi32>
    %cst_97 = arith.constant 0.000000e+00 : f32
    %522 = vector.shape_cast %521 : vector<1x256xi1> to vector<1x256xi1>
    %523 = vector.broadcast %522 : vector<1x256xi1> to vector<8x256xi1>
    %524 = vector.broadcast %cst_97 : f32 to vector<8x256xf32>
    %525 = arith.select %523, %519, %524 : vector<8x256xi1>, vector<8x256xf32>
    %526 = vector.extract_strided_slice %405 {offsets = [0, 12], sizes = [8, 1], strides = [1, 1]} : vector<8x15xf32> to vector<8x1xf32>
    %527 = vector.broadcast %526 : vector<8x1xf32> to vector<8x256xf32>
    %528 = arith.mulf %525, %527 : vector<8x256xf32>
    %529 = arith.addf %518, %528 : vector<8x256xf32>
    %c160_i32 = arith.constant 160 : i32
    %530 = tpu.dynamic_rotate %19 by %c160_i32 dim 1 : vector<8x256xf32>, i32 -> vector<8x256xf32>
    %c160_i32_98 = arith.constant 160 : i32
    %531 = vector.broadcast %c160_i32_98 : i32 to vector<1x256xi32>
    %532 = arith.cmpi slt, %1, %531 : vector<1x256xi32>
    %cst_99 = arith.constant 0.000000e+00 : f32
    %533 = vector.shape_cast %532 : vector<1x256xi1> to vector<1x256xi1>
    %534 = vector.broadcast %533 : vector<1x256xi1> to vector<8x256xi1>
    %535 = vector.broadcast %cst_99 : f32 to vector<8x256xf32>
    %536 = arith.select %534, %530, %535 : vector<8x256xi1>, vector<8x256xf32>
    %537 = vector.extract_strided_slice %405 {offsets = [0, 13], sizes = [8, 1], strides = [1, 1]} : vector<8x15xf32> to vector<8x1xf32>
    %538 = vector.broadcast %537 : vector<8x1xf32> to vector<8x256xf32>
    %539 = arith.mulf %536, %538 : vector<8x256xf32>
    %540 = arith.addf %529, %539 : vector<8x256xf32>
    %c144_i32 = arith.constant 144 : i32
    %541 = tpu.dynamic_rotate %19 by %c144_i32 dim 1 : vector<8x256xf32>, i32 -> vector<8x256xf32>
    %c144_i32_100 = arith.constant 144 : i32
    %542 = vector.broadcast %c144_i32_100 : i32 to vector<1x256xi32>
    %543 = arith.cmpi slt, %1, %542 : vector<1x256xi32>
    %cst_101 = arith.constant 0.000000e+00 : f32
    %544 = vector.shape_cast %543 : vector<1x256xi1> to vector<1x256xi1>
    %545 = vector.broadcast %544 : vector<1x256xi1> to vector<8x256xi1>
    %546 = vector.broadcast %cst_101 : f32 to vector<8x256xf32>
    %547 = arith.select %545, %541, %546 : vector<8x256xi1>, vector<8x256xf32>
    %548 = vector.extract_strided_slice %405 {offsets = [0, 14], sizes = [8, 1], strides = [1, 1]} : vector<8x15xf32> to vector<8x1xf32>
    %549 = vector.broadcast %548 : vector<8x1xf32> to vector<8x256xf32>
    %550 = arith.mulf %547, %549 : vector<8x256xf32>
    %551 = arith.addf %540, %550 : vector<8x256xf32>
    %552 = vector.broadcast %406 : vector<8x1xf32> to vector<8x256xf32>
    %553 = arith.addf %551, %552 : vector<8x256xf32>
    %cst_102 = arith.constant 0.000000e+00 : f32
    %554 = vector.broadcast %cst_102 : f32 to vector<8x256xf32>
    %555 = arith.cmpf ogt, %553, %554 : vector<8x256xf32>
    %556 = vector.broadcast %407 : vector<8x1xf32> to vector<8x256xf32>
    %557 = arith.mulf %553, %556 : vector<8x256xf32>
    %558 = arith.select %555, %553, %557 : vector<8x256xi1>, vector<8x256xf32>
    %c7_i32 = arith.constant 7 : i32
    %559 = tpu.dynamic_rotate %558 by %c7_i32 dim 1 : vector<8x256xf32>, i32 -> vector<8x256xf32>
    %c7_i32_103 = arith.constant 7 : i32
    %560 = vector.broadcast %c7_i32_103 : i32 to vector<1x256xi32>
    %561 = arith.cmpi sge, %17, %560 : vector<1x256xi32>
    %cst_104 = arith.constant 0.000000e+00 : f32
    %562 = vector.shape_cast %561 : vector<1x256xi1> to vector<1x256xi1>
    %563 = vector.broadcast %562 : vector<1x256xi1> to vector<8x256xi1>
    %564 = vector.broadcast %cst_104 : f32 to vector<8x256xf32>
    %565 = arith.select %563, %559, %564 : vector<8x256xi1>, vector<8x256xf32>
    %566 = vector.extract_strided_slice %408 {offsets = [0, 0], sizes = [8, 1], strides = [1, 1]} : vector<8x15xf32> to vector<8x1xf32>
    %567 = vector.broadcast %566 : vector<8x1xf32> to vector<8x256xf32>
    %568 = arith.mulf %565, %567 : vector<8x256xf32>
    %c6_i32 = arith.constant 6 : i32
    %569 = tpu.dynamic_rotate %558 by %c6_i32 dim 1 : vector<8x256xf32>, i32 -> vector<8x256xf32>
    %c6_i32_105 = arith.constant 6 : i32
    %570 = vector.broadcast %c6_i32_105 : i32 to vector<1x256xi32>
    %571 = arith.cmpi sge, %17, %570 : vector<1x256xi32>
    %cst_106 = arith.constant 0.000000e+00 : f32
    %572 = vector.shape_cast %571 : vector<1x256xi1> to vector<1x256xi1>
    %573 = vector.broadcast %572 : vector<1x256xi1> to vector<8x256xi1>
    %574 = vector.broadcast %cst_106 : f32 to vector<8x256xf32>
    %575 = arith.select %573, %569, %574 : vector<8x256xi1>, vector<8x256xf32>
    %576 = vector.extract_strided_slice %408 {offsets = [0, 1], sizes = [8, 1], strides = [1, 1]} : vector<8x15xf32> to vector<8x1xf32>
    %577 = vector.broadcast %576 : vector<8x1xf32> to vector<8x256xf32>
    %578 = arith.mulf %575, %577 : vector<8x256xf32>
    %579 = arith.addf %568, %578 : vector<8x256xf32>
    %c5_i32 = arith.constant 5 : i32
    %580 = tpu.dynamic_rotate %558 by %c5_i32 dim 1 : vector<8x256xf32>, i32 -> vector<8x256xf32>
    %c5_i32_107 = arith.constant 5 : i32
    %581 = vector.broadcast %c5_i32_107 : i32 to vector<1x256xi32>
    %582 = arith.cmpi sge, %17, %581 : vector<1x256xi32>
    %cst_108 = arith.constant 0.000000e+00 : f32
    %583 = vector.shape_cast %582 : vector<1x256xi1> to vector<1x256xi1>
    %584 = vector.broadcast %583 : vector<1x256xi1> to vector<8x256xi1>
    %585 = vector.broadcast %cst_108 : f32 to vector<8x256xf32>
    %586 = arith.select %584, %580, %585 : vector<8x256xi1>, vector<8x256xf32>
    %587 = vector.extract_strided_slice %408 {offsets = [0, 2], sizes = [8, 1], strides = [1, 1]} : vector<8x15xf32> to vector<8x1xf32>
    %588 = vector.broadcast %587 : vector<8x1xf32> to vector<8x256xf32>
    %589 = arith.mulf %586, %588 : vector<8x256xf32>
    %590 = arith.addf %579, %589 : vector<8x256xf32>
    %c4_i32_109 = arith.constant 4 : i32
    %591 = tpu.dynamic_rotate %558 by %c4_i32_109 dim 1 : vector<8x256xf32>, i32 -> vector<8x256xf32>
    %cst_110 = arith.constant 0.000000e+00 : f32
    %592 = vector.shape_cast %318 : vector<1x256xi1> to vector<1x256xi1>
    %593 = vector.broadcast %592 : vector<1x256xi1> to vector<8x256xi1>
    %594 = vector.broadcast %cst_110 : f32 to vector<8x256xf32>
    %595 = arith.select %593, %591, %594 : vector<8x256xi1>, vector<8x256xf32>
    %596 = vector.extract_strided_slice %408 {offsets = [0, 3], sizes = [8, 1], strides = [1, 1]} : vector<8x15xf32> to vector<8x1xf32>
    %597 = vector.broadcast %596 : vector<8x1xf32> to vector<8x256xf32>
    %598 = arith.mulf %595, %597 : vector<8x256xf32>
    %599 = arith.addf %590, %598 : vector<8x256xf32>
    %c3_i32_111 = arith.constant 3 : i32
    %600 = tpu.dynamic_rotate %558 by %c3_i32_111 dim 1 : vector<8x256xf32>, i32 -> vector<8x256xf32>
    %cst_112 = arith.constant 0.000000e+00 : f32
    %601 = vector.shape_cast %253 : vector<1x256xi1> to vector<1x256xi1>
    %602 = vector.broadcast %601 : vector<1x256xi1> to vector<8x256xi1>
    %603 = vector.broadcast %cst_112 : f32 to vector<8x256xf32>
    %604 = arith.select %602, %600, %603 : vector<8x256xi1>, vector<8x256xf32>
    %605 = vector.extract_strided_slice %408 {offsets = [0, 4], sizes = [8, 1], strides = [1, 1]} : vector<8x15xf32> to vector<8x1xf32>
    %606 = vector.broadcast %605 : vector<8x1xf32> to vector<8x256xf32>
    %607 = arith.mulf %604, %606 : vector<8x256xf32>
    %608 = arith.addf %599, %607 : vector<8x256xf32>
    %c2_i32_113 = arith.constant 2 : i32
    %609 = tpu.dynamic_rotate %558 by %c2_i32_113 dim 1 : vector<8x256xf32>, i32 -> vector<8x256xf32>
    %cst_114 = arith.constant 0.000000e+00 : f32
    %610 = vector.shape_cast %90 : vector<1x256xi1> to vector<1x256xi1>
    %611 = vector.broadcast %610 : vector<1x256xi1> to vector<8x256xi1>
    %612 = vector.broadcast %cst_114 : f32 to vector<8x256xf32>
    %613 = arith.select %611, %609, %612 : vector<8x256xi1>, vector<8x256xf32>
    %614 = vector.extract_strided_slice %408 {offsets = [0, 5], sizes = [8, 1], strides = [1, 1]} : vector<8x15xf32> to vector<8x1xf32>
    %615 = vector.broadcast %614 : vector<8x1xf32> to vector<8x256xf32>
    %616 = arith.mulf %613, %615 : vector<8x256xf32>
    %617 = arith.addf %608, %616 : vector<8x256xf32>
    %c1_i32_115 = arith.constant 1 : i32
    %618 = tpu.dynamic_rotate %558 by %c1_i32_115 dim 1 : vector<8x256xf32>, i32 -> vector<8x256xf32>
    %cst_116 = arith.constant 0.000000e+00 : f32
    %619 = vector.shape_cast %61 : vector<1x256xi1> to vector<1x256xi1>
    %620 = vector.broadcast %619 : vector<1x256xi1> to vector<8x256xi1>
    %621 = vector.broadcast %cst_116 : f32 to vector<8x256xf32>
    %622 = arith.select %620, %618, %621 : vector<8x256xi1>, vector<8x256xf32>
    %623 = vector.extract_strided_slice %408 {offsets = [0, 6], sizes = [8, 1], strides = [1, 1]} : vector<8x15xf32> to vector<8x1xf32>
    %624 = vector.broadcast %623 : vector<8x1xf32> to vector<8x256xf32>
    %625 = arith.mulf %622, %624 : vector<8x256xf32>
    %626 = arith.addf %617, %625 : vector<8x256xf32>
    %627 = vector.extract_strided_slice %408 {offsets = [0, 7], sizes = [8, 1], strides = [1, 1]} : vector<8x15xf32> to vector<8x1xf32>
    %628 = vector.broadcast %627 : vector<8x1xf32> to vector<8x256xf32>
    %629 = arith.mulf %558, %628 : vector<8x256xf32>
    %630 = arith.addf %626, %629 : vector<8x256xf32>
    %c255_i32_117 = arith.constant 255 : i32
    %631 = tpu.dynamic_rotate %558 by %c255_i32_117 dim 1 : vector<8x256xf32>, i32 -> vector<8x256xf32>
    %cst_118 = arith.constant 0.000000e+00 : f32
    %632 = vector.shape_cast %75 : vector<1x256xi1> to vector<1x256xi1>
    %633 = vector.broadcast %632 : vector<1x256xi1> to vector<8x256xi1>
    %634 = vector.broadcast %cst_118 : f32 to vector<8x256xf32>
    %635 = arith.select %633, %631, %634 : vector<8x256xi1>, vector<8x256xf32>
    %636 = vector.extract_strided_slice %408 {offsets = [0, 8], sizes = [8, 1], strides = [1, 1]} : vector<8x15xf32> to vector<8x1xf32>
    %637 = vector.broadcast %636 : vector<8x1xf32> to vector<8x256xf32>
    %638 = arith.mulf %635, %637 : vector<8x256xf32>
    %639 = arith.addf %630, %638 : vector<8x256xf32>
    %c254_i32_119 = arith.constant 254 : i32
    %640 = tpu.dynamic_rotate %558 by %c254_i32_119 dim 1 : vector<8x256xf32>, i32 -> vector<8x256xf32>
    %cst_120 = arith.constant 0.000000e+00 : f32
    %641 = vector.shape_cast %110 : vector<1x256xi1> to vector<1x256xi1>
    %642 = vector.broadcast %641 : vector<1x256xi1> to vector<8x256xi1>
    %643 = vector.broadcast %cst_120 : f32 to vector<8x256xf32>
    %644 = arith.select %642, %640, %643 : vector<8x256xi1>, vector<8x256xf32>
    %645 = vector.extract_strided_slice %408 {offsets = [0, 9], sizes = [8, 1], strides = [1, 1]} : vector<8x15xf32> to vector<8x1xf32>
    %646 = vector.broadcast %645 : vector<8x1xf32> to vector<8x256xf32>
    %647 = arith.mulf %644, %646 : vector<8x256xf32>
    %648 = arith.addf %639, %647 : vector<8x256xf32>
    %c253_i32_121 = arith.constant 253 : i32
    %649 = tpu.dynamic_rotate %558 by %c253_i32_121 dim 1 : vector<8x256xf32>, i32 -> vector<8x256xf32>
    %cst_122 = arith.constant 0.000000e+00 : f32
    %650 = vector.shape_cast %303 : vector<1x256xi1> to vector<1x256xi1>
    %651 = vector.broadcast %650 : vector<1x256xi1> to vector<8x256xi1>
    %652 = vector.broadcast %cst_122 : f32 to vector<8x256xf32>
    %653 = arith.select %651, %649, %652 : vector<8x256xi1>, vector<8x256xf32>
    %654 = vector.extract_strided_slice %408 {offsets = [0, 10], sizes = [8, 1], strides = [1, 1]} : vector<8x15xf32> to vector<8x1xf32>
    %655 = vector.broadcast %654 : vector<8x1xf32> to vector<8x256xf32>
    %656 = arith.mulf %653, %655 : vector<8x256xf32>
    %657 = arith.addf %648, %656 : vector<8x256xf32>
    %c252_i32_123 = arith.constant 252 : i32
    %658 = tpu.dynamic_rotate %558 by %c252_i32_123 dim 1 : vector<8x256xf32>, i32 -> vector<8x256xf32>
    %cst_124 = arith.constant 0.000000e+00 : f32
    %659 = vector.shape_cast %338 : vector<1x256xi1> to vector<1x256xi1>
    %660 = vector.broadcast %659 : vector<1x256xi1> to vector<8x256xi1>
    %661 = vector.broadcast %cst_124 : f32 to vector<8x256xf32>
    %662 = arith.select %660, %658, %661 : vector<8x256xi1>, vector<8x256xf32>
    %663 = vector.extract_strided_slice %408 {offsets = [0, 11], sizes = [8, 1], strides = [1, 1]} : vector<8x15xf32> to vector<8x1xf32>
    %664 = vector.broadcast %663 : vector<8x1xf32> to vector<8x256xf32>
    %665 = arith.mulf %662, %664 : vector<8x256xf32>
    %666 = arith.addf %657, %665 : vector<8x256xf32>
    %c251_i32 = arith.constant 251 : i32
    %667 = tpu.dynamic_rotate %558 by %c251_i32 dim 1 : vector<8x256xf32>, i32 -> vector<8x256xf32>
    %c11_i32 = arith.constant 11 : i32
    %668 = vector.broadcast %c11_i32 : i32 to vector<1x256xi32>
    %669 = arith.cmpi slt, %17, %668 : vector<1x256xi32>
    %cst_125 = arith.constant 0.000000e+00 : f32
    %670 = vector.shape_cast %669 : vector<1x256xi1> to vector<1x256xi1>
    %671 = vector.broadcast %670 : vector<1x256xi1> to vector<8x256xi1>
    %672 = vector.broadcast %cst_125 : f32 to vector<8x256xf32>
    %673 = arith.select %671, %667, %672 : vector<8x256xi1>, vector<8x256xf32>
    %674 = vector.extract_strided_slice %408 {offsets = [0, 12], sizes = [8, 1], strides = [1, 1]} : vector<8x15xf32> to vector<8x1xf32>
    %675 = vector.broadcast %674 : vector<8x1xf32> to vector<8x256xf32>
    %676 = arith.mulf %673, %675 : vector<8x256xf32>
    %677 = arith.addf %666, %676 : vector<8x256xf32>
    %c250_i32 = arith.constant 250 : i32
    %678 = tpu.dynamic_rotate %558 by %c250_i32 dim 1 : vector<8x256xf32>, i32 -> vector<8x256xf32>
    %c10_i32 = arith.constant 10 : i32
    %679 = vector.broadcast %c10_i32 : i32 to vector<1x256xi32>
    %680 = arith.cmpi slt, %17, %679 : vector<1x256xi32>
    %cst_126 = arith.constant 0.000000e+00 : f32
    %681 = vector.shape_cast %680 : vector<1x256xi1> to vector<1x256xi1>
    %682 = vector.broadcast %681 : vector<1x256xi1> to vector<8x256xi1>
    %683 = vector.broadcast %cst_126 : f32 to vector<8x256xf32>
    %684 = arith.select %682, %678, %683 : vector<8x256xi1>, vector<8x256xf32>
    %685 = vector.extract_strided_slice %408 {offsets = [0, 13], sizes = [8, 1], strides = [1, 1]} : vector<8x15xf32> to vector<8x1xf32>
    %686 = vector.broadcast %685 : vector<8x1xf32> to vector<8x256xf32>
    %687 = arith.mulf %684, %686 : vector<8x256xf32>
    %688 = arith.addf %677, %687 : vector<8x256xf32>
    %c249_i32 = arith.constant 249 : i32
    %689 = tpu.dynamic_rotate %558 by %c249_i32 dim 1 : vector<8x256xf32>, i32 -> vector<8x256xf32>
    %c9_i32 = arith.constant 9 : i32
    %690 = vector.broadcast %c9_i32 : i32 to vector<1x256xi32>
    %691 = arith.cmpi slt, %17, %690 : vector<1x256xi32>
    %cst_127 = arith.constant 0.000000e+00 : f32
    %692 = vector.shape_cast %691 : vector<1x256xi1> to vector<1x256xi1>
    %693 = vector.broadcast %692 : vector<1x256xi1> to vector<8x256xi1>
    %694 = vector.broadcast %cst_127 : f32 to vector<8x256xf32>
    %695 = arith.select %693, %689, %694 : vector<8x256xi1>, vector<8x256xf32>
    %696 = vector.extract_strided_slice %408 {offsets = [0, 14], sizes = [8, 1], strides = [1, 1]} : vector<8x15xf32> to vector<8x1xf32>
    %697 = vector.broadcast %696 : vector<8x1xf32> to vector<8x256xf32>
    %698 = arith.mulf %695, %697 : vector<8x256xf32>
    %699 = arith.addf %688, %698 : vector<8x256xf32>
    %700 = vector.broadcast %409 : vector<8x1xf32> to vector<8x256xf32>
    %701 = arith.addf %699, %700 : vector<8x256xf32>
    %c136_i32 = arith.constant 136 : i32
    %702 = tpu.dynamic_rotate %701 by %c136_i32 dim 1 : vector<8x256xf32>, i32 -> vector<8x256xf32>
    %c128_i32 = arith.constant 128 : i32
    %703 = vector.broadcast %c128_i32 : i32 to vector<1x256xi32>
    %704 = arith.cmpi sge, %1, %703 : vector<1x256xi32>
    %c8_i32 = arith.constant 8 : i32
    %705 = vector.broadcast %c8_i32 : i32 to vector<1x256xi32>
    %706 = arith.cmpi sge, %17, %705 : vector<1x256xi32>
    %707 = arith.andi %704, %706 : vector<1x256xi1>
    %cst_128 = arith.constant 0.000000e+00 : f32
    %708 = vector.shape_cast %707 : vector<1x256xi1> to vector<1x256xi1>
    %709 = vector.broadcast %708 : vector<1x256xi1> to vector<8x256xi1>
    %710 = vector.broadcast %cst_128 : f32 to vector<8x256xf32>
    %711 = arith.select %709, %702, %710 : vector<8x256xi1>, vector<8x256xf32>
    %712 = vector.extract_strided_slice %410 {offsets = [0, 0], sizes = [8, 1], strides = [1, 1]} : vector<8x9xf32> to vector<8x1xf32>
    %713 = vector.broadcast %712 : vector<8x1xf32> to vector<8x256xf32>
    %714 = arith.mulf %711, %713 : vector<8x256xf32>
    %c128_i32_129 = arith.constant 128 : i32
    %715 = tpu.dynamic_rotate %701 by %c128_i32_129 dim 1 : vector<8x256xf32>, i32 -> vector<8x256xf32>
    %cst_130 = arith.constant 0.000000e+00 : f32
    %716 = vector.shape_cast %704 : vector<1x256xi1> to vector<1x256xi1>
    %717 = vector.broadcast %716 : vector<1x256xi1> to vector<8x256xi1>
    %718 = vector.broadcast %cst_130 : f32 to vector<8x256xf32>
    %719 = arith.select %717, %715, %718 : vector<8x256xi1>, vector<8x256xf32>
    %720 = vector.extract_strided_slice %410 {offsets = [0, 1], sizes = [8, 1], strides = [1, 1]} : vector<8x9xf32> to vector<8x1xf32>
    %721 = vector.broadcast %720 : vector<8x1xf32> to vector<8x256xf32>
    %722 = arith.mulf %719, %721 : vector<8x256xf32>
    %723 = arith.addf %714, %722 : vector<8x256xf32>
    %c120_i32 = arith.constant 120 : i32
    %724 = tpu.dynamic_rotate %701 by %c120_i32 dim 1 : vector<8x256xf32>, i32 -> vector<8x256xf32>
    %c8_i32_131 = arith.constant 8 : i32
    %725 = vector.broadcast %c8_i32_131 : i32 to vector<1x256xi32>
    %726 = arith.cmpi slt, %17, %725 : vector<1x256xi32>
    %727 = arith.andi %704, %726 : vector<1x256xi1>
    %cst_132 = arith.constant 0.000000e+00 : f32
    %728 = vector.shape_cast %727 : vector<1x256xi1> to vector<1x256xi1>
    %729 = vector.broadcast %728 : vector<1x256xi1> to vector<8x256xi1>
    %730 = vector.broadcast %cst_132 : f32 to vector<8x256xf32>
    %731 = arith.select %729, %724, %730 : vector<8x256xi1>, vector<8x256xf32>
    %732 = vector.extract_strided_slice %410 {offsets = [0, 2], sizes = [8, 1], strides = [1, 1]} : vector<8x9xf32> to vector<8x1xf32>
    %733 = vector.broadcast %732 : vector<8x1xf32> to vector<8x256xf32>
    %734 = arith.mulf %731, %733 : vector<8x256xf32>
    %735 = arith.addf %723, %734 : vector<8x256xf32>
    %c8_i32_133 = arith.constant 8 : i32
    %736 = tpu.dynamic_rotate %701 by %c8_i32_133 dim 1 : vector<8x256xf32>, i32 -> vector<8x256xf32>
    %cst_134 = arith.constant 0.000000e+00 : f32
    %737 = vector.shape_cast %706 : vector<1x256xi1> to vector<1x256xi1>
    %738 = vector.broadcast %737 : vector<1x256xi1> to vector<8x256xi1>
    %739 = vector.broadcast %cst_134 : f32 to vector<8x256xf32>
    %740 = arith.select %738, %736, %739 : vector<8x256xi1>, vector<8x256xf32>
    %741 = vector.extract_strided_slice %410 {offsets = [0, 3], sizes = [8, 1], strides = [1, 1]} : vector<8x9xf32> to vector<8x1xf32>
    %742 = vector.broadcast %741 : vector<8x1xf32> to vector<8x256xf32>
    %743 = arith.mulf %740, %742 : vector<8x256xf32>
    %744 = arith.addf %735, %743 : vector<8x256xf32>
    %745 = vector.extract_strided_slice %410 {offsets = [0, 4], sizes = [8, 1], strides = [1, 1]} : vector<8x9xf32> to vector<8x1xf32>
    %746 = vector.broadcast %745 : vector<8x1xf32> to vector<8x256xf32>
    %747 = arith.mulf %701, %746 : vector<8x256xf32>
    %748 = arith.addf %744, %747 : vector<8x256xf32>
    %c248_i32 = arith.constant 248 : i32
    %749 = tpu.dynamic_rotate %701 by %c248_i32 dim 1 : vector<8x256xf32>, i32 -> vector<8x256xf32>
    %cst_135 = arith.constant 0.000000e+00 : f32
    %750 = vector.shape_cast %726 : vector<1x256xi1> to vector<1x256xi1>
    %751 = vector.broadcast %750 : vector<1x256xi1> to vector<8x256xi1>
    %752 = vector.broadcast %cst_135 : f32 to vector<8x256xf32>
    %753 = arith.select %751, %749, %752 : vector<8x256xi1>, vector<8x256xf32>
    %754 = vector.extract_strided_slice %410 {offsets = [0, 5], sizes = [8, 1], strides = [1, 1]} : vector<8x9xf32> to vector<8x1xf32>
    %755 = vector.broadcast %754 : vector<8x1xf32> to vector<8x256xf32>
    %756 = arith.mulf %753, %755 : vector<8x256xf32>
    %757 = arith.addf %748, %756 : vector<8x256xf32>
    %c136_i32_136 = arith.constant 136 : i32
    %758 = tpu.dynamic_rotate %701 by %c136_i32_136 dim 1 : vector<8x256xf32>, i32 -> vector<8x256xf32>
    %c128_i32_137 = arith.constant 128 : i32
    %759 = vector.broadcast %c128_i32_137 : i32 to vector<1x256xi32>
    %760 = arith.cmpi slt, %1, %759 : vector<1x256xi32>
    %761 = arith.andi %760, %706 : vector<1x256xi1>
    %cst_138 = arith.constant 0.000000e+00 : f32
    %762 = vector.shape_cast %761 : vector<1x256xi1> to vector<1x256xi1>
    %763 = vector.broadcast %762 : vector<1x256xi1> to vector<8x256xi1>
    %764 = vector.broadcast %cst_138 : f32 to vector<8x256xf32>
    %765 = arith.select %763, %758, %764 : vector<8x256xi1>, vector<8x256xf32>
    %766 = vector.extract_strided_slice %410 {offsets = [0, 6], sizes = [8, 1], strides = [1, 1]} : vector<8x9xf32> to vector<8x1xf32>
    %767 = vector.broadcast %766 : vector<8x1xf32> to vector<8x256xf32>
    %768 = arith.mulf %765, %767 : vector<8x256xf32>
    %769 = arith.addf %757, %768 : vector<8x256xf32>
    %c128_i32_139 = arith.constant 128 : i32
    %770 = tpu.dynamic_rotate %701 by %c128_i32_139 dim 1 : vector<8x256xf32>, i32 -> vector<8x256xf32>
    %cst_140 = arith.constant 0.000000e+00 : f32
    %771 = vector.shape_cast %760 : vector<1x256xi1> to vector<1x256xi1>
    %772 = vector.broadcast %771 : vector<1x256xi1> to vector<8x256xi1>
    %773 = vector.broadcast %cst_140 : f32 to vector<8x256xf32>
    %774 = arith.select %772, %770, %773 : vector<8x256xi1>, vector<8x256xf32>
    %775 = vector.extract_strided_slice %410 {offsets = [0, 7], sizes = [8, 1], strides = [1, 1]} : vector<8x9xf32> to vector<8x1xf32>
    %776 = vector.broadcast %775 : vector<8x1xf32> to vector<8x256xf32>
    %777 = arith.mulf %774, %776 : vector<8x256xf32>
    %778 = arith.addf %769, %777 : vector<8x256xf32>
    %c120_i32_141 = arith.constant 120 : i32
    %779 = tpu.dynamic_rotate %701 by %c120_i32_141 dim 1 : vector<8x256xf32>, i32 -> vector<8x256xf32>
    %780 = arith.andi %760, %726 : vector<1x256xi1>
    %cst_142 = arith.constant 0.000000e+00 : f32
    %781 = vector.shape_cast %780 : vector<1x256xi1> to vector<1x256xi1>
    %782 = vector.broadcast %781 : vector<1x256xi1> to vector<8x256xi1>
    %783 = vector.broadcast %cst_142 : f32 to vector<8x256xf32>
    %784 = arith.select %782, %779, %783 : vector<8x256xi1>, vector<8x256xf32>
    %785 = vector.extract_strided_slice %410 {offsets = [0, 8], sizes = [8, 1], strides = [1, 1]} : vector<8x9xf32> to vector<8x1xf32>
    %786 = vector.broadcast %785 : vector<8x1xf32> to vector<8x256xf32>
    %787 = arith.mulf %784, %786 : vector<8x256xf32>
    %788 = arith.addf %778, %787 : vector<8x256xf32>
    %c0_143 = arith.constant 0 : index
    %c0_144 = arith.constant 0 : index
    %789 = vector.load %arg8[%c0_143, %c0_144] : memref<24x8xf32, #tpu.memory_space<vmem>>, vector<24x8xf32>
    %cst_145 = arith.constant dense<0.000000e+00> : vector<24x256xf32>
    %790 = tpu.matmul %789, %788, %cst_145 {dimension_numbers = #tpu.dot_dimension_numbers<[1], [0], [0], [1], [0, 0, 1, 1], [], []>} : vector<24x8xf32>, vector<8x256xf32>, vector<24x256xf32> -> vector<24x256xf32>
    %791 = arith.addf %403, %790 : vector<24x256xf32>
    %c0_146 = arith.constant 0 : index
    %c0_147 = arith.constant 0 : index
    %792 = vector.load %arg9[%c0_146, %c0_147] : memref<24x3xf32, #tpu.memory_space<vmem>>, vector<24x3xf32>
    %793 = vector.extract_strided_slice %792 {offsets = [0, 0], sizes = [24, 1], strides = [1, 1]} : vector<24x3xf32> to vector<24x1xf32>
    %794 = vector.broadcast %793 : vector<24x1xf32> to vector<24x256xf32>
    %795 = arith.mulf %791, %794 : vector<24x256xf32>
    %796 = vector.extract_strided_slice %792 {offsets = [0, 1], sizes = [24, 1], strides = [1, 1]} : vector<24x3xf32> to vector<24x1xf32>
    %797 = vector.broadcast %796 : vector<24x1xf32> to vector<24x256xf32>
    %798 = arith.addf %795, %797 : vector<24x256xf32>
    %cst_148 = arith.constant 0.000000e+00 : f32
    %799 = vector.broadcast %cst_148 : f32 to vector<24x256xf32>
    %800 = arith.cmpf ogt, %798, %799 : vector<24x256xf32>
    %801 = vector.extract_strided_slice %792 {offsets = [0, 2], sizes = [24, 1], strides = [1, 1]} : vector<24x3xf32> to vector<24x1xf32>
    %802 = vector.broadcast %801 : vector<24x1xf32> to vector<24x256xf32>
    %803 = arith.mulf %798, %802 : vector<24x256xf32>
    %804 = arith.select %800, %798, %803 : vector<24x256xi1>, vector<24x256xf32>
    %c0_149 = arith.constant 0 : index
    %c0_150 = arith.constant 0 : index
    %805 = vector.load %arg10[%c0_149, %c0_150] : memref<24x256xf32, #tpu.memory_space<vmem>>, vector<24x256xf32>
    tpu.vector_store %arg10[%c0_149, %c0_150], %804 {strides = array<i32>} : memref<24x256xf32, #tpu.memory_space<vmem>>, vector<24x256xf32>,
    return
  }
  func.func @transform_0(%arg0: i32) -> (i32, i32) {
    %c0_i32 = arith.constant 0 : i32
    %c0_i32_0 = arith.constant 0 : i32
    return %arg0, %c0_i32 : i32, i32
  }
  func.func @transform_1(%arg0: i32) -> (i32, i32) {
    %c0_i32 = arith.constant 0 : i32
    %c0_i32_0 = arith.constant 0 : i32
    %c0_i32_1 = arith.constant 0 : i32
    return %c0_i32, %c0_i32_0 : i32, i32
  }
  func.func @transform_2(%arg0: i32) -> (i32, i32) {
    %c0_i32 = arith.constant 0 : i32
    %c0_i32_0 = arith.constant 0 : i32
    %c0_i32_1 = arith.constant 0 : i32
    return %c0_i32, %c0_i32_0 : i32, i32
  }
  func.func @transform_3(%arg0: i32) -> (i32, i32) {
    %c0_i32 = arith.constant 0 : i32
    %c0_i32_0 = arith.constant 0 : i32
    %c0_i32_1 = arith.constant 0 : i32
    return %c0_i32, %c0_i32_0 : i32, i32
  }
  func.func @transform_4(%arg0: i32) -> (i32, i32) {
    %c0_i32 = arith.constant 0 : i32
    %c0_i32_0 = arith.constant 0 : i32
    %c0_i32_1 = arith.constant 0 : i32
    return %c0_i32, %c0_i32_0 : i32, i32
  }
  func.func @transform_5(%arg0: i32) -> (i32, i32) {
    %c0_i32 = arith.constant 0 : i32
    %c0_i32_0 = arith.constant 0 : i32
    %c0_i32_1 = arith.constant 0 : i32
    return %c0_i32, %c0_i32_0 : i32, i32
  }
  func.func @transform_6(%arg0: i32) -> (i32, i32) {
    %c0_i32 = arith.constant 0 : i32
    %c0_i32_0 = arith.constant 0 : i32
    %c0_i32_1 = arith.constant 0 : i32
    return %c0_i32, %c0_i32_0 : i32, i32
  }
  func.func @transform_7(%arg0: i32) -> (i32, i32) {
    %c0_i32 = arith.constant 0 : i32
    %c0_i32_0 = arith.constant 0 : i32
    %c0_i32_1 = arith.constant 0 : i32
    return %c0_i32, %c0_i32_0 : i32, i32
  }
  func.func @transform_8(%arg0: i32) -> (i32, i32) {
    %c0_i32 = arith.constant 0 : i32
    %c0_i32_0 = arith.constant 0 : i32
    %c0_i32_1 = arith.constant 0 : i32
    return %c0_i32, %c0_i32_0 : i32, i32
  }
  func.func @transform_9(%arg0: i32) -> (i32, i32) {
    %c0_i32 = arith.constant 0 : i32
    %c0_i32_0 = arith.constant 0 : i32
    return %arg0, %c0_i32 : i32, i32
  }
}

</mosaic_0001>

<llo_original>
// kernel: tpu_custom_call.1
$region0: #{tpu_custom_call.1}
  #allocation0 [shape = 'u32[]', space=smem, size = 0x4, offset = 0x4, fixed_abs, tag = 'smem constant byte address 0x4 - core index']
  #allocation1 [shape = 'u32[144,128]{1,0:T(1,128)}', space=vmem, size = 0x12000, scoped, tag = 'internal scratch']
  %s0 = inlined_call_operand.vmem [shape: f32[24,256], index: 0, kind: input, shape index: {}]
  %s1 = inlined_call_operand.vmem [shape: f32[8,24], index: 1, kind: input, shape index: {}]
  %s2 = inlined_call_operand.vmem [shape: f32[8,18], index: 2, kind: input, shape index: {}]
  %s3 = inlined_call_operand.vmem [shape: f32[8,26], index: 3, kind: input, shape index: {}]
  %s4 = inlined_call_operand.vmem [shape: f32[8,42], index: 4, kind: input, shape index: {}]
  %s5 = inlined_call_operand.vmem [shape: f32[24,8], index: 5, kind: input, shape index: {}]
  %s6 = inlined_call_operand.vmem [shape: f32[24,8], index: 6, kind: input, shape index: {}]
  %s7 = inlined_call_operand.vmem [shape: f32[24,8], index: 7, kind: input, shape index: {}]
  %s8 = inlined_call_operand.vmem [shape: f32[24,3], index: 8, kind: input, shape index: {}]
  %s9 = inlined_call_operand.hbm [shape: f32[24,256], index: 9, kind: output, shape index: {}]
  %s10 = sld [smem:[#allocation0]]
  $region46: #{tpu_custom_call.1} parent=0
    _
  %s12 = ssub.s32 1, %s10
  %s13 = scalar_select 0, %s12, %s10
  $region1: #{tpu_custom_call.1} parent=0
    #allocation2 [shape = 'u8[24576]{0}', space=vmem, size = 0x6000, scoped, tag = 'output window, operand 0, single buffered']
    #allocation3 [shape = 's32[1]{0}', space=sflag, size = 0x4, scoped, tag = 'scoped memory for tpu_custom_call.1']
    %14 = vsyncpa [#allocation3], 0
    // Predicated region
    $region2: #{tpu_custom_call.1} parent=1 // pred_check
      _
    $region3: #{tpu_custom_call.1} parent=1 // pred_check_branch
      %16 = sbr.rel (0) target = $region5
    $region4: #{tpu_custom_call.1} parent=1 // pred_region
      _
    $region5: #{tpu_custom_call.1} parent=1 // pred_fallthru
      _
    // Predicated region
    $region6: #{tpu_custom_call.1} parent=1 // pred_check
      _
    $region7: #{tpu_custom_call.1} parent=1 // pred_check_branch
      %18 = sbr.rel (0) target = $region9
    $region8: #{tpu_custom_call.1} parent=1 // pred_region
      _
    $region9: #{tpu_custom_call.1} parent=1 // pred_fallthru
      _
    // Predicated region
    $region10: #{tpu_custom_call.1} parent=1 // pred_check
      _
    $region11: #{tpu_custom_call.1} parent=1 // pred_check_branch
      %20 = sbr.rel (0) target = $region13
    $region12: #{tpu_custom_call.1} parent=1 // pred_region
      _
    $region13: #{tpu_custom_call.1} parent=1 // pred_fallthru
      _
    // Predicated region
    $region14: #{tpu_custom_call.1} parent=1 // pred_check
      _
    $region15: #{tpu_custom_call.1} parent=1 // pred_check_branch
      %22 = sbr.rel (0) target = $region17
    $region16: #{tpu_custom_call.1} parent=1 // pred_region
      _
    $region17: #{tpu_custom_call.1} parent=1 // pred_fallthru
      _
    // Predicated region
    $region18: #{tpu_custom_call.1} parent=1 // pred_check
      _
    $region19: #{tpu_custom_call.1} parent=1 // pred_check_branch
      %24 = sbr.rel (0) target = $region21
    $region20: #{tpu_custom_call.1} parent=1 // pred_region
      _
    $region21: #{tpu_custom_call.1} parent=1 // pred_fallthru
      _
    // Predicated region
    $region22: #{tpu_custom_call.1} parent=1 // pred_check
      _
    $region23: #{tpu_custom_call.1} parent=1 // pred_check_branch
      %26 = sbr.rel (0) target = $region25
    $region24: #{tpu_custom_call.1} parent=1 // pred_region
      _
    $region25: #{tpu_custom_call.1} parent=1 // pred_fallthru
      _
    // Predicated region
    $region26: #{tpu_custom_call.1} parent=1 // pred_check
      _
    $region27: #{tpu_custom_call.1} parent=1 // pred_check_branch
      %28 = sbr.rel (0) target = $region29
    $region28: #{tpu_custom_call.1} parent=1 // pred_region
      _
    $region29: #{tpu_custom_call.1} parent=1 // pred_fallthru
      _
    // Predicated region
    $region30: #{tpu_custom_call.1} parent=1 // pred_check
      _
    $region31: #{tpu_custom_call.1} parent=1 // pred_check_branch
      %30 = sbr.rel (0) target = $region33
    $region32: #{tpu_custom_call.1} parent=1 // pred_region
      _
    $region33: #{tpu_custom_call.1} parent=1 // pred_fallthru
      _
    // Predicated region
    $region34: #{tpu_custom_call.1} parent=1 // pred_check
      _
    $region35: #{tpu_custom_call.1} parent=1 // pred_check_branch
      %32 = sbr.rel (0) target = $region37
    $region36: #{tpu_custom_call.1} parent=1 // pred_region
      _
    $region37: #{tpu_custom_call.1} parent=1 // pred_fallthru
      _
    %v33 = vld [vmem:[%s0] sm:$0xff]
    %v34 = vld [vmem:[%s0 + $0x8] sm:$0xff]
    %v35 = vld [vmem:[%s0 + $0x10] sm:$0xff]
    %v36 = vld [vmem:[%s0 + $0x18] sm:$0xff]
    %v37 = vld [vmem:[%s0 + $0x20] sm:$0xff]
    %v38 = vld [vmem:[%s0 + $0x28] sm:$0xff]
    %v39 = vlaneseq
    %v40 = vand.u32 %v39, 127
    %v41 = vadd.s32 %v40, 128
    %vm42 = vcmp.lt.s32.totalorder %v40, 0
    %v43 = vsub.s32 0, %v40
    %v44 = vsel %vm42, %v43, %v40
    %v45 = vshrl.u32 %v44, 4
    %v46 = vand.u32 %v44, 15
    %v47 = vsub.s32 0, %v46
    %v48 = vsel %vm42, %v47, %v46
    %vm49 = vcmp.lt.s32.totalorder %v41, 0
    %v50 = vsub.s32 0, %v41
    %v51 = vsel %vm49, %v50, %v41
    %v52 = vshrl.u32 %v51, 4
    %v53 = vand.u32 %v51, 15
    %v54 = vsub.s32 0, %v53
    %v55 = vsel %vm49, %v54, %v53
    %vm56 = vcmp.ne.s32.totalorder %v48, 0
    %vm57 = vcmp.ne.s32.totalorder %v55, 0
    %vm58 = vcmp.lt.s32.totalorder %v48, 0
    %vm59 = vcmp.lt.s32.totalorder %v55, 0
    %vm60 = vmand %vm58, %vm56
    %vm61 = vmand %vm59, %vm57
    %v62 = vadd.s32 %v48, 16
    %v63 = vadd.s32 %v55, 16
    %v64 = vsel %vm60, %v62, %v48
    %v65 = vsel %vm61, %v63, %v55
    %v66 = vld [vmem:[%s1] sm:$0xff]
    %vm67 = vcmask 195584
    %v69 = vsel %vm67, %v66, 0
    %71 = vmatprep.subr.mxu0 %v34
    %72 = vmatpush1.msra.mxu0 %v33
    %73 = vmatprep.subr.mxu0 %v36
    %74 = vmatpush1.msra.mxu0 %v35
    %75 = vmatprep.subr.mxu0 %v38
    %76 = vmatpush1.msra.mxu0 %v37
    %77 = vmatprep.subr.mxu0 0.0
    %78 = vmatpush1.msra.mxu0 0.0
    %79 = vmatprep.subr.mxu0 0.0
    %80 = vmatpush1.msra.mxu0 0.0
    %81 = vmatprep.subr.mxu0 0.0
    %82 = vmatpush1.msra.mxu0 0.0
    %83 = vmatprep.subr.mxu0 0.0
    %84 = vmatpush1.msra.mxu0 0.0
    %85 = vmatprep.subr.mxu0 0.0
    %86 = vmatpush1.msra.mxu0 0.0
    %87 = vmatprep.subr.mxu0 0.0
    %88 = vmatpush1.msra.mxu0 0.0
    %89 = vmatprep.subr.mxu0 0.0
    %90 = vmatpush1.msra.mxu0 0.0
    %91 = vmatprep.subr.mxu0 0.0
    %92 = vmatpush1.msra.mxu0 0.0
    %93 = vmatprep.subr.mxu0 0.0
    %94 = vmatpush1.msra.mxu0 0.0
    %95 = vmatprep.subr.mxu0 0.0
    %96 = vmatpush1.msra.mxu0 0.0
    %97 = vmatprep.subr.mxu0 0.0
    %98 = vmatpush1.msra.mxu0 0.0
    %99 = vmatprep.subr.mxu0 0.0
    %100 = vmatpush1.msra.mxu0 0.0
    %101 = vmatprep.subr.mxu0 0.0
    %102 = vmatpush1.msra.mxu0 0.0
    %103 = vmatprep.subr.mxu0 0.0
    %104 = vmatpush1.msra.mxu0 0.0
    %105 = vmatprep.subr.mxu0 0.0
    %106 = vmatpush1.msra.mxu0 0.0
    %107 = vmatprep.subr.mxu0 0.0
    %108 = vmatpush1.msra.mxu0 0.0
    %109 = vmatprep.subr.mxu0 0.0
    %110 = vmatpush1.msra.mxu0 0.0
    %111 = vmatprep.subr.mxu0 0.0
    %112 = vmatpush1.msra.mxu0 0.0
    %113 = vmatprep.subr.mxu0 0.0
    %114 = vmatpush1.msra.mxu0 0.0
    %115 = vmatprep.subr.mxu0 0.0
    %116 = vmatpush1.msra.mxu0 0.0
    %117 = vmatprep.subr.mxu0 0.0
    %118 = vmatpush1.msra.mxu0 0.0
    %119 = vmatprep.subr.mxu0 0.0
    %120 = vmatpush1.msra.mxu0 0.0
    %121 = vmatprep.subr.mxu0 0.0
    %122 = vmatpush1.msra.mxu0 0.0
    %123 = vmatprep.subr.mxu0 0.0
    %124 = vmatpush1.msra.mxu0 0.0
    %125 = vmatprep.subr.mxu0 0.0
    %126 = vmatpush1.msra.mxu0 0.0
    %127 = vmatprep.subr.mxu0 0.0
    %128 = vmatpush1.msra.mxu0 0.0
    %129 = vmatprep.subr.mxu0 0.0
    %130 = vmatpush1.msra.mxu0 0.0
    %131 = vmatprep.subr.mxu0 0.0
    %132 = vmatpush1.msra.mxu0 0.0
    %133 = vmatprep.subr.mxu0 0.0
    %134 = vmatpush1.msra.mxu0 0.0
    %135 = vmatprep.mubr.f32.mxu0 0.0
    %136 = vmatmul.mubr.f32.gmra.mrb[0].mxu0 %v69
    %v137 = vpop.f32.mrb[0].mxu0
    %v138 = vadd.f32 0.0, %v137
    %v139 = vpop.f32.mrb[0].mxu0
    %v140 = vadd.f32 0.0, %v139
    %141 = vdwg.mxu0
    %v142 = vld [vmem:[%s2] sm:$0xff]
    %143 = vrot.lane.b32.xlu0 %v138, 16
    %v144 = vpop.permute.xlu0 %143
    %145 = vrot.lane.b32.xlu0 %v140, 16
    %v146 = vpop.permute.xlu0 %145
    %vm147 = vcmp.lt.s32.totalorder %v40, 16
    %v148 = vsel %vm147, %v144, %v146
    %v149 = vsel %vm147, %v146, %v144
    %vm150 = vcmp.ge.s32.totalorder %v40, 16
    %vm151 = vcmp.ge.s32.totalorder %v41, 16
    %v152 = vsel %vm150, 1, 0
    %v153 = vsel %vm151, 1, 0
    %vm154 = vcmp.eq.s32.totalorder %v152, 1
    %vm155 = vcmp.eq.s32.totalorder %v153, 1
    %v156 = vsel %vm154, %v149, 0.0
    %v157 = vsel %vm155, %v148, 0.0
    %159 = vset.pattern.permute.xlu0 0
    %160 = vperm.xlu0 %159, %v142
    %v161 = vpop.permute.xlu0 %160
    %v163 = vmul.f32 %v156, %v161
    %v164 = vmul.f32 %v157, %v161
    %165 = vset.pattern.permute.xlu0 1
    %166 = vperm.xlu0 %165, %v142
    %v167 = vpop.permute.xlu0 %166
    %v169 = vmul.f32 %v138, %v167
    %v170 = vmul.f32 %v140, %v167
    %v171 = vadd.f32 %v163, %v169
    %v172 = vadd.f32 %v164, %v170
    %173 = vrot.lane.b32.xlu0 %v138, 112
    %v174 = vpop.permute.xlu0 %173
    %175 = vrot.lane.b32.xlu0 %v140, 112
    %v176 = vpop.permute.xlu0 %175
    %vm177 = vcmp.lt.s32.totalorder %v40, 112
    %v178 = vsel %vm177, %v174, %v176
    %v179 = vsel %vm177, %v176, %v174
    %vm180 = vcmp.lt.s32.totalorder %v40, 240
    %vm181 = vcmp.lt.s32.totalorder %v41, 240
    %v182 = vsel %vm180, 1, 0
    %v183 = vsel %vm181, 1, 0
    %vm184 = vcmp.eq.s32.totalorder %v182, 1
    %vm185 = vcmp.eq.s32.totalorder %v183, 1
    %v186 = vsel %vm184, %v178, 0.0
    %v187 = vsel %vm185, %v179, 0.0
    %188 = vset.pattern.permute.xlu0 2
    %189 = vperm.xlu0 %188, %v142
    %v190 = vpop.permute.xlu0 %189
    %v192 = vmul.f32 %v186, %v190
    %v193 = vmul.f32 %v187, %v190
    %v194 = vadd.f32 %v171, %v192
    %v195 = vadd.f32 %v172, %v193
    %196 = vset.pattern.permute.xlu0 3
    %197 = vperm.xlu0 %196, %v142
    %v198 = vpop.permute.xlu0 %197
    %v200 = vadd.f32 %v194, %v198
    %v201 = vadd.f32 %v195, %v198
    %vm202 = vcmp.gt.f32.partialorder %v200, 0.0
    %vm203 = vcmp.gt.f32.partialorder %v201, 0.0
    %204 = vset.pattern.permute.xlu0 4
    %205 = vperm.xlu0 %204, %v142
    %v206 = vpop.permute.xlu0 %205
    %v208 = vmul.f32 %v200, %v206
    %v209 = vmul.f32 %v201, %v206
    %v210 = vsel %vm202, %v200, %v208
    %v211 = vsel %vm203, %v201, %v209
    %212 = vrot.lane.b32.xlu0 %v210, 1
    %v213 = vpop.permute.xlu0 %212
    %214 = vrot.lane.b32.xlu0 %v211, 1
    %v215 = vpop.permute.xlu0 %214
    %vm216 = vcmp.lt.s32.totalorder %v40, 1
    %v217 = vsel %vm216, %v213, %v215
    %v218 = vsel %vm216, %v215, %v213
    %vm219 = vcmp.ge.s32.totalorder %v64, 1
    %vm220 = vcmp.ge.s32.totalorder %v65, 1
    %v221 = vsel %vm219, 1, 0
    %v222 = vsel %vm220, 1, 0
    %vm223 = vcmp.eq.s32.totalorder %v221, 1
    %vm224 = vcmp.eq.s32.totalorder %v222, 1
    %v225 = vsel %vm223, %v218, 0.0
    %v226 = vsel %vm224, %v217, 0.0
    %227 = vset.pattern.permute.xlu0 5
    %228 = vperm.xlu0 %227, %v142
    %v229 = vpop.permute.xlu0 %228
    %v231 = vmul.f32 %v225, %v229
    %v232 = vmul.f32 %v226, %v229
    %233 = vset.pattern.permute.xlu0 6
    %234 = vperm.xlu0 %233, %v142
    %v235 = vpop.permute.xlu0 %234
    %v237 = vmul.f32 %v210, %v235
    %v238 = vmul.f32 %v211, %v235
    %v239 = vadd.f32 %v231, %v237
    %v240 = vadd.f32 %v232, %v238
    %241 = vrot.lane.b32.xlu0 %v210, 127
    %v242 = vpop.permute.xlu0 %241
    %243 = vrot.lane.b32.xlu0 %v211, 127
    %v244 = vpop.permute.xlu0 %243
    %vm245 = vcmp.lt.s32.totalorder %v40, 127
    %v246 = vsel %vm245, %v242, %v244
    %v247 = vsel %vm245, %v244, %v242
    %vm248 = vcmp.lt.s32.totalorder %v64, 15
    %vm249 = vcmp.lt.s32.totalorder %v65, 15
    %v250 = vsel %vm248, 1, 0
    %v251 = vsel %vm249, 1, 0
    %vm252 = vcmp.eq.s32.totalorder %v250, 1
    %vm253 = vcmp.eq.s32.totalorder %v251, 1
    %v254 = vsel %vm252, %v246, 0.0
    %v255 = vsel %vm253, %v247, 0.0
    %256 = vset.pattern.permute.xlu0 7
    %257 = vperm.xlu0 %256, %v142
    %v258 = vpop.permute.xlu0 %257
    %v260 = vmul.f32 %v254, %v258
    %v261 = vmul.f32 %v255, %v258
    %v262 = vadd.f32 %v239, %v260
    %v263 = vadd.f32 %v240, %v261
    %264 = vset.pattern.permute.xlu0 8
    %265 = vperm.xlu0 %264, %v142
    %v266 = vpop.permute.xlu0 %265
    %v268 = vadd.f32 %v262, %v266
    %v269 = vadd.f32 %v263, %v266
    %270 = vrot.lane.b32.xlu0 %v268, 34
    %v271 = vpop.permute.xlu0 %270
    %272 = vrot.lane.b32.xlu0 %v269, 34
    %v273 = vpop.permute.xlu0 %272
    %vm274 = vcmp.lt.s32.totalorder %v40, 34
    %v275 = vsel %vm274, %v271, %v273
    %v276 = vsel %vm274, %v273, %v271
    %vm277 = vcmp.ge.s32.totalorder %v40, 32
    %vm278 = vcmp.ge.s32.totalorder %v41, 32
    %vm279 = vcmp.ge.s32.totalorder %v64, 2
    %vm280 = vcmp.ge.s32.totalorder %v65, 2
    %vm281 = vmand %vm277, %vm279
    %vm282 = vmand %vm278, %vm280
    %v283 = vsel %vm281, 1, 0
    %v284 = vsel %vm282, 1, 0
    %vm285 = vcmp.eq.s32.totalorder %v283, 1
    %vm286 = vcmp.eq.s32.totalorder %v284, 1
    %v287 = vsel %vm285, %v276, 0.0
    %v288 = vsel %vm286, %v275, 0.0
    %289 = vset.pattern.permute.xlu0 9
    %290 = vperm.xlu0 %289, %v142
    %v291 = vpop.permute.xlu0 %290
    %v293 = vmul.f32 %v287, %v291
    %v294 = vmul.f32 %v288, %v291
    %295 = vrot.lane.b32.xlu0 %v268, 32
    %v296 = vpop.permute.xlu0 %295
    %297 = vrot.lane.b32.xlu0 %v269, 32
    %v298 = vpop.permute.xlu0 %297
    %vm299 = vcmp.lt.s32.totalorder %v40, 32
    %v300 = vsel %vm299, %v296, %v298
    %v301 = vsel %vm299, %v298, %v296
    %v302 = vsel %vm277, 1, 0
    %v303 = vsel %vm278, 1, 0
    %vm304 = vcmp.eq.s32.totalorder %v302, 1
    %vm305 = vcmp.eq.s32.totalorder %v303, 1
    %v306 = vsel %vm304, %v301, 0.0
    %v307 = vsel %vm305, %v300, 0.0
    %308 = vset.pattern.permute.xlu0 10
    %309 = vperm.xlu0 %308, %v142
    %v310 = vpop.permute.xlu0 %309
    %v312 = vmul.f32 %v306, %v310
    %v313 = vmul.f32 %v307, %v310
    %v314 = vadd.f32 %v293, %v312
    %v315 = vadd.f32 %v294, %v313
    %316 = vrot.lane.b32.xlu0 %v268, 30
    %v317 = vpop.permute.xlu0 %316
    %318 = vrot.lane.b32.xlu0 %v269, 30
    %v319 = vpop.permute.xlu0 %318
    %vm320 = vcmp.lt.s32.totalorder %v40, 30
    %v321 = vsel %vm320, %v317, %v319
    %v322 = vsel %vm320, %v319, %v317
    %vm323 = vcmp.lt.s32.totalorder %v64, 14
    %vm324 = vcmp.lt.s32.totalorder %v65, 14
    %vm325 = vmand %vm277, %vm323
    %vm326 = vmand %vm278, %vm324
    %v327 = vsel %vm325, 1, 0
    %v328 = vsel %vm326, 1, 0
    %vm329 = vcmp.eq.s32.totalorder %v327, 1
    %vm330 = vcmp.eq.s32.totalorder %v328, 1
    %v331 = vsel %vm329, %v322, 0.0
    %v332 = vsel %vm330, %v321, 0.0
    %333 = vset.pattern.permute.xlu0 11
    %334 = vperm.xlu0 %333, %v142
    %v335 = vpop.permute.xlu0 %334
    %v337 = vmul.f32 %v331, %v335
    %v338 = vmul.f32 %v332, %v335
    %v339 = vadd.f32 %v314, %v337
    %v340 = vadd.f32 %v315, %v338
    %341 = vrot.lane.b32.xlu0 %v268, 2
    %v342 = vpop.permute.xlu0 %341
    %343 = vrot.lane.b32.xlu0 %v269, 2
    %v344 = vpop.permute.xlu0 %343
    %vm345 = vcmp.lt.s32.totalorder %v40, 2
    %v346 = vsel %vm345, %v342, %v344
    %v347 = vsel %vm345, %v344, %v342
    %v348 = vsel %vm279, 1, 0
    %v349 = vsel %vm280, 1, 0
    %vm350 = vcmp.eq.s32.totalorder %v348, 1
    %vm351 = vcmp.eq.s32.totalorder %v349, 1
    %v352 = vsel %vm350, %v347, 0.0
    %v353 = vsel %vm351, %v346, 0.0
    %354 = vset.pattern.permute.xlu0 12
    %355 = vperm.xlu0 %354, %v142
    %v356 = vpop.permute.xlu0 %355
    %v358 = vmul.f32 %v352, %v356
    %v359 = vmul.f32 %v353, %v356
    %v360 = vadd.f32 %v339, %v358
    %v361 = vadd.f32 %v340, %v359
    %362 = vset.pattern.permute.xlu0 13
    %363 = vperm.xlu0 %362, %v142
    %v364 = vpop.permute.xlu0 %363
    %v366 = vmul.f32 %v268, %v364
    %v367 = vmul.f32 %v269, %v364
    %v368 = vadd.f32 %v360, %v366
    %v369 = vadd.f32 %v361, %v367
    %370 = vrot.lane.b32.xlu0 %v268, 126
    %v371 = vpop.permute.xlu0 %370
    %372 = vrot.lane.b32.xlu0 %v269, 126
    %v373 = vpop.permute.xlu0 %372
    %vm374 = vcmp.lt.s32.totalorder %v40, 126
    %v375 = vsel %vm374, %v371, %v373
    %v376 = vsel %vm374, %v373, %v371
    %v377 = vsel %vm323, 1, 0
    %v378 = vsel %vm324, 1, 0
    %vm379 = vcmp.eq.s32.totalorder %v377, 1
    %vm380 = vcmp.eq.s32.totalorder %v378, 1
    %v381 = vsel %vm379, %v375, 0.0
    %v382 = vsel %vm380, %v376, 0.0
    %383 = vset.pattern.permute.xlu0 14
    %384 = vperm.xlu0 %383, %v142
    %v385 = vpop.permute.xlu0 %384
    %v387 = vmul.f32 %v381, %v385
    %v388 = vmul.f32 %v382, %v385
    %v389 = vadd.f32 %v368, %v387
    %v390 = vadd.f32 %v369, %v388
    %391 = vrot.lane.b32.xlu0 %v268, 98
    %v392 = vpop.permute.xlu0 %391
    %393 = vrot.lane.b32.xlu0 %v269, 98
    %v394 = vpop.permute.xlu0 %393
    %vm395 = vcmp.lt.s32.totalorder %v40, 98
    %v396 = vsel %vm395, %v392, %v394
    %v397 = vsel %vm395, %v394, %v392
    %vm398 = vcmp.lt.s32.totalorder %v40, 224
    %vm399 = vcmp.lt.s32.totalorder %v41, 224
    %vm400 = vmand %vm398, %vm279
    %vm401 = vmand %vm399, %vm280
    %v402 = vsel %vm400, 1, 0
    %v403 = vsel %vm401, 1, 0
    %vm404 = vcmp.eq.s32.totalorder %v402, 1
    %vm405 = vcmp.eq.s32.totalorder %v403, 1
    %v406 = vsel %vm404, %v396, 0.0
    %v407 = vsel %vm405, %v397, 0.0
    %408 = vset.pattern.permute.xlu0 15
    %409 = vperm.xlu0 %408, %v142
    %v410 = vpop.permute.xlu0 %409
    %v412 = vmul.f32 %v406, %v410
    %v413 = vmul.f32 %v407, %v410
    %v414 = vadd.f32 %v389, %v412
    %v415 = vadd.f32 %v390, %v413
    %416 = vrot.lane.b32.xlu0 %v268, 96
    %v417 = vpop.permute.xlu0 %416
    %418 = vrot.lane.b32.xlu0 %v269, 96
    %v419 = vpop.permute.xlu0 %418
    %vm420 = vcmp.lt.s32.totalorder %v40, 96
    %v421 = vsel %vm420, %v417, %v419
    %v422 = vsel %vm420, %v419, %v417
    %v423 = vsel %vm398, 1, 0
    %v424 = vsel %vm399, 1, 0
    %vm425 = vcmp.eq.s32.totalorder %v423, 1
    %vm426 = vcmp.eq.s32.totalorder %v424, 1
    %v427 = vsel %vm425, %v421, 0.0
    %v428 = vsel %vm426, %v422, 0.0
    %429 = vset.pattern.permute.xlu0 16
    %430 = vperm.xlu0 %429, %v142
    %v431 = vpop.permute.xlu0 %430
    %v433 = vmul.f32 %v427, %v431
    %v434 = vmul.f32 %v428, %v431
    %v435 = vadd.f32 %v414, %v433
    %v436 = vadd.f32 %v415, %v434
    %437 = vrot.lane.b32.xlu0 %v268, 94
    %v438 = vpop.permute.xlu0 %437
    %439 = vrot.lane.b32.xlu0 %v269, 94
    %v440 = vpop.permute.xlu0 %439
    %vm441 = vcmp.lt.s32.totalorder %v40, 94
    %v442 = vsel %vm441, %v438, %v440
    %v443 = vsel %vm441, %v440, %v438
    %vm444 = vmand %vm398, %vm323
    %vm445 = vmand %vm399, %vm324
    %v446 = vsel %vm444, 1, 0
    %v447 = vsel %vm445, 1, 0
    %vm448 = vcmp.eq.s32.totalorder %v446, 1
    %vm449 = vcmp.eq.s32.totalorder %v447, 1
    %v450 = vsel %vm448, %v442, 0.0
    %v451 = vsel %vm449, %v443, 0.0
    %452 = vset.pattern.permute.xlu0 17
    %453 = vperm.xlu0 %452, %v142
    %v454 = vpop.permute.xlu0 %453
    %v456 = vmul.f32 %v450, %v454
    %v457 = vmul.f32 %v451, %v454
    %v458 = vadd.f32 %v435, %v456
    %v459 = vadd.f32 %v436, %v457
    %v460 = vld [vmem:[%s5] sm:$0xff]
    %v461 = vld [vmem:[%s5 + $0x8] sm:$0xff]
    %v462 = vld [vmem:[%s5 + $0x10] sm:$0xff]
    %vm463 = vcmask 64512
    %v465 = vsel %vm463, %v460, 0
    %v468 = vsel %vm463, %v461, 0
    %v471 = vsel %vm463, %v462, 0
    %473 = vmatprep.subr.mxu0 %v459
    %474 = vmatpush1.msra.mxu0 %v458
    %475 = vmatprep.subr.mxu0 0.0
    %476 = vmatpush1.msra.mxu0 0.0
    %477 = vmatprep.subr.mxu0 0.0
    %478 = vmatpush1.msra.mxu0 0.0
    %479 = vmatprep.subr.mxu0 0.0
    %480 = vmatpush1.msra.mxu0 0.0
    %481 = vmatprep.subr.mxu0 0.0
    %482 = vmatpush1.msra.mxu0 0.0
    %483 = vmatprep.subr.mxu0 0.0
    %484 = vmatpush1.msra.mxu0 0.0
    %485 = vmatprep.subr.mxu0 0.0
    %486 = vmatpush1.msra.mxu0 0.0
    %487 = vmatprep.subr.mxu0 0.0
    %488 = vmatpush1.msra.mxu0 0.0
    %489 = vmatprep.subr.mxu0 0.0
    %490 = vmatpush1.msra.mxu0 0.0
    %491 = vmatprep.subr.mxu0 0.0
    %492 = vmatpush1.msra.mxu0 0.0
    %493 = vmatprep.subr.mxu0 0.0
    %494 = vmatpush1.msra.mxu0 0.0
    %495 = vmatprep.subr.mxu0 0.0
    %496 = vmatpush1.msra.mxu0 0.0
    %497 = vmatprep.subr.mxu0 0.0
    %498 = vmatpush1.msra.mxu0 0.0
    %499 = vmatprep.subr.mxu0 0.0
    %500 = vmatpush1.msra.mxu0 0.0
    %501 = vmatprep.subr.mxu0 0.0
    %502 = vmatpush1.msra.mxu0 0.0
    %503 = vmatprep.subr.mxu0 0.0
    %504 = vmatpush1.msra.mxu0 0.0
    %505 = vmatprep.subr.mxu0 0.0
    %506 = vmatpush1.msra.mxu0 0.0
    %507 = vmatprep.subr.mxu0 0.0
    %508 = vmatpush1.msra.mxu0 0.0
    %509 = vmatprep.subr.mxu0 0.0
    %510 = vmatpush1.msra.mxu0 0.0
    %511 = vmatprep.subr.mxu0 0.0
    %512 = vmatpush1.msra.mxu0 0.0
    %513 = vmatprep.subr.mxu0 0.0
    %514 = vmatpush1.msra.mxu0 0.0
    %515 = vmatprep.subr.mxu0 0.0
    %516 = vmatpush1.msra.mxu0 0.0
    %517 = vmatprep.subr.mxu0 0.0
    %518 = vmatpush1.msra.mxu0 0.0
    %519 = vmatprep.subr.mxu0 0.0
    %520 = vmatpush1.msra.mxu0 0.0
    %521 = vmatprep.subr.mxu0 0.0
    %522 = vmatpush1.msra.mxu0 0.0
    %523 = vmatprep.subr.mxu0 0.0
    %524 = vmatpush1.msra.mxu0 0.0
    %525 = vmatprep.subr.mxu0 0.0
    %526 = vmatpush1.msra.mxu0 0.0
    %527 = vmatprep.subr.mxu0 0.0
    %528 = vmatpush1.msra.mxu0 0.0
    %529 = vmatprep.subr.mxu0 0.0
    %530 = vmatpush1.msra.mxu0 0.0
    %531 = vmatprep.subr.mxu0 0.0
    %532 = vmatpush1.msra.mxu0 0.0
    %533 = vmatprep.subr.mxu0 0.0
    %534 = vmatpush1.msra.mxu0 0.0
    %535 = vmatprep.subr.mxu0 0.0
    %536 = vmatpush1.msra.mxu0 0.0
    %537 = vmatprep.mubr.f32.mxu0 0.0
    %538 = vmatmul.mubr.f32.gmra.mrb[0].mxu0 %v465
    %v539 = vpop.f32.mrb[0].mxu0
    %v540 = vadd.f32 0.0, %v539
    %v541 = vpop.f32.mrb[0].mxu0
    %v542 = vadd.f32 0.0, %v541
    %543 = vmatprep.mubr.f32.mxu0 0.0
    %544 = vmatmul.mubr.f32.gmra.mrb[0].mxu0 %v468
    %v545 = vpop.f32.mrb[0].mxu0
    %v546 = vadd.f32 0.0, %v545
    %v547 = vpop.f32.mrb[0].mxu0
    %v548 = vadd.f32 0.0, %v547
    %549 = vmatprep.mubr.f32.mxu0 0.0
    %550 = vmatmul.mubr.f32.gmra.mrb[0].mxu0 %v471
    %v551 = vpop.f32.mrb[0].mxu0
    %v552 = vadd.f32 0.0, %v551
    %v553 = vpop.f32.mrb[0].mxu0
    %v554 = vadd.f32 0.0, %v553
    %555 = vdwg.mxu0
    %v556 = vadd.f32 %v33, %v540
    %v557 = vadd.f32 %v34, %v542
    %v558 = vadd.f32 %v35, %v546
    %v559 = vadd.f32 %v36, %v548
    %v560 = vadd.f32 %v37, %v552
    %v561 = vadd.f32 %v38, %v554
    %v562 = vld [vmem:[%s3] sm:$0xff]
    %563 = vrot.lane.b32.xlu0 %v138, 48
    %v564 = vpop.permute.xlu0 %563
    %565 = vrot.lane.b32.xlu0 %v140, 48
    %v566 = vpop.permute.xlu0 %565
    %vm567 = vcmp.lt.s32.totalorder %v40, 48
    %v568 = vsel %vm567, %v564, %v566
    %v569 = vsel %vm567, %v566, %v564
    %vm570 = vcmp.ge.s32.totalorder %v40, 48
    %vm571 = vcmp.ge.s32.totalorder %v41, 48
    %v572 = vsel %vm570, 1, 0
    %v573 = vsel %vm571, 1, 0
    %vm574 = vcmp.eq.s32.totalorder %v572, 1
    %vm575 = vcmp.eq.s32.totalorder %v573, 1
    %v576 = vsel %vm574, %v569, 0.0
    %v577 = vsel %vm575, %v568, 0.0
    %579 = vset.pattern.permute.xlu0 0
    %580 = vperm.xlu0 %579, %v562
    %v581 = vpop.permute.xlu0 %580
    %v583 = vmul.f32 %v576, %v581
    %v584 = vmul.f32 %v577, %v581
    %585 = vrot.lane.b32.xlu0 %v138, 32
    %v586 = vpop.permute.xlu0 %585
    %587 = vrot.lane.b32.xlu0 %v140, 32
    %v588 = vpop.permute.xlu0 %587
    %v589 = vsel %vm299, %v586, %v588
    %v590 = vsel %vm299, %v588, %v586
    %v591 = vsel %vm304, %v590, 0.0
    %v592 = vsel %vm305, %v589, 0.0
    %593 = vset.pattern.permute.xlu0 1
    %594 = vperm.xlu0 %593, %v562
    %v595 = vpop.permute.xlu0 %594
    %v597 = vmul.f32 %v591, %v595
    %v598 = vmul.f32 %v592, %v595
    %v599 = vadd.f32 %v583, %v597
    %v600 = vadd.f32 %v584, %v598
    %601 = vset.pattern.permute.xlu0 2
    %602 = vperm.xlu0 %601, %v562
    %v603 = vpop.permute.xlu0 %602
    %v605 = vmul.f32 %v156, %v603
    %v606 = vmul.f32 %v157, %v603
    %v607 = vadd.f32 %v599, %v605
    %v608 = vadd.f32 %v600, %v606
    %609 = vset.pattern.permute.xlu0 3
    %610 = vperm.xlu0 %609, %v562
    %v611 = vpop.permute.xlu0 %610
    %v613 = vmul.f32 %v138, %v611
    %v614 = vmul.f32 %v140, %v611
    %v615 = vadd.f32 %v607, %v613
    %v616 = vadd.f32 %v608, %v614
    %617 = vset.pattern.permute.xlu0 4
    %618 = vperm.xlu0 %617, %v562
    %v619 = vpop.permute.xlu0 %618
    %v621 = vmul.f32 %v186, %v619
    %v622 = vmul.f32 %v187, %v619
    %v623 = vadd.f32 %v615, %v621
    %v624 = vadd.f32 %v616, %v622
    %625 = vrot.lane.b32.xlu0 %v138, 96
    %v626 = vpop.permute.xlu0 %625
    %627 = vrot.lane.b32.xlu0 %v140, 96
    %v628 = vpop.permute.xlu0 %627
    %v629 = vsel %vm420, %v626, %v628
    %v630 = vsel %vm420, %v628, %v626
    %v631 = vsel %vm425, %v629, 0.0
    %v632 = vsel %vm426, %v630, 0.0
    %633 = vset.pattern.permute.xlu0 5
    %634 = vperm.xlu0 %633, %v562
    %v635 = vpop.permute.xlu0 %634
    %v637 = vmul.f32 %v631, %v635
    %v638 = vmul.f32 %v632, %v635
    %v639 = vadd.f32 %v623, %v637
    %v640 = vadd.f32 %v624, %v638
    %641 = vrot.lane.b32.xlu0 %v138, 80
    %v642 = vpop.permute.xlu0 %641
    %643 = vrot.lane.b32.xlu0 %v140, 80
    %v644 = vpop.permute.xlu0 %643
    %vm645 = vcmp.lt.s32.totalorder %v40, 80
    %v646 = vsel %vm645, %v642, %v644
    %v647 = vsel %vm645, %v644, %v642
    %vm648 = vcmp.lt.s32.totalorder %v40, 208
    %vm649 = vcmp.lt.s32.totalorder %v41, 208
    %v650 = vsel %vm648, 1, 0
    %v651 = vsel %vm649, 1, 0
    %vm652 = vcmp.eq.s32.totalorder %v650, 1
    %vm653 = vcmp.eq.s32.totalorder %v651, 1
    %v654 = vsel %vm652, %v646, 0.0
    %v655 = vsel %vm653, %v647, 0.0
    %656 = vset.pattern.permute.xlu0 6
    %657 = vperm.xlu0 %656, %v562
    %v658 = vpop.permute.xlu0 %657
    %v660 = vmul.f32 %v654, %v658
    %v661 = vmul.f32 %v655, %v658
    %v662 = vadd.f32 %v639, %v660
    %v663 = vadd.f32 %v640, %v661
    %664 = vset.pattern.permute.xlu0 7
    %665 = vperm.xlu0 %664, %v562
    %v666 = vpop.permute.xlu0 %665
    %v668 = vadd.f32 %v662, %v666
    %v669 = vadd.f32 %v663, %v666
    %vm670 = vcmp.gt.f32.partialorder %v668, 0.0
    %vm671 = vcmp.gt.f32.partialorder %v669, 0.0
    %672 = vset.pattern.permute.xlu0 8
    %673 = vperm.xlu0 %672, %v562
    %v674 = vpop.permute.xlu0 %673
    %v676 = vmul.f32 %v668, %v674
    %v677 = vmul.f32 %v669, %v674
    %v678 = vsel %vm670, %v668, %v676
    %v679 = vsel %vm671, %v669, %v677
    %680 = vrot.lane.b32.xlu0 %v678, 3
    %v681 = vpop.permute.xlu0 %680
    %682 = vrot.lane.b32.xlu0 %v679, 3
    %v683 = vpop.permute.xlu0 %682
    %vm684 = vcmp.lt.s32.totalorder %v40, 3
    %v685 = vsel %vm684, %v681, %v683
    %v686 = vsel %vm684, %v683, %v681
    %vm687 = vcmp.ge.s32.totalorder %v64, 3
    %vm688 = vcmp.ge.s32.totalorder %v65, 3
    %v689 = vsel %vm687, 1, 0
    %v690 = vsel %vm688, 1, 0
    %vm691 = vcmp.eq.s32.totalorder %v689, 1
    %vm692 = vcmp.eq.s32.totalorder %v690, 1
    %v693 = vsel %vm691, %v686, 0.0
    %v694 = vsel %vm692, %v685, 0.0
    %695 = vset.pattern.permute.xlu0 9
    %696 = vperm.xlu0 %695, %v562
    %v697 = vpop.permute.xlu0 %696
    %v699 = vmul.f32 %v693, %v697
    %v700 = vmul.f32 %v694, %v697
    %701 = vrot.lane.b32.xlu0 %v678, 2
    %v702 = vpop.permute.xlu0 %701
    %703 = vrot.lane.b32.xlu0 %v679, 2
    %v704 = vpop.permute.xlu0 %703
    %v705 = vsel %vm345, %v702, %v704
    %v706 = vsel %vm345, %v704, %v702
    %v707 = vsel %vm350, %v706, 0.0
    %v708 = vsel %vm351, %v705, 0.0
    %709 = vset.pattern.permute.xlu0 10
    %710 = vperm.xlu0 %709, %v562
    %v711 = vpop.permute.xlu0 %710
    %v713 = vmul.f32 %v707, %v711
    %v714 = vmul.f32 %v708, %v711
    %v715 = vadd.f32 %v699, %v713
    %v716 = vadd.f32 %v700, %v714
    %717 = vrot.lane.b32.xlu0 %v678, 1
    %v718 = vpop.permute.xlu0 %717
    %719 = vrot.lane.b32.xlu0 %v679, 1
    %v720 = vpop.permute.xlu0 %719
    %v721 = vsel %vm216, %v718, %v720
    %v722 = vsel %vm216, %v720, %v718
    %v723 = vsel %vm223, %v722, 0.0
    %v724 = vsel %vm224, %v721, 0.0
    %725 = vset.pattern.permute.xlu0 11
    %726 = vperm.xlu0 %725, %v562
    %v727 = vpop.permute.xlu0 %726
    %v729 = vmul.f32 %v723, %v727
    %v730 = vmul.f32 %v724, %v727
    %v731 = vadd.f32 %v715, %v729
    %v732 = vadd.f32 %v716, %v730
    %733 = vset.pattern.permute.xlu0 12
    %734 = vperm.xlu0 %733, %v562
    %v735 = vpop.permute.xlu0 %734
    %v737 = vmul.f32 %v678, %v735
    %v738 = vmul.f32 %v679, %v735
    %v739 = vadd.f32 %v731, %v737
    %v740 = vadd.f32 %v732, %v738
    %741 = vrot.lane.b32.xlu0 %v678, 127
    %v742 = vpop.permute.xlu0 %741
    %743 = vrot.lane.b32.xlu0 %v679, 127
    %v744 = vpop.permute.xlu0 %743
    %v745 = vsel %vm245, %v742, %v744
    %v746 = vsel %vm245, %v744, %v742
    %v747 = vsel %vm252, %v745, 0.0
    %v748 = vsel %vm253, %v746, 0.0
    %749 = vset.pattern.permute.xlu0 13
    %750 = vperm.xlu0 %749, %v562
    %v751 = vpop.permute.xlu0 %750
    %v753 = vmul.f32 %v747, %v751
    %v754 = vmul.f32 %v748, %v751
    %v755 = vadd.f32 %v739, %v753
    %v756 = vadd.f32 %v740, %v754
    %757 = vrot.lane.b32.xlu0 %v678, 126
    %v758 = vpop.permute.xlu0 %757
    %759 = vrot.lane.b32.xlu0 %v679, 126
    %v760 = vpop.permute.xlu0 %759
    %v761 = vsel %vm374, %v758, %v760
    %v762 = vsel %vm374, %v760, %v758
    %v763 = vsel %vm379, %v761, 0.0
    %v764 = vsel %vm380, %v762, 0.0
    %765 = vset.pattern.permute.xlu0 14
    %766 = vperm.xlu0 %765, %v562
    %v767 = vpop.permute.xlu0 %766
    %v769 = vmul.f32 %v763, %v767
    %v770 = vmul.f32 %v764, %v767
    %v771 = vadd.f32 %v755, %v769
    %v772 = vadd.f32 %v756, %v770
    %773 = vrot.lane.b32.xlu0 %v678, 125
    %v774 = vpop.permute.xlu0 %773
    %775 = vrot.lane.b32.xlu0 %v679, 125
    %v776 = vpop.permute.xlu0 %775
    %vm777 = vcmp.lt.s32.totalorder %v40, 125
    %v778 = vsel %vm777, %v774, %v776
    %v779 = vsel %vm777, %v776, %v774
    %vm780 = vcmp.lt.s32.totalorder %v64, 13
    %vm781 = vcmp.lt.s32.totalorder %v65, 13
    %v782 = vsel %vm780, 1, 0
    %v783 = vsel %vm781, 1, 0
    %vm784 = vcmp.eq.s32.totalorder %v782, 1
    %vm785 = vcmp.eq.s32.totalorder %v783, 1
    %v786 = vsel %vm784, %v778, 0.0
    %v787 = vsel %vm785, %v779, 0.0
    %788 = vset.pattern.permute.xlu0 15
    %789 = vperm.xlu0 %788, %v562
    %v790 = vpop.permute.xlu0 %789
    %v792 = vmul.f32 %v786, %v790
    %v793 = vmul.f32 %v787, %v790
    %v794 = vadd.f32 %v771, %v792
    %v795 = vadd.f32 %v772, %v793
    %796 = vset.pattern.permute.xlu0 16
    %797 = vperm.xlu0 %796, %v562
    %v798 = vpop.permute.xlu0 %797
    %v800 = vadd.f32 %v794, %v798
    %v801 = vadd.f32 %v795, %v798
    %802 = vrot.lane.b32.xlu0 %v800, 68
    %v803 = vpop.permute.xlu0 %802
    %804 = vrot.lane.b32.xlu0 %v801, 68
    %v805 = vpop.permute.xlu0 %804
    %vm806 = vcmp.lt.s32.totalorder %v40, 68
    %v807 = vsel %vm806, %v803, %v805
    %v808 = vsel %vm806, %v805, %v803
    %vm809 = vcmp.ge.s32.totalorder %v40, 64
    %vm810 = vcmp.ge.s32.totalorder %v41, 64
    %vm811 = vcmp.ge.s32.totalorder %v64, 4
    %vm812 = vcmp.ge.s32.totalorder %v65, 4
    %vm813 = vmand %vm809, %vm811
    %vm814 = vmand %vm810, %vm812
    %v815 = vsel %vm813, 1, 0
    %v816 = vsel %vm814, 1, 0
    %vm817 = vcmp.eq.s32.totalorder %v815, 1
    %vm818 = vcmp.eq.s32.totalorder %v816, 1
    %v819 = vsel %vm817, %v808, 0.0
    %v820 = vsel %vm818, %v807, 0.0
    %821 = vset.pattern.permute.xlu0 17
    %822 = vperm.xlu0 %821, %v562
    %v823 = vpop.permute.xlu0 %822
    %v825 = vmul.f32 %v819, %v823
    %v826 = vmul.f32 %v820, %v823
    %827 = vrot.lane.b32.xlu0 %v800, 64
    %v828 = vpop.permute.xlu0 %827
    %829 = vrot.lane.b32.xlu0 %v801, 64
    %v830 = vpop.permute.xlu0 %829
    %vm831 = vcmp.lt.s32.totalorder %v40, 64
    %v832 = vsel %vm831, %v828, %v830
    %v833 = vsel %vm831, %v830, %v828
    %v834 = vsel %vm809, 1, 0
    %v835 = vsel %vm810, 1, 0
    %vm836 = vcmp.eq.s32.totalorder %v834, 1
    %vm837 = vcmp.eq.s32.totalorder %v835, 1
    %v838 = vsel %vm836, %v833, 0.0
    %v839 = vsel %vm837, %v832, 0.0
    %840 = vset.pattern.permute.xlu0 18
    %841 = vperm.xlu0 %840, %v562
    %v842 = vpop.permute.xlu0 %841
    %v844 = vmul.f32 %v838, %v842
    %v845 = vmul.f32 %v839, %v842
    %v846 = vadd.f32 %v825, %v844
    %v847 = vadd.f32 %v826, %v845
    %848 = vrot.lane.b32.xlu0 %v800, 60
    %v849 = vpop.permute.xlu0 %848
    %850 = vrot.lane.b32.xlu0 %v801, 60
    %v851 = vpop.permute.xlu0 %850
    %vm852 = vcmp.lt.s32.totalorder %v40, 60
    %v853 = vsel %vm852, %v849, %v851
    %v854 = vsel %vm852, %v851, %v849
    %vm855 = vcmp.lt.s32.totalorder %v64, 12
    %vm856 = vcmp.lt.s32.totalorder %v65, 12
    %vm857 = vmand %vm809, %vm855
    %vm858 = vmand %vm810, %vm856
    %v859 = vsel %vm857, 1, 0
    %v860 = vsel %vm858, 1, 0
    %vm861 = vcmp.eq.s32.totalorder %v859, 1
    %vm862 = vcmp.eq.s32.totalorder %v860, 1
    %v863 = vsel %vm861, %v854, 0.0
    %v864 = vsel %vm862, %v853, 0.0
    %865 = vset.pattern.permute.xlu0 19
    %866 = vperm.xlu0 %865, %v562
    %v867 = vpop.permute.xlu0 %866
    %v869 = vmul.f32 %v863, %v867
    %v870 = vmul.f32 %v864, %v867
    %v871 = vadd.f32 %v846, %v869
    %v872 = vadd.f32 %v847, %v870
    %873 = vrot.lane.b32.xlu0 %v800, 4
    %v874 = vpop.permute.xlu0 %873
    %875 = vrot.lane.b32.xlu0 %v801, 4
    %v876 = vpop.permute.xlu0 %875
    %vm877 = vcmp.lt.s32.totalorder %v40, 4
    %v878 = vsel %vm877, %v874, %v876
    %v879 = vsel %vm877, %v876, %v874
    %v880 = vsel %vm811, 1, 0
    %v881 = vsel %vm812, 1, 0
    %vm882 = vcmp.eq.s32.totalorder %v880, 1
    %vm883 = vcmp.eq.s32.totalorder %v881, 1
    %v884 = vsel %vm882, %v879, 0.0
    %v885 = vsel %vm883, %v878, 0.0
    %886 = vset.pattern.permute.xlu0 20
    %887 = vperm.xlu0 %886, %v562
    %v888 = vpop.permute.xlu0 %887
    %v890 = vmul.f32 %v884, %v888
    %v891 = vmul.f32 %v885, %v888
    %v892 = vadd.f32 %v871, %v890
    %v893 = vadd.f32 %v872, %v891
    %894 = vset.pattern.permute.xlu0 21
    %895 = vperm.xlu0 %894, %v562
    %v896 = vpop.permute.xlu0 %895
    %v898 = vmul.f32 %v800, %v896
    %v899 = vmul.f32 %v801, %v896
    %v900 = vadd.f32 %v892, %v898
    %v901 = vadd.f32 %v893, %v899
    %902 = vrot.lane.b32.xlu0 %v800, 124
    %v903 = vpop.permute.xlu0 %902
    %904 = vrot.lane.b32.xlu0 %v801, 124
    %v905 = vpop.permute.xlu0 %904
    %vm906 = vcmp.lt.s32.totalorder %v40, 124
    %v907 = vsel %vm906, %v903, %v905
    %v908 = vsel %vm906, %v905, %v903
    %v909 = vsel %vm855, 1, 0
    %v910 = vsel %vm856, 1, 0
    %vm911 = vcmp.eq.s32.totalorder %v909, 1
    %vm912 = vcmp.eq.s32.totalorder %v910, 1
    %v913 = vsel %vm911, %v907, 0.0
    %v914 = vsel %vm912, %v908, 0.0
    %915 = vset.pattern.permute.xlu0 22
    %916 = vperm.xlu0 %915, %v562
    %v917 = vpop.permute.xlu0 %916
    %v919 = vmul.f32 %v913, %v917
    %v920 = vmul.f32 %v914, %v917
    %v921 = vadd.f32 %v900, %v919
    %v922 = vadd.f32 %v901, %v920
    %vm923 = vcmp.lt.s32.totalorder %v40, 192
    %vm924 = vcmp.lt.s32.totalorder %v41, 192
    %vm925 = vmand %vm923, %vm811
    %vm926 = vmand %vm924, %vm812
    %v927 = vsel %vm925, 1, 0
    %v928 = vsel %vm926, 1, 0
    %vm929 = vcmp.eq.s32.totalorder %v927, 1
    %vm930 = vcmp.eq.s32.totalorder %v928, 1
    %v931 = vsel %vm929, %v807, 0.0
    %v932 = vsel %vm930, %v808, 0.0
    %933 = vset.pattern.permute.xlu0 23
    %934 = vperm.xlu0 %933, %v562
    %v935 = vpop.permute.xlu0 %934
    %v937 = vmul.f32 %v931, %v935
    %v938 = vmul.f32 %v932, %v935
    %v939 = vadd.f32 %v921, %v937
    %v940 = vadd.f32 %v922, %v938
    %v941 = vsel %vm923, 1, 0
    %v942 = vsel %vm924, 1, 0
    %vm943 = vcmp.eq.s32.totalorder %v941, 1
    %vm944 = vcmp.eq.s32.totalorder %v942, 1
    %v945 = vsel %vm943, %v832, 0.0
    %v946 = vsel %vm944, %v833, 0.0
    %947 = vset.pattern.permute.xlu0 24
    %948 = vperm.xlu0 %947, %v562
    %v949 = vpop.permute.xlu0 %948
    %v951 = vmul.f32 %v945, %v949
    %v952 = vmul.f32 %v946, %v949
    %v953 = vadd.f32 %v939, %v951
    %v954 = vadd.f32 %v940, %v952
    %vm955 = vmand %vm923, %vm855
    %vm956 = vmand %vm924, %vm856
    %v957 = vsel %vm955, 1, 0
    %v958 = vsel %vm956, 1, 0
    %vm959 = vcmp.eq.s32.totalorder %v957, 1
    %vm960 = vcmp.eq.s32.totalorder %v958, 1
    %v961 = vsel %vm959, %v853, 0.0
    %v962 = vsel %vm960, %v854, 0.0
    %963 = vset.pattern.permute.xlu0 25
    %964 = vperm.xlu0 %963, %v562
    %v965 = vpop.permute.xlu0 %964
    %v967 = vmul.f32 %v961, %v965
    %v968 = vmul.f32 %v962, %v965
    %v969 = vadd.f32 %v953, %v967
    %v970 = vadd.f32 %v954, %v968
    %v971 = vld [vmem:[%s6] sm:$0xff]
    %v972 = vld [vmem:[%s6 + $0x8] sm:$0xff]
    %v973 = vld [vmem:[%s6 + $0x10] sm:$0xff]
    %v975 = vsel %vm463, %v971, 0
    %v978 = vsel %vm463, %v972, 0
    %v981 = vsel %vm463, %v973, 0
    %983 = vmatprep.subr.mxu0 %v970
    %984 = vmatpush1.msra.mxu0 %v969
    %985 = vmatprep.subr.mxu0 0.0
    %986 = vmatpush1.msra.mxu0 0.0
    %987 = vmatprep.subr.mxu0 0.0
    %988 = vmatpush1.msra.mxu0 0.0
    %989 = vmatprep.subr.mxu0 0.0
    %990 = vmatpush1.msra.mxu0 0.0
    %991 = vmatprep.subr.mxu0 0.0
    %992 = vmatpush1.msra.mxu0 0.0
    %993 = vmatprep.subr.mxu0 0.0
    %994 = vmatpush1.msra.mxu0 0.0
    %995 = vmatprep.subr.mxu0 0.0
    %996 = vmatpush1.msra.mxu0 0.0
    %997 = vmatprep.subr.mxu0 0.0
    %998 = vmatpush1.msra.mxu0 0.0
    %999 = vmatprep.subr.mxu0 0.0
    %1000 = vmatpush1.msra.mxu0 0.0
    %1001 = vmatprep.subr.mxu0 0.0
    %1002 = vmatpush1.msra.mxu0 0.0
    %1003 = vmatprep.subr.mxu0 0.0
    %1004 = vmatpush1.msra.mxu0 0.0
    %1005 = vmatprep.subr.mxu0 0.0
    %1006 = vmatpush1.msra.mxu0 0.0
    %1007 = vmatprep.subr.mxu0 0.0
    %1008 = vmatpush1.msra.mxu0 0.0
    %1009 = vmatprep.subr.mxu0 0.0
    %1010 = vmatpush1.msra.mxu0 0.0
    %1011 = vmatprep.subr.mxu0 0.0
    %1012 = vmatpush1.msra.mxu0 0.0
    %1013 = vmatprep.subr.mxu0 0.0
    %1014 = vmatpush1.msra.mxu0 0.0
    %1015 = vmatprep.subr.mxu0 0.0
    %1016 = vmatpush1.msra.mxu0 0.0
    %1017 = vmatprep.subr.mxu0 0.0
    %1018 = vmatpush1.msra.mxu0 0.0
    %1019 = vmatprep.subr.mxu0 0.0
    %1020 = vmatpush1.msra.mxu0 0.0
    %1021 = vmatprep.subr.mxu0 0.0
    %1022 = vmatpush1.msra.mxu0 0.0
    %1023 = vmatprep.subr.mxu0 0.0
    %1024 = vmatpush1.msra.mxu0 0.0
    %1025 = vmatprep.subr.mxu0 0.0
    %1026 = vmatpush1.msra.mxu0 0.0
    %1027 = vmatprep.subr.mxu0 0.0
    %1028 = vmatpush1.msra.mxu0 0.0
    %1029 = vmatprep.subr.mxu0 0.0
    %1030 = vmatpush1.msra.mxu0 0.0
    %1031 = vmatprep.subr.mxu0 0.0
    %1032 = vmatpush1.msra.mxu0 0.0
    %1033 = vmatprep.subr.mxu0 0.0
    %1034 = vmatpush1.msra.mxu0 0.0
    %1035 = vmatprep.subr.mxu0 0.0
    %1036 = vmatpush1.msra.mxu0 0.0
    %1037 = vmatprep.subr.mxu0 0.0
    %1038 = vmatpush1.msra.mxu0 0.0
    %1039 = vmatprep.subr.mxu0 0.0
    %1040 = vmatpush1.msra.mxu0 0.0
    %1041 = vmatprep.subr.mxu0 0.0
    %1042 = vmatpush1.msra.mxu0 0.0
    %1043 = vmatprep.subr.mxu0 0.0
    %1044 = vmatpush1.msra.mxu0 0.0
    %1045 = vmatprep.subr.mxu0 0.0
    %1046 = vmatpush1.msra.mxu0 0.0
    %1047 = vmatprep.mubr.f32.mxu0 0.0
    %1048 = vmatmul.mubr.f32.gmra.mrb[0].mxu0 %v975
    %v1049 = vpop.f32.mrb[0].mxu0
    %v1050 = vadd.f32 0.0, %v1049
    %v1051 = vpop.f32.mrb[0].mxu0
    %v1052 = vadd.f32 0.0, %v1051
    %1053 = vmatprep.mubr.f32.mxu0 0.0
    %1054 = vmatmul.mubr.f32.gmra.mrb[0].mxu0 %v978
    %v1055 = vpop.f32.mrb[0].mxu0
    %v1056 = vadd.f32 0.0, %v1055
    %v1057 = vpop.f32.mrb[0].mxu0
    %v1058 = vadd.f32 0.0, %v1057
    %1059 = vmatprep.mubr.f32.mxu0 0.0
    %1060 = vmatmul.mubr.f32.gmra.mrb[0].mxu0 %v981
    %v1061 = vpop.f32.mrb[0].mxu0
    %v1062 = vadd.f32 0.0, %v1061
    %v1063 = vpop.f32.mrb[0].mxu0
    %v1064 = vadd.f32 0.0, %v1063
    %1065 = vdwg.mxu0
    %v1066 = vadd.f32 %v556, %v1050
    %v1067 = vadd.f32 %v557, %v1052
    %v1068 = vadd.f32 %v558, %v1056
    %v1069 = vadd.f32 %v559, %v1058
    %v1070 = vadd.f32 %v560, %v1062
    %v1071 = vadd.f32 %v561, %v1064
    %v1072 = vld [vmem:[%s4] sm:$0xff]
    %vm1073 = vcmp.ge.s32.totalorder %v40, 112
    %vm1074 = vcmp.ge.s32.totalorder %v41, 112
    %v1075 = vsel %vm1073, 1, 0
    %v1076 = vsel %vm1074, 1, 0
    %vm1077 = vcmp.eq.s32.totalorder %v1075, 1
    %vm1078 = vcmp.eq.s32.totalorder %v1076, 1
    %v1079 = vsel %vm1077, %v179, 0.0
    %v1080 = vsel %vm1078, %v178, 0.0
    %1082 = vset.pattern.permute.xlu0 0
    %1083 = vperm.xlu0 %1082, %v1072
    %v1084 = vpop.permute.xlu0 %1083
    %v1086 = vmul.f32 %v1079, %v1084
    %v1087 = vmul.f32 %v1080, %v1084
    %vm1088 = vcmp.ge.s32.totalorder %v40, 96
    %vm1089 = vcmp.ge.s32.totalorder %v41, 96
    %v1090 = vsel %vm1088, 1, 0
    %v1091 = vsel %vm1089, 1, 0
    %vm1092 = vcmp.eq.s32.totalorder %v1090, 1
    %vm1093 = vcmp.eq.s32.totalorder %v1091, 1
    %v1094 = vsel %vm1092, %v630, 0.0
    %v1095 = vsel %vm1093, %v629, 0.0
    %1096 = vset.pattern.permute.xlu0 1
    %1097 = vperm.xlu0 %1096, %v1072
    %v1098 = vpop.permute.xlu0 %1097
    %v1100 = vmul.f32 %v1094, %v1098
    %v1101 = vmul.f32 %v1095, %v1098
    %v1102 = vadd.f32 %v1086, %v1100
    %v1103 = vadd.f32 %v1087, %v1101
    %vm1104 = vcmp.ge.s32.totalorder %v40, 80
    %vm1105 = vcmp.ge.s32.totalorder %v41, 80
    %v1106 = vsel %vm1104, 1, 0
    %v1107 = vsel %vm1105, 1, 0
    %vm1108 = vcmp.eq.s32.totalorder %v1106, 1
    %vm1109 = vcmp.eq.s32.totalorder %v1107, 1
    %v1110 = vsel %vm1108, %v647, 0.0
    %v1111 = vsel %vm1109, %v646, 0.0
    %1112 = vset.pattern.permute.xlu0 2
    %1113 = vperm.xlu0 %1112, %v1072
    %v1114 = vpop.permute.xlu0 %1113
    %v1116 = vmul.f32 %v1110, %v1114
    %v1117 = vmul.f32 %v1111, %v1114
    %v1118 = vadd.f32 %v1102, %v1116
    %v1119 = vadd.f32 %v1103, %v1117
    %1120 = vrot.lane.b32.xlu0 %v138, 64
    %v1121 = vpop.permute.xlu0 %1120
    %1122 = vrot.lane.b32.xlu0 %v140, 64
    %v1123 = vpop.permute.xlu0 %1122
    %v1124 = vsel %vm831, %v1121, %v1123
    %v1125 = vsel %vm831, %v1123, %v1121
    %v1126 = vsel %vm836, %v1125, 0.0
    %v1127 = vsel %vm837, %v1124, 0.0
    %1128 = vset.pattern.permute.xlu0 3
    %1129 = vperm.xlu0 %1128, %v1072
    %v1130 = vpop.permute.xlu0 %1129
    %v1132 = vmul.f32 %v1126, %v1130
    %v1133 = vmul.f32 %v1127, %v1130
    %v1134 = vadd.f32 %v1118, %v1132
    %v1135 = vadd.f32 %v1119, %v1133
    %1136 = vset.pattern.permute.xlu0 4
    %1137 = vperm.xlu0 %1136, %v1072
    %v1138 = vpop.permute.xlu0 %1137
    %v1140 = vmul.f32 %v576, %v1138
    %v1141 = vmul.f32 %v577, %v1138
    %v1142 = vadd.f32 %v1134, %v1140
    %v1143 = vadd.f32 %v1135, %v1141
    %1144 = vset.pattern.permute.xlu0 5
    %1145 = vperm.xlu0 %1144, %v1072
    %v1146 = vpop.permute.xlu0 %1145
    %v1148 = vmul.f32 %v591, %v1146
    %v1149 = vmul.f32 %v592, %v1146
    %v1150 = vadd.f32 %v1142, %v1148
    %v1151 = vadd.f32 %v1143, %v1149
    %1152 = vset.pattern.permute.xlu0 6
    %1153 = vperm.xlu0 %1152, %v1072
    %v1154 = vpop.permute.xlu0 %1153
    %v1156 = vmul.f32 %v156, %v1154
    %v1157 = vmul.f32 %v157, %v1154
    %v1158 = vadd.f32 %v1150, %v1156
    %v1159 = vadd.f32 %v1151, %v1157
    %1160 = vset.pattern.permute.xlu0 7
    %1161 = vperm.xlu0 %1160, %v1072
    %v1162 = vpop.permute.xlu0 %1161
    %v1164 = vmul.f32 %v138, %v1162
    %v1165 = vmul.f32 %v140, %v1162
    %v1166 = vadd.f32 %v1158, %v1164
    %v1167 = vadd.f32 %v1159, %v1165
    %1168 = vset.pattern.permute.xlu0 8
    %1169 = vperm.xlu0 %1168, %v1072
    %v1170 = vpop.permute.xlu0 %1169
    %v1172 = vmul.f32 %v186, %v1170
    %v1173 = vmul.f32 %v187, %v1170
    %v1174 = vadd.f32 %v1166, %v1172
    %v1175 = vadd.f32 %v1167, %v1173
    %1176 = vset.pattern.permute.xlu0 9
    %1177 = vperm.xlu0 %1176, %v1072
    %v1178 = vpop.permute.xlu0 %1177
    %v1180 = vmul.f32 %v631, %v1178
    %v1181 = vmul.f32 %v632, %v1178
    %v1182 = vadd.f32 %v1174, %v1180
    %v1183 = vadd.f32 %v1175, %v1181
    %1184 = vset.pattern.permute.xlu0 10
    %1185 = vperm.xlu0 %1184, %v1072
    %v1186 = vpop.permute.xlu0 %1185
    %v1188 = vmul.f32 %v654, %v1186
    %v1189 = vmul.f32 %v655, %v1186
    %v1190 = vadd.f32 %v1182, %v1188
    %v1191 = vadd.f32 %v1183, %v1189
    %v1192 = vsel %vm943, %v1124, 0.0
    %v1193 = vsel %vm944, %v1125, 0.0
    %1194 = vset.pattern.permute.xlu0 11
    %1195 = vperm.xlu0 %1194, %v1072
    %v1196 = vpop.permute.xlu0 %1195
    %v1198 = vmul.f32 %v1192, %v1196
    %v1199 = vmul.f32 %v1193, %v1196
    %v1200 = vadd.f32 %v1190, %v1198
    %v1201 = vadd.f32 %v1191, %v1199
    %vm1202 = vcmp.lt.s32.totalorder %v40, 176
    %vm1203 = vcmp.lt.s32.totalorder %v41, 176
    %v1204 = vsel %vm1202, 1, 0
    %v1205 = vsel %vm1203, 1, 0
    %vm1206 = vcmp.eq.s32.totalorder %v1204, 1
    %vm1207 = vcmp.eq.s32.totalorder %v1205, 1
    %v1208 = vsel %vm1206, %v568, 0.0
    %v1209 = vsel %vm1207, %v569, 0.0
    %1210 = vset.pattern.permute.xlu0 12
    %1211 = vperm.xlu0 %1210, %v1072
    %v1212 = vpop.permute.xlu0 %1211
    %v1214 = vmul.f32 %v1208, %v1212
    %v1215 = vmul.f32 %v1209, %v1212
    %v1216 = vadd.f32 %v1200, %v1214
    %v1217 = vadd.f32 %v1201, %v1215
    %vm1218 = vcmp.lt.s32.totalorder %v40, 160
    %vm1219 = vcmp.lt.s32.totalorder %v41, 160
    %v1220 = vsel %vm1218, 1, 0
    %v1221 = vsel %vm1219, 1, 0
    %vm1222 = vcmp.eq.s32.totalorder %v1220, 1
    %vm1223 = vcmp.eq.s32.totalorder %v1221, 1
    %v1224 = vsel %vm1222, %v589, 0.0
    %v1225 = vsel %vm1223, %v590, 0.0
    %1226 = vset.pattern.permute.xlu0 13
    %1227 = vperm.xlu0 %1226, %v1072
    %v1228 = vpop.permute.xlu0 %1227
    %v1230 = vmul.f32 %v1224, %v1228
    %v1231 = vmul.f32 %v1225, %v1228
    %v1232 = vadd.f32 %v1216, %v1230
    %v1233 = vadd.f32 %v1217, %v1231
    %vm1234 = vcmp.lt.s32.totalorder %v40, 144
    %vm1235 = vcmp.lt.s32.totalorder %v41, 144
    %v1236 = vsel %vm1234, 1, 0
    %v1237 = vsel %vm1235, 1, 0
    %vm1238 = vcmp.eq.s32.totalorder %v1236, 1
    %vm1239 = vcmp.eq.s32.totalorder %v1237, 1
    %v1240 = vsel %vm1238, %v148, 0.0
    %v1241 = vsel %vm1239, %v149, 0.0
    %1242 = vset.pattern.permute.xlu0 14
    %1243 = vperm.xlu0 %1242, %v1072
    %v1244 = vpop.permute.xlu0 %1243
    %v1246 = vmul.f32 %v1240, %v1244
    %v1247 = vmul.f32 %v1241, %v1244
    %v1248 = vadd.f32 %v1232, %v1246
    %v1249 = vadd.f32 %v1233, %v1247
    %1250 = vset.pattern.permute.xlu0 15
    %1251 = vperm.xlu0 %1250, %v1072
    %v1252 = vpop.permute.xlu0 %1251
    %v1254 = vadd.f32 %v1248, %v1252
    %v1255 = vadd.f32 %v1249, %v1252
    %vm1256 = vcmp.gt.f32.partialorder %v1254, 0.0
    %vm1257 = vcmp.gt.f32.partialorder %v1255, 0.0
    %1258 = vset.pattern.permute.xlu0 16
    %1259 = vperm.xlu0 %1258, %v1072
    %v1260 = vpop.permute.xlu0 %1259
    %v1262 = vmul.f32 %v1254, %v1260
    %v1263 = vmul.f32 %v1255, %v1260
    %v1264 = vsel %vm1256, %v1254, %v1262
    %v1265 = vsel %vm1257, %v1255, %v1263
    %1266 = vrot.lane.b32.xlu0 %v1264, 7
    %v1267 = vpop.permute.xlu0 %1266
    %1268 = vrot.lane.b32.xlu0 %v1265, 7
    %v1269 = vpop.permute.xlu0 %1268
    %vm1270 = vcmp.lt.s32.totalorder %v40, 7
    %v1271 = vsel %vm1270, %v1267, %v1269
    %v1272 = vsel %vm1270, %v1269, %v1267
    %vm1273 = vcmp.ge.s32.totalorder %v64, 7
    %vm1274 = vcmp.ge.s32.totalorder %v65, 7
    %v1275 = vsel %vm1273, 1, 0
    %v1276 = vsel %vm1274, 1, 0
    %vm1277 = vcmp.eq.s32.totalorder %v1275, 1
    %vm1278 = vcmp.eq.s32.totalorder %v1276, 1
    %v1279 = vsel %vm1277, %v1272, 0.0
    %v1280 = vsel %vm1278, %v1271, 0.0
    %1281 = vset.pattern.permute.xlu0 17
    %1282 = vperm.xlu0 %1281, %v1072
    %v1283 = vpop.permute.xlu0 %1282
    %v1285 = vmul.f32 %v1279, %v1283
    %v1286 = vmul.f32 %v1280, %v1283
    %1287 = vrot.lane.b32.xlu0 %v1264, 6
    %v1288 = vpop.permute.xlu0 %1287
    %1289 = vrot.lane.b32.xlu0 %v1265, 6
    %v1290 = vpop.permute.xlu0 %1289
    %vm1291 = vcmp.lt.s32.totalorder %v40, 6
    %v1292 = vsel %vm1291, %v1288, %v1290
    %v1293 = vsel %vm1291, %v1290, %v1288
    %vm1294 = vcmp.ge.s32.totalorder %v64, 6
    %vm1295 = vcmp.ge.s32.totalorder %v65, 6
    %v1296 = vsel %vm1294, 1, 0
    %v1297 = vsel %vm1295, 1, 0
    %vm1298 = vcmp.eq.s32.totalorder %v1296, 1
    %vm1299 = vcmp.eq.s32.totalorder %v1297, 1
    %v1300 = vsel %vm1298, %v1293, 0.0
    %v1301 = vsel %vm1299, %v1292, 0.0
    %1302 = vset.pattern.permute.xlu0 18
    %1303 = vperm.xlu0 %1302, %v1072
    %v1304 = vpop.permute.xlu0 %1303
    %v1306 = vmul.f32 %v1300, %v1304
    %v1307 = vmul.f32 %v1301, %v1304
    %v1308 = vadd.f32 %v1285, %v1306
    %v1309 = vadd.f32 %v1286, %v1307
    %1310 = vrot.lane.b32.xlu0 %v1264, 5
    %v1311 = vpop.permute.xlu0 %1310
    %1312 = vrot.lane.b32.xlu0 %v1265, 5
    %v1313 = vpop.permute.xlu0 %1312
    %vm1314 = vcmp.lt.s32.totalorder %v40, 5
    %v1315 = vsel %vm1314, %v1311, %v1313
    %v1316 = vsel %vm1314, %v1313, %v1311
    %vm1317 = vcmp.ge.s32.totalorder %v64, 5
    %vm1318 = vcmp.ge.s32.totalorder %v65, 5
    %v1319 = vsel %vm1317, 1, 0
    %v1320 = vsel %vm1318, 1, 0
    %vm1321 = vcmp.eq.s32.totalorder %v1319, 1
    %vm1322 = vcmp.eq.s32.totalorder %v1320, 1
    %v1323 = vsel %vm1321, %v1316, 0.0
    %v1324 = vsel %vm1322, %v1315, 0.0
    %1325 = vset.pattern.permute.xlu0 19
    %1326 = vperm.xlu0 %1325, %v1072
    %v1327 = vpop.permute.xlu0 %1326
    %v1329 = vmul.f32 %v1323, %v1327
    %v1330 = vmul.f32 %v1324, %v1327
    %v1331 = vadd.f32 %v1308, %v1329
    %v1332 = vadd.f32 %v1309, %v1330
    %1333 = vrot.lane.b32.xlu0 %v1264, 4
    %v1334 = vpop.permute.xlu0 %1333
    %1335 = vrot.lane.b32.xlu0 %v1265, 4
    %v1336 = vpop.permute.xlu0 %1335
    %v1337 = vsel %vm877, %v1334, %v1336
    %v1338 = vsel %vm877, %v1336, %v1334
    %v1339 = vsel %vm882, %v1338, 0.0
    %v1340 = vsel %vm883, %v1337, 0.0
    %1341 = vset.pattern.permute.xlu0 20
    %1342 = vperm.xlu0 %1341, %v1072
    %v1343 = vpop.permute.xlu0 %1342
    %v1345 = vmul.f32 %v1339, %v1343
    %v1346 = vmul.f32 %v1340, %v1343
    %v1347 = vadd.f32 %v1331, %v1345
    %v1348 = vadd.f32 %v1332, %v1346
    %1349 = vrot.lane.b32.xlu0 %v1264, 3
    %v1350 = vpop.permute.xlu0 %1349
    %1351 = vrot.lane.b32.xlu0 %v1265, 3
    %v1352 = vpop.permute.xlu0 %1351
    %v1353 = vsel %vm684, %v1350, %v1352
    %v1354 = vsel %vm684, %v1352, %v1350
    %v1355 = vsel %vm691, %v1354, 0.0
    %v1356 = vsel %vm692, %v1353, 0.0
    %1357 = vset.pattern.permute.xlu0 21
    %1358 = vperm.xlu0 %1357, %v1072
    %v1359 = vpop.permute.xlu0 %1358
    %v1361 = vmul.f32 %v1355, %v1359
    %v1362 = vmul.f32 %v1356, %v1359
    %v1363 = vadd.f32 %v1347, %v1361
    %v1364 = vadd.f32 %v1348, %v1362
    %1365 = vrot.lane.b32.xlu0 %v1264, 2
    %v1366 = vpop.permute.xlu0 %1365
    %1367 = vrot.lane.b32.xlu0 %v1265, 2
    %v1368 = vpop.permute.xlu0 %1367
    %v1369 = vsel %vm345, %v1366, %v1368
    %v1370 = vsel %vm345, %v1368, %v1366
    %v1371 = vsel %vm350, %v1370, 0.0
    %v1372 = vsel %vm351, %v1369, 0.0
    %1373 = vset.pattern.permute.xlu0 22
    %1374 = vperm.xlu0 %1373, %v1072
    %v1375 = vpop.permute.xlu0 %1374
    %v1377 = vmul.f32 %v1371, %v1375
    %v1378 = vmul.f32 %v1372, %v1375
    %v1379 = vadd.f32 %v1363, %v1377
    %v1380 = vadd.f32 %v1364, %v1378
    %1381 = vrot.lane.b32.xlu0 %v1264, 1
    %v1382 = vpop.permute.xlu0 %1381
    %1383 = vrot.lane.b32.xlu0 %v1265, 1
    %v1384 = vpop.permute.xlu0 %1383
    %v1385 = vsel %vm216, %v1382, %v1384
    %v1386 = vsel %vm216, %v1384, %v1382
    %v1387 = vsel %vm223, %v1386, 0.0
    %v1388 = vsel %vm224, %v1385, 0.0
    %1389 = vset.pattern.permute.xlu0 23
    %1390 = vperm.xlu0 %1389, %v1072
    %v1391 = vpop.permute.xlu0 %1390
    %v1393 = vmul.f32 %v1387, %v1391
    %v1394 = vmul.f32 %v1388, %v1391
    %v1395 = vadd.f32 %v1379, %v1393
    %v1396 = vadd.f32 %v1380, %v1394
    %1397 = vset.pattern.permute.xlu0 24
    %1398 = vperm.xlu0 %1397, %v1072
    %v1399 = vpop.permute.xlu0 %1398
    %v1401 = vmul.f32 %v1264, %v1399
    %v1402 = vmul.f32 %v1265, %v1399
    %v1403 = vadd.f32 %v1395, %v1401
    %v1404 = vadd.f32 %v1396, %v1402
    %1405 = vrot.lane.b32.xlu0 %v1264, 127
    %v1406 = vpop.permute.xlu0 %1405
    %1407 = vrot.lane.b32.xlu0 %v1265, 127
    %v1408 = vpop.permute.xlu0 %1407
    %v1409 = vsel %vm245, %v1406, %v1408
    %v1410 = vsel %vm245, %v1408, %v1406
    %v1411 = vsel %vm252, %v1409, 0.0
    %v1412 = vsel %vm253, %v1410, 0.0
    %1413 = vset.pattern.permute.xlu0 25
    %1414 = vperm.xlu0 %1413, %v1072
    %v1415 = vpop.permute.xlu0 %1414
    %v1417 = vmul.f32 %v1411, %v1415
    %v1418 = vmul.f32 %v1412, %v1415
    %v1419 = vadd.f32 %v1403, %v1417
    %v1420 = vadd.f32 %v1404, %v1418
    %1421 = vrot.lane.b32.xlu0 %v1264, 126
    %v1422 = vpop.permute.xlu0 %1421
    %1423 = vrot.lane.b32.xlu0 %v1265, 126
    %v1424 = vpop.permute.xlu0 %1423
    %v1425 = vsel %vm374, %v1422, %v1424
    %v1426 = vsel %vm374, %v1424, %v1422
    %v1427 = vsel %vm379, %v1425, 0.0
    %v1428 = vsel %vm380, %v1426, 0.0
    %1429 = vset.pattern.permute.xlu0 26
    %1430 = vperm.xlu0 %1429, %v1072
    %v1431 = vpop.permute.xlu0 %1430
    %v1433 = vmul.f32 %v1427, %v1431
    %v1434 = vmul.f32 %v1428, %v1431
    %v1435 = vadd.f32 %v1419, %v1433
    %v1436 = vadd.f32 %v1420, %v1434
    %1437 = vrot.lane.b32.xlu0 %v1264, 125
    %v1438 = vpop.permute.xlu0 %1437
    %1439 = vrot.lane.b32.xlu0 %v1265, 125
    %v1440 = vpop.permute.xlu0 %1439
    %v1441 = vsel %vm777, %v1438, %v1440
    %v1442 = vsel %vm777, %v1440, %v1438
    %v1443 = vsel %vm784, %v1441, 0.0
    %v1444 = vsel %vm785, %v1442, 0.0
    %1445 = vset.pattern.permute.xlu0 27
    %1446 = vperm.xlu0 %1445, %v1072
    %v1447 = vpop.permute.xlu0 %1446
    %v1449 = vmul.f32 %v1443, %v1447
    %v1450 = vmul.f32 %v1444, %v1447
    %v1451 = vadd.f32 %v1435, %v1449
    %v1452 = vadd.f32 %v1436, %v1450
    %1453 = vrot.lane.b32.xlu0 %v1264, 124
    %v1454 = vpop.permute.xlu0 %1453
    %1455 = vrot.lane.b32.xlu0 %v1265, 124
    %v1456 = vpop.permute.xlu0 %1455
    %v1457 = vsel %vm906, %v1454, %v1456
    %v1458 = vsel %vm906, %v1456, %v1454
    %v1459 = vsel %vm911, %v1457, 0.0
    %v1460 = vsel %vm912, %v1458, 0.0
    %1461 = vset.pattern.permute.xlu0 28
    %1462 = vperm.xlu0 %1461, %v1072
    %v1463 = vpop.permute.xlu0 %1462
    %v1465 = vmul.f32 %v1459, %v1463
    %v1466 = vmul.f32 %v1460, %v1463
    %v1467 = vadd.f32 %v1451, %v1465
    %v1468 = vadd.f32 %v1452, %v1466
    %1469 = vrot.lane.b32.xlu0 %v1264, 123
    %v1470 = vpop.permute.xlu0 %1469
    %1471 = vrot.lane.b32.xlu0 %v1265, 123
    %v1472 = vpop.permute.xlu0 %1471
    %vm1473 = vcmp.lt.s32.totalorder %v40, 123
    %v1474 = vsel %vm1473, %v1470, %v1472
    %v1475 = vsel %vm1473, %v1472, %v1470
    %vm1476 = vcmp.lt.s32.totalorder %v64, 11
    %vm1477 = vcmp.lt.s32.totalorder %v65, 11
    %v1478 = vsel %vm1476, 1, 0
    %v1479 = vsel %vm1477, 1, 0
    %vm1480 = vcmp.eq.s32.totalorder %v1478, 1
    %vm1481 = vcmp.eq.s32.totalorder %v1479, 1
    %v1482 = vsel %vm1480, %v1474, 0.0
    %v1483 = vsel %vm1481, %v1475, 0.0
    %1484 = vset.pattern.permute.xlu0 29
    %1485 = vperm.xlu0 %1484, %v1072
    %v1486 = vpop.permute.xlu0 %1485
    %v1488 = vmul.f32 %v1482, %v1486
    %v1489 = vmul.f32 %v1483, %v1486
    %v1490 = vadd.f32 %v1467, %v1488
    %v1491 = vadd.f32 %v1468, %v1489
    %1492 = vrot.lane.b32.xlu0 %v1264, 122
    %v1493 = vpop.permute.xlu0 %1492
    %1494 = vrot.lane.b32.xlu0 %v1265, 122
    %v1495 = vpop.permute.xlu0 %1494
    %vm1496 = vcmp.lt.s32.totalorder %v40, 122
    %v1497 = vsel %vm1496, %v1493, %v1495
    %v1498 = vsel %vm1496, %v1495, %v1493
    %vm1499 = vcmp.lt.s32.totalorder %v64, 10
    %vm1500 = vcmp.lt.s32.totalorder %v65, 10
    %v1501 = vsel %vm1499, 1, 0
    %v1502 = vsel %vm1500, 1, 0
    %vm1503 = vcmp.eq.s32.totalorder %v1501, 1
    %vm1504 = vcmp.eq.s32.totalorder %v1502, 1
    %v1505 = vsel %vm1503, %v1497, 0.0
    %v1506 = vsel %vm1504, %v1498, 0.0
    %1507 = vset.pattern.permute.xlu0 30
    %1508 = vperm.xlu0 %1507, %v1072
    %v1509 = vpop.permute.xlu0 %1508
    %v1511 = vmul.f32 %v1505, %v1509
    %v1512 = vmul.f32 %v1506, %v1509
    %v1513 = vadd.f32 %v1490, %v1511
    %v1514 = vadd.f32 %v1491, %v1512
    %1515 = vrot.lane.b32.xlu0 %v1264, 121
    %v1516 = vpop.permute.xlu0 %1515
    %1517 = vrot.lane.b32.xlu0 %v1265, 121
    %v1518 = vpop.permute.xlu0 %1517
    %vm1519 = vcmp.lt.s32.totalorder %v40, 121
    %v1520 = vsel %vm1519, %v1516, %v1518
    %v1521 = vsel %vm1519, %v1518, %v1516
    %vm1522 = vcmp.lt.s32.totalorder %v64, 9
    %vm1523 = vcmp.lt.s32.totalorder %v65, 9
    %v1524 = vsel %vm1522, 1, 0
    %v1525 = vsel %vm1523, 1, 0
    %vm1526 = vcmp.eq.s32.totalorder %v1524, 1
    %vm1527 = vcmp.eq.s32.totalorder %v1525, 1
    %v1528 = vsel %vm1526, %v1520, 0.0
    %v1529 = vsel %vm1527, %v1521, 0.0
    %1530 = vset.pattern.permute.xlu0 31
    %1531 = vperm.xlu0 %1530, %v1072
    %v1532 = vpop.permute.xlu0 %1531
    %v1534 = vmul.f32 %v1528, %v1532
    %v1535 = vmul.f32 %v1529, %v1532
    %v1536 = vadd.f32 %v1513, %v1534
    %v1537 = vadd.f32 %v1514, %v1535
    %1538 = vset.pattern.permute.xlu0 32
    %1539 = vperm.xlu0 %1538, %v1072
    %v1540 = vpop.permute.xlu0 %1539
    %v1542 = vadd.f32 %v1536, %v1540
    %v1543 = vadd.f32 %v1537, %v1540
    %1544 = vrot.lane.b32.xlu0 %v1542, 8
    %v1545 = vpop.permute.xlu0 %1544
    %1546 = vrot.lane.b32.xlu0 %v1543, 8
    %v1547 = vpop.permute.xlu0 %1546
    %vm1548 = vcmp.lt.s32.totalorder %v40, 8
    %v1549 = vsel %vm1548, %v1545, %v1547
    %v1550 = vsel %vm1548, %v1547, %v1545
    %vm1551 = vcmp.ge.s32.totalorder %v40, 128
    %vm1552 = vcmp.ge.s32.totalorder %v41, 128
    %vm1553 = vcmp.ge.s32.totalorder %v64, 8
    %vm1554 = vcmp.ge.s32.totalorder %v65, 8
    %vm1555 = vmand %vm1551, %vm1553
    %vm1556 = vmand %vm1552, %vm1554
    %v1557 = vsel %vm1555, 1, 0
    %v1558 = vsel %vm1556, 1, 0
    %vm1559 = vcmp.eq.s32.totalorder %v1557, 1
    %vm1560 = vcmp.eq.s32.totalorder %v1558, 1
    %v1561 = vsel %vm1559, %v1549, 0.0
    %v1562 = vsel %vm1560, %v1550, 0.0
    %1563 = vset.pattern.permute.xlu0 33
    %1564 = vperm.xlu0 %1563, %v1072
    %v1565 = vpop.permute.xlu0 %1564
    %v1567 = vmul.f32 %v1561, %v1565
    %v1568 = vmul.f32 %v1562, %v1565
    %v1569 = vsel %vm1551, 1, 0
    %v1570 = vsel %vm1552, 1, 0
    %vm1571 = vcmp.eq.s32.totalorder %v1569, 1
    %vm1572 = vcmp.eq.s32.totalorder %v1570, 1
    %v1573 = vsel %vm1571, %v1543, 0.0
    %v1574 = vsel %vm1572, %v1542, 0.0
    %1575 = vset.pattern.permute.xlu0 34
    %1576 = vperm.xlu0 %1575, %v1072
    %v1577 = vpop.permute.xlu0 %1576
    %v1579 = vmul.f32 %v1573, %v1577
    %v1580 = vmul.f32 %v1574, %v1577
    %v1581 = vadd.f32 %v1567, %v1579
    %v1582 = vadd.f32 %v1568, %v1580
    %1583 = vrot.lane.b32.xlu0 %v1542, 120
    %v1584 = vpop.permute.xlu0 %1583
    %1585 = vrot.lane.b32.xlu0 %v1543, 120
    %v1586 = vpop.permute.xlu0 %1585
    %vm1587 = vcmp.lt.s32.totalorder %v40, 120
    %v1588 = vsel %vm1587, %v1584, %v1586
    %v1589 = vsel %vm1587, %v1586, %v1584
    %vm1590 = vcmp.lt.s32.totalorder %v64, 8
    %vm1591 = vcmp.lt.s32.totalorder %v65, 8
    %vm1592 = vmand %vm1551, %vm1590
    %vm1593 = vmand %vm1552, %vm1591
    %v1594 = vsel %vm1592, 1, 0
    %v1595 = vsel %vm1593, 1, 0
    %vm1596 = vcmp.eq.s32.totalorder %v1594, 1
    %vm1597 = vcmp.eq.s32.totalorder %v1595, 1
    %v1598 = vsel %vm1596, %v1589, 0.0
    %v1599 = vsel %vm1597, %v1588, 0.0
    %1600 = vset.pattern.permute.xlu0 35
    %1601 = vperm.xlu0 %1600, %v1072
    %v1602 = vpop.permute.xlu0 %1601
    %v1604 = vmul.f32 %v1598, %v1602
    %v1605 = vmul.f32 %v1599, %v1602
    %v1606 = vadd.f32 %v1581, %v1604
    %v1607 = vadd.f32 %v1582, %v1605
    %v1608 = vsel %vm1553, 1, 0
    %v1609 = vsel %vm1554, 1, 0
    %vm1610 = vcmp.eq.s32.totalorder %v1608, 1
    %vm1611 = vcmp.eq.s32.totalorder %v1609, 1
    %v1612 = vsel %vm1610, %v1550, 0.0
    %v1613 = vsel %vm1611, %v1549, 0.0
    %1614 = vset.pattern.permute.xlu0 36
    %1615 = vperm.xlu0 %1614, %v1072
    %v1616 = vpop.permute.xlu0 %1615
    %v1618 = vmul.f32 %v1612, %v1616
    %v1619 = vmul.f32 %v1613, %v1616
    %v1620 = vadd.f32 %v1606, %v1618
    %v1621 = vadd.f32 %v1607, %v1619
    %1622 = vset.pattern.permute.xlu0 37
    %1623 = vperm.xlu0 %1622, %v1072
    %v1624 = vpop.permute.xlu0 %1623
    %v1626 = vmul.f32 %v1542, %v1624
    %v1627 = vmul.f32 %v1543, %v1624
    %v1628 = vadd.f32 %v1620, %v1626
    %v1629 = vadd.f32 %v1621, %v1627
    %v1630 = vsel %vm1590, 1, 0
    %v1631 = vsel %vm1591, 1, 0
    %vm1632 = vcmp.eq.s32.totalorder %v1630, 1
    %vm1633 = vcmp.eq.s32.totalorder %v1631, 1
    %v1634 = vsel %vm1632, %v1588, 0.0
    %v1635 = vsel %vm1633, %v1589, 0.0
    %1636 = vset.pattern.permute.xlu0 38
    %1637 = vperm.xlu0 %1636, %v1072
    %v1638 = vpop.permute.xlu0 %1637
    %v1640 = vmul.f32 %v1634, %v1638
    %v1641 = vmul.f32 %v1635, %v1638
    %v1642 = vadd.f32 %v1628, %v1640
    %v1643 = vadd.f32 %v1629, %v1641
    %vm1644 = vcmp.lt.s32.totalorder %v40, 128
    %vm1645 = vcmp.lt.s32.totalorder %v41, 128
    %vm1646 = vmand %vm1644, %vm1553
    %vm1647 = vmand %vm1645, %vm1554
    %v1648 = vsel %vm1646, 1, 0
    %v1649 = vsel %vm1647, 1, 0
    %vm1650 = vcmp.eq.s32.totalorder %v1648, 1
    %vm1651 = vcmp.eq.s32.totalorder %v1649, 1
    %v1652 = vsel %vm1650, %v1549, 0.0
    %v1653 = vsel %vm1651, %v1550, 0.0
    %1654 = vset.pattern.permute.xlu0 39
    %1655 = vperm.xlu0 %1654, %v1072
    %v1656 = vpop.permute.xlu0 %1655
    %v1658 = vmul.f32 %v1652, %v1656
    %v1659 = vmul.f32 %v1653, %v1656
    %v1660 = vadd.f32 %v1642, %v1658
    %v1661 = vadd.f32 %v1643, %v1659
    %v1662 = vsel %vm1644, 1, 0
    %v1663 = vsel %vm1645, 1, 0
    %vm1664 = vcmp.eq.s32.totalorder %v1662, 1
    %vm1665 = vcmp.eq.s32.totalorder %v1663, 1
    %v1666 = vsel %vm1664, %v1543, 0.0
    %v1667 = vsel %vm1665, %v1542, 0.0
    %1668 = vset.pattern.permute.xlu0 40
    %1669 = vperm.xlu0 %1668, %v1072
    %v1670 = vpop.permute.xlu0 %1669
    %v1672 = vmul.f32 %v1666, %v1670
    %v1673 = vmul.f32 %v1667, %v1670
    %v1674 = vadd.f32 %v1660, %v1672
    %v1675 = vadd.f32 %v1661, %v1673
    %vm1676 = vmand %vm1644, %vm1590
    %vm1677 = vmand %vm1645, %vm1591
    %v1678 = vsel %vm1676, 1, 0
    %v1679 = vsel %vm1677, 1, 0
    %vm1680 = vcmp.eq.s32.totalorder %v1678, 1
    %vm1681 = vcmp.eq.s32.totalorder %v1679, 1
    %v1682 = vsel %vm1680, %v1589, 0.0
    %v1683 = vsel %vm1681, %v1588, 0.0
    %1684 = vset.pattern.permute.xlu0 41
    %1685 = vperm.xlu0 %1684, %v1072
    %v1686 = vpop.permute.xlu0 %1685
    %v1688 = vmul.f32 %v1682, %v1686
    %v1689 = vmul.f32 %v1683, %v1686
    %v1690 = vadd.f32 %v1674, %v1688
    %v1691 = vadd.f32 %v1675, %v1689
    %v1692 = vld [vmem:[%s7] sm:$0xff]
    %v1693 = vld [vmem:[%s7 + $0x8] sm:$0xff]
    %v1694 = vld [vmem:[%s7 + $0x10] sm:$0xff]
    %v1696 = vsel %vm463, %v1692, 0
    %v1699 = vsel %vm463, %v1693, 0
    %v1702 = vsel %vm463, %v1694, 0
    %1704 = vmatprep.subr.mxu0 %v1691
    %1705 = vmatpush1.msra.mxu0 %v1690
    %1706 = vmatprep.subr.mxu0 0.0
    %1707 = vmatpush1.msra.mxu0 0.0
    %1708 = vmatprep.subr.mxu0 0.0
    %1709 = vmatpush1.msra.mxu0 0.0
    %1710 = vmatprep.subr.mxu0 0.0
    %1711 = vmatpush1.msra.mxu0 0.0
    %1712 = vmatprep.subr.mxu0 0.0
    %1713 = vmatpush1.msra.mxu0 0.0
    %1714 = vmatprep.subr.mxu0 0.0
    %1715 = vmatpush1.msra.mxu0 0.0
    %1716 = vmatprep.subr.mxu0 0.0
    %1717 = vmatpush1.msra.mxu0 0.0
    %1718 = vmatprep.subr.mxu0 0.0
    %1719 = vmatpush1.msra.mxu0 0.0
    %1720 = vmatprep.subr.mxu0 0.0
    %1721 = vmatpush1.msra.mxu0 0.0
    %1722 = vmatprep.subr.mxu0 0.0
    %1723 = vmatpush1.msra.mxu0 0.0
    %1724 = vmatprep.subr.mxu0 0.0
    %1725 = vmatpush1.msra.mxu0 0.0
    %1726 = vmatprep.subr.mxu0 0.0
    %1727 = vmatpush1.msra.mxu0 0.0
    %1728 = vmatprep.subr.mxu0 0.0
    %1729 = vmatpush1.msra.mxu0 0.0
    %1730 = vmatprep.subr.mxu0 0.0
    %1731 = vmatpush1.msra.mxu0 0.0
    %1732 = vmatprep.subr.mxu0 0.0
    %1733 = vmatpush1.msra.mxu0 0.0
    %1734 = vmatprep.subr.mxu0 0.0
    %1735 = vmatpush1.msra.mxu0 0.0
    %1736 = vmatprep.subr.mxu0 0.0
    %1737 = vmatpush1.msra.mxu0 0.0
    %1738 = vmatprep.subr.mxu0 0.0
    %1739 = vmatpush1.msra.mxu0 0.0
    %1740 = vmatprep.subr.mxu0 0.0
    %1741 = vmatpush1.msra.mxu0 0.0
    %1742 = vmatprep.subr.mxu0 0.0
    %1743 = vmatpush1.msra.mxu0 0.0
    %1744 = vmatprep.subr.mxu0 0.0
    %1745 = vmatpush1.msra.mxu0 0.0
    %1746 = vmatprep.subr.mxu0 0.0
    %1747 = vmatpush1.msra.mxu0 0.0
    %1748 = vmatprep.subr.mxu0 0.0
    %1749 = vmatpush1.msra.mxu0 0.0
    %1750 = vmatprep.subr.mxu0 0.0
    %1751 = vmatpush1.msra.mxu0 0.0
    %1752 = vmatprep.subr.mxu0 0.0
    %1753 = vmatpush1.msra.mxu0 0.0
    %1754 = vmatprep.subr.mxu0 0.0
    %1755 = vmatpush1.msra.mxu0 0.0
    %1756 = vmatprep.subr.mxu0 0.0
    %1757 = vmatpush1.msra.mxu0 0.0
    %1758 = vmatprep.subr.mxu0 0.0
    %1759 = vmatpush1.msra.mxu0 0.0
    %1760 = vmatprep.subr.mxu0 0.0
    %1761 = vmatpush1.msra.mxu0 0.0
    %1762 = vmatprep.subr.mxu0 0.0
    %1763 = vmatpush1.msra.mxu0 0.0
    %1764 = vmatprep.subr.mxu0 0.0
    %1765 = vmatpush1.msra.mxu0 0.0
    %1766 = vmatprep.subr.mxu0 0.0
    %1767 = vmatpush1.msra.mxu0 0.0
    %1768 = vmatprep.mubr.f32.mxu0 0.0
    %1769 = vmatmul.mubr.f32.gmra.mrb[0].mxu0 %v1696
    %v1770 = vpop.f32.mrb[0].mxu0
    %v1771 = vadd.f32 0.0, %v1770
    %v1772 = vpop.f32.mrb[0].mxu0
    %v1773 = vadd.f32 0.0, %v1772
    %1774 = vmatprep.mubr.f32.mxu0 0.0
    %1775 = vmatmul.mubr.f32.gmra.mrb[0].mxu0 %v1699
    %v1776 = vpop.f32.mrb[0].mxu0
    %v1777 = vadd.f32 0.0, %v1776
    %v1778 = vpop.f32.mrb[0].mxu0
    %v1779 = vadd.f32 0.0, %v1778
    %1780 = vmatprep.mubr.f32.mxu0 0.0
    %1781 = vmatmul.mubr.f32.gmra.mrb[0].mxu0 %v1702
    %v1782 = vpop.f32.mrb[0].mxu0
    %v1783 = vadd.f32 0.0, %v1782
    %v1784 = vpop.f32.mrb[0].mxu0
    %v1785 = vadd.f32 0.0, %v1784
    %1786 = vdwg.mxu0
    %v1787 = vadd.f32 %v1066, %v1771
    %v1788 = vadd.f32 %v1067, %v1773
    %v1789 = vadd.f32 %v1068, %v1777
    %v1790 = vadd.f32 %v1069, %v1779
    %v1791 = vadd.f32 %v1070, %v1783
    %v1792 = vadd.f32 %v1071, %v1785
    %v1793 = vld [vmem:[%s8] sm:$0xff]
    %v1794 = vld [vmem:[%s8 + $0x8] sm:$0xff]
    %v1795 = vld [vmem:[%s8 + $0x10] sm:$0xff]
    %1797 = vset.pattern.permute.xlu0 0
    %1798 = vperm.xlu0 %1797, %v1793
    %v1799 = vpop.permute.xlu0 %1798
    %1802 = vset.pattern.permute.xlu0 0
    %1803 = vperm.xlu0 %1802, %v1794
    %v1804 = vpop.permute.xlu0 %1803
    %1807 = vset.pattern.permute.xlu0 0
    %1808 = vperm.xlu0 %1807, %v1795
    %v1809 = vpop.permute.xlu0 %1808
    %v1811 = vmul.f32 %v1787, %v1799
    %v1812 = vmul.f32 %v1788, %v1799
    %v1813 = vmul.f32 %v1789, %v1804
    %v1814 = vmul.f32 %v1790, %v1804
    %v1815 = vmul.f32 %v1791, %v1809
    %v1816 = vmul.f32 %v1792, %v1809
    %1817 = vset.pattern.permute.xlu0 1
    %1818 = vperm.xlu0 %1817, %v1793
    %v1819 = vpop.permute.xlu0 %1818
    %1821 = vset.pattern.permute.xlu0 1
    %1822 = vperm.xlu0 %1821, %v1794
    %v1823 = vpop.permute.xlu0 %1822
    %1825 = vset.pattern.permute.xlu0 1
    %1826 = vperm.xlu0 %1825, %v1795
    %v1827 = vpop.permute.xlu0 %1826
    %v1829 = vadd.f32 %v1811, %v1819
    %v1830 = vadd.f32 %v1812, %v1819
    %v1831 = vadd.f32 %v1813, %v1823
    %v1832 = vadd.f32 %v1814, %v1823
    %v1833 = vadd.f32 %v1815, %v1827
    %v1834 = vadd.f32 %v1816, %v1827
    %vm1835 = vcmp.gt.f32.partialorder %v1829, 0.0
    %vm1836 = vcmp.gt.f32.partialorder %v1830, 0.0
    %vm1837 = vcmp.gt.f32.partialorder %v1831, 0.0
    %vm1838 = vcmp.gt.f32.partialorder %v1832, 0.0
    %vm1839 = vcmp.gt.f32.partialorder %v1833, 0.0
    %vm1840 = vcmp.gt.f32.partialorder %v1834, 0.0
    %1841 = vset.pattern.permute.xlu0 2
    %1842 = vperm.xlu0 %1841, %v1793
    %v1843 = vpop.permute.xlu0 %1842
    %1845 = vset.pattern.permute.xlu0 2
    %1846 = vperm.xlu0 %1845, %v1794
    %v1847 = vpop.permute.xlu0 %1846
    %1849 = vset.pattern.permute.xlu0 2
    %1850 = vperm.xlu0 %1849, %v1795
    %v1851 = vpop.permute.xlu0 %1850
    %v1853 = vmul.f32 %v1829, %v1843
    %v1854 = vmul.f32 %v1830, %v1843
    %v1855 = vmul.f32 %v1831, %v1847
    %v1856 = vmul.f32 %v1832, %v1847
    %v1857 = vmul.f32 %v1833, %v1851
    %v1858 = vmul.f32 %v1834, %v1851
    %v1859 = vsel %vm1835, %v1829, %v1853
    %v1860 = vsel %vm1836, %v1830, %v1854
    %v1861 = vsel %vm1837, %v1831, %v1855
    %v1862 = vsel %vm1838, %v1832, %v1856
    %v1863 = vsel %vm1839, %v1833, %v1857
    %v1864 = vsel %vm1840, %v1834, %v1858
    %1865 = vst [vmem:[#allocation2] sm:$0xff] %v1859
    %1866 = vst [vmem:[#allocation2 + $0x8] sm:$0xff] %v1860
    %1867 = vst [vmem:[#allocation2 + $0x10] sm:$0xff] %v1861
    %1868 = vst [vmem:[#allocation2 + $0x18] sm:$0xff] %v1862
    %1869 = vst [vmem:[#allocation2 + $0x20] sm:$0xff] %v1863
    %1870 = vst [vmem:[#allocation2 + $0x28] sm:$0xff] %v1864
    // Predicated region
    $region38: #{tpu_custom_call.1} parent=1 // pred_check
      _
    $region39: #{tpu_custom_call.1} parent=1 // pred_check_branch
      %1872 = sbr.rel (0) target = $region41
    $region40: #{tpu_custom_call.1} parent=1 // pred_region
      %s1874 = ssub.s32 768, 768
      %1875 = vsyncadd [#allocation3], %s1874
      %s1876 = sshll.u32 [#allocation2], 4
      %s1877 = int_to_ptr.vmem [resolvable:$true] %s1876
      %1882 = dma.vmem_to_hbm [thread:$0]  %s1877, 768, %s9, [#allocation3], 256, 256, 16
    $region41: #{tpu_custom_call.1} parent=1 // pred_fallthru
      _
    // Predicated region
    $region42: #{tpu_custom_call.1} parent=1 // pred_check
      _
    $region43: #{tpu_custom_call.1} parent=1 // pred_check_branch
      %1884 = sbr.rel (0) target = $region45
    $region44: #{tpu_custom_call.1} parent=1 // pred_region
      %1885 = dma.done [#allocation3], 768
    $region45: #{tpu_custom_call.1} parent=1 // pred_fallthru
      _
    %1886 = vsyncpa [#allocation3], 1

</llo_original>
